<compile_context>
chip_gen: v6e
topology: v6e:2x2x1
jax: 0.10.0
libtpu: 0.0.40
codegen_flags: <defaults>
</compile_context>

<pallas_src>
import functools

import jax
import jax.numpy as jnp
from jax.experimental import pallas as pl
from jax.experimental.pallas import tpu as pltpu

LANE = 128      # channel padding target (TPU lane width)
SUBLANE = 8     # sublane granularity for the causal-pad row count


def _round_up(x, m):
    return (x + m - 1) // m * m


def make_fused_tcn_kernel(B_t, L, C_in0, Cp, layer_cfgs, pad_rows, split_taps):
    """Kernel processing B_t batch elements through every TemporalBlock.

    layer_cfgs[i] = (kernel_size, dilation, has_downsample_refs).
    Scratch slab (VMEM, bf16):
      hp_ref: (B_t*(pad_rows+L), Cp).  Each element b owns the row segment
        [b*seg, (b+1)*seg): pad_rows zero rows (causal left pad) followed by
        L data rows.  Pad rows are (re)written as zeros during input staging
        and never touched afterwards; data rows are fully rewritten per layer.
    """
    seg = pad_rows + L
    rows = B_t * L
    n_layers = len(layer_cfgs)

    def kernel(*refs):
        x_ref = refs[0]               # (B_t, L, C_in0) channels-last input
        w_refs = refs[1:-2]           # flattened per-layer weights / biases
        o_ref = refs[-2]              # (B_t, L, Cp) lane-dense output block
        hp_ref = refs[-1]             # (B_t*seg, Cp) bf16 activation slab

        # ---- stage layer-0 input: lane-pad to Cp, prepend causal zeros -----
        need_x_res = not layer_cfgs[0][2]   # layer-0 residual is identity
        x_res_parts = []
        for b in range(B_t):
            xb = x_ref[b]                                       # (L, C_in0) f32
            xb_p = jnp.concatenate(
                [xb, jnp.zeros((L, Cp - C_in0), jnp.float32)], axis=1)
            seg_val = jnp.concatenate(
                [jnp.zeros((pad_rows, Cp), jnp.float32), xb_p], axis=0)
            hp_ref[pl.ds(b * seg, seg), :] = seg_val.astype(jnp.bfloat16)
            if need_x_res:
                x_res_parts.append(xb_p)                        # keep exact f32
        x_res = None
        if need_x_res:
            x_res = (x_res_parts[0] if B_t == 1
                     else jnp.concatenate(x_res_parts, axis=0))

        def load_data_rows():
            parts = [hp_ref[pl.ds(b * seg + pad_rows, L), :] for b in range(B_t)]
            return parts[0] if B_t == 1 else jnp.concatenate(parts, axis=0)

        def store_data_rows(v_f32):
            vb = v_f32.astype(jnp.bfloat16)       # single bf16 store per layer
            for b in range(B_t):
                hp_ref[pl.ds(b * seg + pad_rows, L), :] = vb[b * L:(b + 1) * L, :]

        def causal_conv_relu(w_r, b_r, k, d):
            # Causal dilated conv; bias + ReLU stay in f32 registers.
            if split_taps:
                # v5e: k separate (rows,Cp)x(Cp,Cp) dots (K=k*Cp splits on the
                # 128-deep MXU anyway); avoids the (rows, k*Cp) intermediate.
                acc = jnp.zeros((rows, Cp), jnp.float32)
                for j in range(k):
                    parts = [hp_ref[pl.ds(b * seg + pad_rows - (k - 1 - j) * d, L), :]
                             for b in range(B_t)]
                    xj = parts[0] if B_t == 1 else jnp.concatenate(parts, axis=0)
                    acc = acc + jnp.dot(xj, w_r[pl.ds(j * Cp, Cp), :],
                                        preferred_element_type=jnp.float32)
                y = acc
            else:
                # v6e/v7x: ONE MXU matmul; k shifted tap windows concatenated
                # along the contraction axis (128-lane aligned pieces).
                elems = []
                for b in range(B_t):
                    base = b * seg + pad_rows
                    taps = [hp_ref[pl.ds(base - (k - 1 - j) * d, L), :]
                            for j in range(k)]
                    elems.append(taps[0] if k == 1
                                 else jnp.concatenate(taps, axis=1))
                x_cat = elems[0] if B_t == 1 else jnp.concatenate(elems, axis=0)
                y = jnp.dot(x_cat, w_r[...], preferred_element_type=jnp.float32)
            return jnp.maximum(y + b_r[...], 0.0)

        idx = 0
        out = None
        for li, (k, d, has_ds) in enumerate(layer_cfgs):
            if has_ds:
                w1_r, b1_r, w2_r, b2_r, wd_r, bd_r = w_refs[idx:idx + 6]
                idx += 6
            else:
                w1_r, b1_r, w2_r, b2_r = w_refs[idx:idx + 4]
                idx += 4
                wd_r = bd_r = None

            # Block input (for the residual path) must be read before h1 is
            # stored over the same slab rows.
            h_in = None
            if has_ds or li > 0:
                h_in = load_data_rows()                       # (rows, Cp) bf16

            # conv1 -> chomp -> relu (dropout1 = identity at inference)
            h1 = causal_conv_relu(w1_r, b1_r, k, d)
            store_data_rows(h1)

            # conv2 -> chomp -> relu (dropout2 = identity)
            h2 = causal_conv_relu(w2_r, b2_r, k, d)

            # residual: 1x1 downsample conv when channel counts differ
            if has_ds:
                res = jnp.dot(h_in, wd_r[...],
                              preferred_element_type=jnp.float32) + bd_r[...]
            elif li == 0:
                res = x_res                    # exact f32 lane-padded copy of x
            else:
                res = h_in.astype(jnp.float32)

            out = jnp.maximum(h2 + res, 0.0)                  # final ReLU, f32
            if li + 1 < n_layers:
                store_data_rows(out)                          # next block input

        # NOTE: bf16 output would halve writeback if downstream tolerates it;
        # kept f32 here to preserve the module's output dtype.
        for b in range(B_t):
            o_ref[b] = out[b * L:(b + 1) * L, :].astype(o_ref.dtype)

    return kernel


@functools.partial(
    jax.jit,
    static_argnames=("layer_cfgs", "cp", "c_out_last", "pad_rows",
                     "batch_tile", "split_taps", "single_buffer_weights"))
def taconvnet_forward(x_ncl, packed_params, *, layer_cfgs, cp, c_out_last,
                      pad_rows, batch_tile, split_taps=False,
                      single_buffer_weights=True):
    """x_ncl: (N, C_in, L), exactly the PyTorch module's input layout."""
    N, C_in0, L = x_ncl.shape
    assert N % batch_tile == 0, "batch must divide by batch_tile"
    x_nlc = jnp.transpose(x_ncl, (0, 2, 1))                  # -> (N, L, C_in)

    flat_inputs = [x_nlc]
    in_specs = [pl.BlockSpec((batch_tile, L, C_in0), lambda n: (n, 0, 0))]
    for layer in packed_params:
        for arr in layer:
            flat_inputs.append(arr)
            if single_buffer_weights:
                # constant block index across the grid -> no need to
                # double-buffer; pure VMEM saving.
                spec = pl.BlockSpec(arr.shape,
                                    lambda n, nd=arr.ndim: (0,) * nd,
                                    pipeline_mode=pl.Buffered(buffer_count=1))
            else:
                spec = pl.BlockSpec(arr.shape,
                                    lambda n, nd=arr.ndim: (0,) * nd)
            in_specs.append(spec)

    out_padded = pl.pallas_call(
        make_fused_tcn_kernel(batch_tile, L, C_in0, cp, layer_cfgs, pad_rows,
                              split_taps),
        out_shape=jax.ShapeDtypeStruct((N, L, cp), jnp.float32),
        grid=(N // batch_tile,),
        in_specs=in_specs,
        out_specs=pl.BlockSpec((batch_tile, L, cp), lambda n: (n, 0, 0)),
        scratch_shapes=[
            pltpu.VMEM((batch_tile * (pad_rows + L), cp), jnp.bfloat16),
        ],
        compiler_params=pltpu.CompilerParams(
            dimension_semantics=("parallel",),
            vmem_limit_bytes=32 * 1024 * 1024),
    )(*flat_inputs)

    # strip the lane padding, back to the module's (N, C_out, L) layout
    return jnp.transpose(out_padded[:, :, :c_out_last], (0, 2, 1))


def init_taconvnet_params(key, num_inputs, num_channels, kernel_size):
    """Deterministic per-block params in 'math' layout:
    w: (k, C_in, C_out)  == PyTorch Conv1d weight (C_out, C_in, k) transposed;
    b: (C_out,).  weight_norm folds away at inference (effective weights only)."""
    raw = []
    for i, c_out in enumerate(num_channels):
        c_in = num_inputs if i == 0 else num_channels[i - 1]
        key, *ks = jax.random.split(key, 7)
        w1 = 0.01 * jax.random.normal(ks[0], (kernel_size, c_in, c_out),
                                      jnp.float32)
        b1 = 0.01 * jax.random.normal(ks[1], (c_out,), jnp.float32)
        w2 = 0.01 * jax.random.normal(ks[2], (kernel_size, c_out, c_out),
                                      jnp.float32)
        b2 = 0.01 * jax.random.normal(ks[3], (c_out,), jnp.float32)
        if c_in != c_out:
            wd = 0.01 * jax.random.normal(ks[4], (c_in, c_out), jnp.float32)
            bd = 0.01 * jax.random.normal(ks[5], (c_out,), jnp.float32)
        else:
            wd = bd = None
        raw.append((w1, b1, w2, b2, wd, bd))
    return raw


def pack_params_for_kernel(raw, num_inputs, num_channels, kernel_size, cp):
    """Lane-pad channels to `cp`, fold the k taps into the contraction axis,
    cast matmul weights to bf16 (biases stay f32).
    Returns (packed_params, layer_cfgs) with layer_cfgs[i] = (k, dilation, has_ds)."""
    k = kernel_size
    packed, cfgs = [], []
    for i, (w1, b1, w2, b2, wd, bd) in enumerate(raw):
        c_in = num_inputs if i == 0 else num_channels[i - 1]
        c_out = num_channels[i]

        def pad_b(b, co=c_out):                       # (c_out,) -> (1, cp) f32
            return jnp.zeros((1, cp), jnp.float32).at[0, :co].set(b)

        def pad_conv_w(w):          # (k, c_in_true, c_out) -> (k*cp, cp) bf16
            wp = jnp.zeros((k, cp, cp), jnp.float32)
            wp = wp.at[:, :w.shape[1], :w.shape[2]].set(w)
            return wp.reshape(k * cp, cp).astype(jnp.bfloat16)

        layer = [pad_conv_w(w1), pad_b(b1), pad_conv_w(w2), pad_b(b2)]
        has_ds = wd is not None
        if has_ds:
            wdp = (jnp.zeros((cp, cp), jnp.float32)
                   .at[:c_in, :c_out].set(wd).astype(jnp.bfloat16))
            layer += [wdp, pad_b(bd)]
        packed.append(tuple(layer))
        cfgs.append((k, 2 ** i, has_ds))
    return packed, tuple(cfgs)


def taconvnet_forward_ref(x_ncl, raw_params, kernel_size):
    """Pure-JAX f32 reference with identical semantics (for validation)."""
    h = jnp.transpose(x_ncl, (0, 2, 1))                      # (N, L, C)
    L = h.shape[1]
    k = kernel_size
    for i, (w1, b1, w2, b2, wd, bd) in enumerate(raw_params):
        d = 2 ** i
        pad = (k - 1) * d

        def causal_conv(z, w, b):
            zp = jnp.pad(z, ((0, 0), (pad, 0), (0, 0)))
            return sum(zp[:, j * d:j * d + L, :] @ w[j] for j in range(k)) + b

        h1 = jax.nn.relu(causal_conv(h, w1, b1))
        h2 = jax.nn.relu(causal_conv(h1, w2, b2))
        res = h if wd is None else h @ wd + bd
        h = jax.nn.relu(h2 + res)
    return jnp.transpose(h, (0, 2, 1))


if __name__ == "__main__":
    # TAConvNet(num_inputs=4, num_channels=[8, 8], kernel_size=2,
    #           dropout=0.2, attention=False)  -- inference mode
    N, L = 4, 16
    num_inputs = 4
    num_channels = (8, 8)
    kernel_size = 2
    batch_tile = 2          # M = batch_tile * L rows per MXU matmul; grid = 2

    key = jax.random.PRNGKey(0)
    kx, kp = jax.random.split(key)
    x = jax.random.normal(kx, (N, num_inputs, L), jnp.float32)   # NCL input

    raw = init_taconvnet_params(kp, num_inputs, num_channels, kernel_size)

    cp = max(_round_up(c, LANE) for c in num_channels)           # lane-dense width
    max_pad = max((kernel_size - 1) * 2 ** i for i in range(len(num_channels)))
    pad_rows = _round_up(max(max_pad, 1), SUBLANE)
    packed, layer_cfgs = pack_params_for_kernel(
        raw, num_inputs, num_channels, kernel_size, cp)

    try:
        split_taps = "v5" in jax.devices()[0].device_kind.lower()
    except Exception:  # pragma: no cover - device query is best effort
        split_taps = False

    def run(single_buffer_weights):
        return taconvnet_forward(
            x, packed, layer_cfgs=layer_cfgs, cp=cp,
            c_out_last=num_channels[-1], pad_rows=pad_rows,
            batch_tile=batch_tile, split_taps=split_taps,
            single_buffer_weights=single_buffer_weights)

    try:
        out = jax.block_until_ready(run(True))
    except Exception:
        # graceful fallback if this runtime rejects pipeline_mode=Buffered(1)
        out = jax.block_until_ready(run(False))

    ref = taconvnet_forward_ref(x, raw, kernel_size)
    assert out.shape == (N, num_channels[-1], L)
    # bf16 MXU operands / bf16 activation slab with f32 accumulation vs. a
    # pure-f32 reference
    assert jnp.allclose(out, ref, atol=1e-2, rtol=2e-2), "mismatch vs JAX ref"

    print("KERNEL_OK")
</pallas_src>

<mosaic_0001>
module attributes {stable_mosaic.version = 11 : i64} {
  func.func @kernel(%arg0: i32, %arg1: memref<2x16x4xf32, #tpu.memory_space<vmem>>, %arg2: memref<256x128xbf16, #tpu.memory_space<vmem>>, %arg3: memref<1x128xf32, #tpu.memory_space<vmem>>, %arg4: memref<256x128xbf16, #tpu.memory_space<vmem>>, %arg5: memref<1x128xf32, #tpu.memory_space<vmem>>, %arg6: memref<128x128xbf16, #tpu.memory_space<vmem>>, %arg7: memref<1x128xf32, #tpu.memory_space<vmem>>, %arg8: memref<256x128xbf16, #tpu.memory_space<vmem>>, %arg9: memref<1x128xf32, #tpu.memory_space<vmem>>, %arg10: memref<256x128xbf16, #tpu.memory_space<vmem>>, %arg11: memref<1x128xf32, #tpu.memory_space<vmem>>, %arg12: memref<2x16x128xf32, #tpu.memory_space<vmem>>, %arg13: memref<48x128xbf16, #tpu.memory_space<vmem>>) attributes {dimension_semantics = [#tpu.dimension_semantics<parallel>], iteration_bounds = array<i64: 2>, scalar_prefetch = 0 : i64, scratch_operands = 1 : i64, tpu.core_type = #tpu.core_type<tc>, window_params = [{transform_indices = @transform_0, window_bounds = array<i64: 2, 16, 4>}, {pipeline_mode = #tpu.pipeline_mode<synchronous>, transform_indices = @transform_1, window_bounds = array<i64: 256, 128>}, {pipeline_mode = #tpu.pipeline_mode<synchronous>, transform_indices = @transform_2, window_bounds = array<i64: 1, 128>}, {pipeline_mode = #tpu.pipeline_mode<synchronous>, transform_indices = @transform_3, window_bounds = array<i64: 256, 128>}, {pipeline_mode = #tpu.pipeline_mode<synchronous>, transform_indices = @transform_4, window_bounds = array<i64: 1, 128>}, {pipeline_mode = #tpu.pipeline_mode<synchronous>, transform_indices = @transform_5, window_bounds = array<i64: 128, 128>}, {pipeline_mode = #tpu.pipeline_mode<synchronous>, transform_indices = @transform_6, window_bounds = array<i64: 1, 128>}, {pipeline_mode = #tpu.pipeline_mode<synchronous>, transform_indices = @transform_7, window_bounds = array<i64: 256, 128>}, {pipeline_mode = #tpu.pipeline_mode<synchronous>, transform_indices = @transform_8, window_bounds = array<i64: 1, 128>}, {pipeline_mode = #tpu.pipeline_mode<synchronous>, transform_indices = @transform_9, window_bounds = array<i64: 256, 128>}, {pipeline_mode = #tpu.pipeline_mode<synchronous>, transform_indices = @transform_10, window_bounds = array<i64: 1, 128>}, {transform_indices = @transform_11, window_bounds = array<i64: 2, 16, 128>}]} {
    %c0 = arith.constant 0 : index
    %c0_0 = arith.constant 0 : index
    %c0_1 = arith.constant 0 : index
    %0 = vector.load %arg1[%c0, %c0_0, %c0_1] : memref<2x16x4xf32, #tpu.memory_space<vmem>>, vector<1x16x4xf32>
    %1 = vector.shape_cast %0 : vector<1x16x4xf32> to vector<16x4xf32>
    %cst = arith.constant 0.000000e+00 : f32
    %2 = vector.broadcast %cst : f32 to vector<16x124xf32>
    %3 = tpu.concatenate %1, %2 in 1 : vector<16x4xf32>, vector<16x124xf32> -> vector<16x128xf32>
    %cst_2 = arith.constant 0.000000e+00 : f32
    %4 = vector.broadcast %cst_2 : f32 to vector<8x128xf32>
    %5 = tpu.concatenate %4, %3 in 0 : vector<8x128xf32>, vector<16x128xf32> -> vector<24x128xf32>
    %6 = arith.truncf %5 : vector<24x128xf32> to vector<24x128xbf16>
    %c0_3 = arith.constant 0 : index
    %c0_4 = arith.constant 0 : index
    %7 = vector.load %arg13[%c0_3, %c0_4] : memref<48x128xbf16, #tpu.memory_space<vmem>>, vector<24x128xbf16>
    tpu.vector_store %arg13[%c0_3, %c0_4], %6 {strides = array<i32>} : memref<48x128xbf16, #tpu.memory_space<vmem>>, vector<24x128xbf16>,
    %c1 = arith.constant 1 : index
    %c0_5 = arith.constant 0 : index
    %c0_6 = arith.constant 0 : index
    %8 = vector.load %arg1[%c1, %c0_5, %c0_6] : memref<2x16x4xf32, #tpu.memory_space<vmem>>, vector<1x16x4xf32>
    %9 = vector.shape_cast %8 : vector<1x16x4xf32> to vector<16x4xf32>
    %cst_7 = arith.constant 0.000000e+00 : f32
    %10 = vector.broadcast %cst_7 : f32 to vector<16x124xf32>
    %11 = tpu.concatenate %9, %10 in 1 : vector<16x4xf32>, vector<16x124xf32> -> vector<16x128xf32>
    %cst_8 = arith.constant 0.000000e+00 : f32
    %12 = vector.broadcast %cst_8 : f32 to vector<8x128xf32>
    %13 = tpu.concatenate %12, %11 in 0 : vector<8x128xf32>, vector<16x128xf32> -> vector<24x128xf32>
    %14 = arith.truncf %13 : vector<24x128xf32> to vector<24x128xbf16>
    %c24 = arith.constant 24 : index
    %c0_9 = arith.constant 0 : index
    %15 = vector.load %arg13[%c24, %c0_9] : memref<48x128xbf16, #tpu.memory_space<vmem>>, vector<24x128xbf16>
    tpu.vector_store %arg13[%c24, %c0_9], %14 {strides = array<i32>} : memref<48x128xbf16, #tpu.memory_space<vmem>>, vector<24x128xbf16>,
    %c8 = arith.constant 8 : index
    %c0_10 = arith.constant 0 : index
    %16 = vector.load %arg13[%c8, %c0_10] : memref<48x128xbf16, #tpu.memory_space<vmem>>, vector<16x128xbf16>
    %c32 = arith.constant 32 : index
    %c0_11 = arith.constant 0 : index
    %17 = vector.load %arg13[%c32, %c0_11] : memref<48x128xbf16, #tpu.memory_space<vmem>>, vector<16x128xbf16>
    %18 = tpu.concatenate %16, %17 in 0 : vector<16x128xbf16>, vector<16x128xbf16> -> vector<32x128xbf16>
    %c7 = arith.constant 7 : index
    %c0_12 = arith.constant 0 : index
    %19 = vector.load %arg13[%c7, %c0_12] : memref<48x128xbf16, #tpu.memory_space<vmem>>, vector<16x128xbf16>
    %c8_13 = arith.constant 8 : index
    %c0_14 = arith.constant 0 : index
    %20 = vector.load %arg13[%c8_13, %c0_14] : memref<48x128xbf16, #tpu.memory_space<vmem>>, vector<16x128xbf16>
    %21 = tpu.concatenate %19, %20 in 1 : vector<16x128xbf16>, vector<16x128xbf16> -> vector<16x256xbf16>
    %c31 = arith.constant 31 : index
    %c0_15 = arith.constant 0 : index
    %22 = vector.load %arg13[%c31, %c0_15] : memref<48x128xbf16, #tpu.memory_space<vmem>>, vector<16x128xbf16>
    %c32_16 = arith.constant 32 : index
    %c0_17 = arith.constant 0 : index
    %23 = vector.load %arg13[%c32_16, %c0_17] : memref<48x128xbf16, #tpu.memory_space<vmem>>, vector<16x128xbf16>
    %24 = tpu.concatenate %22, %23 in 1 : vector<16x128xbf16>, vector<16x128xbf16> -> vector<16x256xbf16>
    %25 = tpu.concatenate %21, %24 in 0 : vector<16x256xbf16>, vector<16x256xbf16> -> vector<32x256xbf16>
    %c0_18 = arith.constant 0 : index
    %c0_19 = arith.constant 0 : index
    %26 = vector.load %arg2[%c0_18, %c0_19] : memref<256x128xbf16, #tpu.memory_space<vmem>>, vector<256x128xbf16>
    %cst_20 = arith.constant dense<0.000000e+00> : vector<32x128xf32>
    %27 = tpu.matmul %25, %26, %cst_20 {dimension_numbers = #tpu.dot_dimension_numbers<[1], [0], [0], [1], [0, 0, 1, 1], [], []>} : vector<32x256xbf16>, vector<256x128xbf16>, vector<32x128xf32> -> vector<32x128xf32>
    %c0_21 = arith.constant 0 : index
    %c0_22 = arith.constant 0 : index
    %28 = vector.load %arg3[%c0_21, %c0_22] : memref<1x128xf32, #tpu.memory_space<vmem>>, vector<1x128xf32>
    %29 = vector.broadcast %28 : vector<1x128xf32> to vector<32x128xf32>
    %30 = arith.addf %27, %29 : vector<32x128xf32>
    %cst_23 = arith.constant 0.000000e+00 : f32
    %31 = vector.broadcast %cst_23 : f32 to vector<32x128xf32>
    %32 = arith.maximumf %30, %31 : vector<32x128xf32>
    %33 = arith.truncf %32 : vector<32x128xf32> to vector<32x128xbf16>
    %34 = vector.extract_strided_slice %33 {offsets = [0, 0], sizes = [16, 128], strides = [1, 1]} : vector<32x128xbf16> to vector<16x128xbf16>
    %c8_24 = arith.constant 8 : index
    %c0_25 = arith.constant 0 : index
    %35 = vector.load %arg13[%c8_24, %c0_25] : memref<48x128xbf16, #tpu.memory_space<vmem>>, vector<16x128xbf16>
    tpu.vector_store %arg13[%c8_24, %c0_25], %34 {strides = array<i32>} : memref<48x128xbf16, #tpu.memory_space<vmem>>, vector<16x128xbf16>,
    %36 = vector.extract_strided_slice %33 {offsets = [16, 0], sizes = [16, 128], strides = [1, 1]} : vector<32x128xbf16> to vector<16x128xbf16>
    %c32_26 = arith.constant 32 : index
    %c0_27 = arith.constant 0 : index
    %37 = vector.load %arg13[%c32_26, %c0_27] : memref<48x128xbf16, #tpu.memory_space<vmem>>, vector<16x128xbf16>
    tpu.vector_store %arg13[%c32_26, %c0_27], %36 {strides = array<i32>} : memref<48x128xbf16, #tpu.memory_space<vmem>>, vector<16x128xbf16>,
    %c7_28 = arith.constant 7 : index
    %c0_29 = arith.constant 0 : index
    %38 = vector.load %arg13[%c7_28, %c0_29] : memref<48x128xbf16, #tpu.memory_space<vmem>>, vector<16x128xbf16>
    %c8_30 = arith.constant 8 : index
    %c0_31 = arith.constant 0 : index
    %39 = vector.load %arg13[%c8_30, %c0_31] : memref<48x128xbf16, #tpu.memory_space<vmem>>, vector<16x128xbf16>
    %40 = tpu.concatenate %38, %39 in 1 : vector<16x128xbf16>, vector<16x128xbf16> -> vector<16x256xbf16>
    %c31_32 = arith.constant 31 : index
    %c0_33 = arith.constant 0 : index
    %41 = vector.load %arg13[%c31_32, %c0_33] : memref<48x128xbf16, #tpu.memory_space<vmem>>, vector<16x128xbf16>
    %c32_34 = arith.constant 32 : index
    %c0_35 = arith.constant 0 : index
    %42 = vector.load %arg13[%c32_34, %c0_35] : memref<48x128xbf16, #tpu.memory_space<vmem>>, vector<16x128xbf16>
    %43 = tpu.concatenate %41, %42 in 1 : vector<16x128xbf16>, vector<16x128xbf16> -> vector<16x256xbf16>
    %44 = tpu.concatenate %40, %43 in 0 : vector<16x256xbf16>, vector<16x256xbf16> -> vector<32x256xbf16>
    %c0_36 = arith.constant 0 : index
    %c0_37 = arith.constant 0 : index
    %45 = vector.load %arg4[%c0_36, %c0_37] : memref<256x128xbf16, #tpu.memory_space<vmem>>, vector<256x128xbf16>
    %cst_38 = arith.constant dense<0.000000e+00> : vector<32x128xf32>
    %46 = tpu.matmul %44, %45, %cst_38 {dimension_numbers = #tpu.dot_dimension_numbers<[1], [0], [0], [1], [0, 0, 1, 1], [], []>} : vector<32x256xbf16>, vector<256x128xbf16>, vector<32x128xf32> -> vector<32x128xf32>
    %c0_39 = arith.constant 0 : index
    %c0_40 = arith.constant 0 : index
    %47 = vector.load %arg5[%c0_39, %c0_40] : memref<1x128xf32, #tpu.memory_space<vmem>>, vector<1x128xf32>
    %48 = vector.broadcast %47 : vector<1x128xf32> to vector<32x128xf32>
    %49 = arith.addf %46, %48 : vector<32x128xf32>
    %cst_41 = arith.constant 0.000000e+00 : f32
    %50 = vector.broadcast %cst_41 : f32 to vector<32x128xf32>
    %51 = arith.maximumf %49, %50 : vector<32x128xf32>
    %c0_42 = arith.constant 0 : index
    %c0_43 = arith.constant 0 : index
    %52 = vector.load %arg6[%c0_42, %c0_43] : memref<128x128xbf16, #tpu.memory_space<vmem>>, vector<128x128xbf16>
    %cst_44 = arith.constant dense<0.000000e+00> : vector<32x128xf32>
    %53 = tpu.matmul %18, %52, %cst_44 {dimension_numbers = #tpu.dot_dimension_numbers<[1], [0], [0], [1], [0, 0, 1, 1], [], []>} : vector<32x128xbf16>, vector<128x128xbf16>, vector<32x128xf32> -> vector<32x128xf32>
    %c0_45 = arith.constant 0 : index
    %c0_46 = arith.constant 0 : index
    %54 = vector.load %arg7[%c0_45, %c0_46] : memref<1x128xf32, #tpu.memory_space<vmem>>, vector<1x128xf32>
    %55 = vector.broadcast %54 : vector<1x128xf32> to vector<32x128xf32>
    %56 = arith.addf %53, %55 : vector<32x128xf32>
    %57 = arith.addf %51, %56 : vector<32x128xf32>
    %cst_47 = arith.constant 0.000000e+00 : f32
    %58 = vector.broadcast %cst_47 : f32 to vector<32x128xf32>
    %59 = arith.maximumf %57, %58 : vector<32x128xf32>
    %60 = arith.truncf %59 : vector<32x128xf32> to vector<32x128xbf16>
    %61 = vector.extract_strided_slice %60 {offsets = [0, 0], sizes = [16, 128], strides = [1, 1]} : vector<32x128xbf16> to vector<16x128xbf16>
    %c8_48 = arith.constant 8 : index
    %c0_49 = arith.constant 0 : index
    %62 = vector.load %arg13[%c8_48, %c0_49] : memref<48x128xbf16, #tpu.memory_space<vmem>>, vector<16x128xbf16>
    tpu.vector_store %arg13[%c8_48, %c0_49], %61 {strides = array<i32>} : memref<48x128xbf16, #tpu.memory_space<vmem>>, vector<16x128xbf16>,
    %63 = vector.extract_strided_slice %60 {offsets = [16, 0], sizes = [16, 128], strides = [1, 1]} : vector<32x128xbf16> to vector<16x128xbf16>
    %c32_50 = arith.constant 32 : index
    %c0_51 = arith.constant 0 : index
    %64 = vector.load %arg13[%c32_50, %c0_51] : memref<48x128xbf16, #tpu.memory_space<vmem>>, vector<16x128xbf16>
    tpu.vector_store %arg13[%c32_50, %c0_51], %63 {strides = array<i32>} : memref<48x128xbf16, #tpu.memory_space<vmem>>, vector<16x128xbf16>,
    %c8_52 = arith.constant 8 : index
    %c0_53 = arith.constant 0 : index
    %65 = vector.load %arg13[%c8_52, %c0_53] : memref<48x128xbf16, #tpu.memory_space<vmem>>, vector<16x128xbf16>
    %c32_54 = arith.constant 32 : index
    %c0_55 = arith.constant 0 : index
    %66 = vector.load %arg13[%c32_54, %c0_55] : memref<48x128xbf16, #tpu.memory_space<vmem>>, vector<16x128xbf16>
    %67 = tpu.concatenate %65, %66 in 0 : vector<16x128xbf16>, vector<16x128xbf16> -> vector<32x128xbf16>
    %c6 = arith.constant 6 : index
    %c0_56 = arith.constant 0 : index
    %68 = vector.load %arg13[%c6, %c0_56] : memref<48x128xbf16, #tpu.memory_space<vmem>>, vector<16x128xbf16>
    %c8_57 = arith.constant 8 : index
    %c0_58 = arith.constant 0 : index
    %69 = vector.load %arg13[%c8_57, %c0_58] : memref<48x128xbf16, #tpu.memory_space<vmem>>, vector<16x128xbf16>
    %70 = tpu.concatenate %68, %69 in 1 : vector<16x128xbf16>, vector<16x128xbf16> -> vector<16x256xbf16>
    %c30 = arith.constant 30 : index
    %c0_59 = arith.constant 0 : index
    %71 = vector.load %arg13[%c30, %c0_59] : memref<48x128xbf16, #tpu.memory_space<vmem>>, vector<16x128xbf16>
    %c32_60 = arith.constant 32 : index
    %c0_61 = arith.constant 0 : index
    %72 = vector.load %arg13[%c32_60, %c0_61] : memref<48x128xbf16, #tpu.memory_space<vmem>>, vector<16x128xbf16>
    %73 = tpu.concatenate %71, %72 in 1 : vector<16x128xbf16>, vector<16x128xbf16> -> vector<16x256xbf16>
    %74 = tpu.concatenate %70, %73 in 0 : vector<16x256xbf16>, vector<16x256xbf16> -> vector<32x256xbf16>
    %c0_62 = arith.constant 0 : index
    %c0_63 = arith.constant 0 : index
    %75 = vector.load %arg8[%c0_62, %c0_63] : memref<256x128xbf16, #tpu.memory_space<vmem>>, vector<256x128xbf16>
    %cst_64 = arith.constant dense<0.000000e+00> : vector<32x128xf32>
    %76 = tpu.matmul %74, %75, %cst_64 {dimension_numbers = #tpu.dot_dimension_numbers<[1], [0], [0], [1], [0, 0, 1, 1], [], []>} : vector<32x256xbf16>, vector<256x128xbf16>, vector<32x128xf32> -> vector<32x128xf32>
    %c0_65 = arith.constant 0 : index
    %c0_66 = arith.constant 0 : index
    %77 = vector.load %arg9[%c0_65, %c0_66] : memref<1x128xf32, #tpu.memory_space<vmem>>, vector<1x128xf32>
    %78 = vector.broadcast %77 : vector<1x128xf32> to vector<32x128xf32>
    %79 = arith.addf %76, %78 : vector<32x128xf32>
    %cst_67 = arith.constant 0.000000e+00 : f32
    %80 = vector.broadcast %cst_67 : f32 to vector<32x128xf32>
    %81 = arith.maximumf %79, %80 : vector<32x128xf32>
    %82 = arith.truncf %81 : vector<32x128xf32> to vector<32x128xbf16>
    %83 = vector.extract_strided_slice %82 {offsets = [0, 0], sizes = [16, 128], strides = [1, 1]} : vector<32x128xbf16> to vector<16x128xbf16>
    %c8_68 = arith.constant 8 : index
    %c0_69 = arith.constant 0 : index
    %84 = vector.load %arg13[%c8_68, %c0_69] : memref<48x128xbf16, #tpu.memory_space<vmem>>, vector<16x128xbf16>
    tpu.vector_store %arg13[%c8_68, %c0_69], %83 {strides = array<i32>} : memref<48x128xbf16, #tpu.memory_space<vmem>>, vector<16x128xbf16>,
    %85 = vector.extract_strided_slice %82 {offsets = [16, 0], sizes = [16, 128], strides = [1, 1]} : vector<32x128xbf16> to vector<16x128xbf16>
    %c32_70 = arith.constant 32 : index
    %c0_71 = arith.constant 0 : index
    %86 = vector.load %arg13[%c32_70, %c0_71] : memref<48x128xbf16, #tpu.memory_space<vmem>>, vector<16x128xbf16>
    tpu.vector_store %arg13[%c32_70, %c0_71], %85 {strides = array<i32>} : memref<48x128xbf16, #tpu.memory_space<vmem>>, vector<16x128xbf16>,
    %c6_72 = arith.constant 6 : index
    %c0_73 = arith.constant 0 : index
    %87 = vector.load %arg13[%c6_72, %c0_73] : memref<48x128xbf16, #tpu.memory_space<vmem>>, vector<16x128xbf16>
    %c8_74 = arith.constant 8 : index
    %c0_75 = arith.constant 0 : index
    %88 = vector.load %arg13[%c8_74, %c0_75] : memref<48x128xbf16, #tpu.memory_space<vmem>>, vector<16x128xbf16>
    %89 = tpu.concatenate %87, %88 in 1 : vector<16x128xbf16>, vector<16x128xbf16> -> vector<16x256xbf16>
    %c30_76 = arith.constant 30 : index
    %c0_77 = arith.constant 0 : index
    %90 = vector.load %arg13[%c30_76, %c0_77] : memref<48x128xbf16, #tpu.memory_space<vmem>>, vector<16x128xbf16>
    %c32_78 = arith.constant 32 : index
    %c0_79 = arith.constant 0 : index
    %91 = vector.load %arg13[%c32_78, %c0_79] : memref<48x128xbf16, #tpu.memory_space<vmem>>, vector<16x128xbf16>
    %92 = tpu.concatenate %90, %91 in 1 : vector<16x128xbf16>, vector<16x128xbf16> -> vector<16x256xbf16>
    %93 = tpu.concatenate %89, %92 in 0 : vector<16x256xbf16>, vector<16x256xbf16> -> vector<32x256xbf16>
    %c0_80 = arith.constant 0 : index
    %c0_81 = arith.constant 0 : index
    %94 = vector.load %arg10[%c0_80, %c0_81] : memref<256x128xbf16, #tpu.memory_space<vmem>>, vector<256x128xbf16>
    %cst_82 = arith.constant dense<0.000000e+00> : vector<32x128xf32>
    %95 = tpu.matmul %93, %94, %cst_82 {dimension_numbers = #tpu.dot_dimension_numbers<[1], [0], [0], [1], [0, 0, 1, 1], [], []>} : vector<32x256xbf16>, vector<256x128xbf16>, vector<32x128xf32> -> vector<32x128xf32>
    %c0_83 = arith.constant 0 : index
    %c0_84 = arith.constant 0 : index
    %96 = vector.load %arg11[%c0_83, %c0_84] : memref<1x128xf32, #tpu.memory_space<vmem>>, vector<1x128xf32>
    %97 = vector.broadcast %96 : vector<1x128xf32> to vector<32x128xf32>
    %98 = arith.addf %95, %97 : vector<32x128xf32>
    %cst_85 = arith.constant 0.000000e+00 : f32
    %99 = vector.broadcast %cst_85 : f32 to vector<32x128xf32>
    %100 = arith.maximumf %98, %99 : vector<32x128xf32>
    %101 = arith.extf %67 : vector<32x128xbf16> to vector<32x128xf32>
    %102 = arith.addf %100, %101 : vector<32x128xf32>
    %cst_86 = arith.constant 0.000000e+00 : f32
    %103 = vector.broadcast %cst_86 : f32 to vector<32x128xf32>
    %104 = arith.maximumf %102, %103 : vector<32x128xf32>
    %105 = vector.extract_strided_slice %104 {offsets = [0, 0], sizes = [16, 128], strides = [1, 1]} : vector<32x128xf32> to vector<16x128xf32>
    %c0_87 = arith.constant 0 : index
    %c0_88 = arith.constant 0 : index
    %c0_89 = arith.constant 0 : index
    %106 = vector.load %arg12[%c0_87, %c0_88, %c0_89] : memref<2x16x128xf32, #tpu.memory_space<vmem>>, vector<1x16x128xf32>
    %107 = vector.shape_cast %106 : vector<1x16x128xf32> to vector<16x128xf32>
    %108 = vector.shape_cast %105 : vector<16x128xf32> to vector<1x16x128xf32>
    tpu.vector_store %arg12[%c0_87, %c0_88, %c0_89], %108 {strides = array<i32>} : memref<2x16x128xf32, #tpu.memory_space<vmem>>, vector<1x16x128xf32>,
    %109 = vector.extract_strided_slice %104 {offsets = [16, 0], sizes = [16, 128], strides = [1, 1]} : vector<32x128xf32> to vector<16x128xf32>
    %c1_90 = arith.constant 1 : index
    %c0_91 = arith.constant 0 : index
    %c0_92 = arith.constant 0 : index
    %110 = vector.load %arg12[%c1_90, %c0_91, %c0_92] : memref<2x16x128xf32, #tpu.memory_space<vmem>>, vector<1x16x128xf32>
    %111 = vector.shape_cast %110 : vector<1x16x128xf32> to vector<16x128xf32>
    %112 = vector.shape_cast %109 : vector<16x128xf32> to vector<1x16x128xf32>
    tpu.vector_store %arg12[%c1_90, %c0_91, %c0_92], %112 {strides = array<i32>} : memref<2x16x128xf32, #tpu.memory_space<vmem>>, vector<1x16x128xf32>,
    return
  }
  func.func @transform_0(%arg0: i32) -> (i32, i32, i32) {
    %c0_i32 = arith.constant 0 : i32
    %c0_i32_0 = arith.constant 0 : i32
    %c0_i32_1 = arith.constant 0 : i32
    return %arg0, %c0_i32, %c0_i32_0 : i32, i32, i32
  }
  func.func @transform_1(%arg0: i32) -> (i32, i32) {
    %c0_i32 = arith.constant 0 : i32
    %c0_i32_0 = arith.constant 0 : i32
    %c0_i32_1 = arith.constant 0 : i32
    return %c0_i32, %c0_i32_0 : i32, i32
  }
  func.func @transform_2(%arg0: i32) -> (i32, i32) {
    %c0_i32 = arith.constant 0 : i32
    %c0_i32_0 = arith.constant 0 : i32
    %c0_i32_1 = arith.constant 0 : i32
    return %c0_i32, %c0_i32_0 : i32, i32
  }
  func.func @transform_3(%arg0: i32) -> (i32, i32) {
    %c0_i32 = arith.constant 0 : i32
    %c0_i32_0 = arith.constant 0 : i32
    %c0_i32_1 = arith.constant 0 : i32
    return %c0_i32, %c0_i32_0 : i32, i32
  }
  func.func @transform_4(%arg0: i32) -> (i32, i32) {
    %c0_i32 = arith.constant 0 : i32
    %c0_i32_0 = arith.constant 0 : i32
    %c0_i32_1 = arith.constant 0 : i32
    return %c0_i32, %c0_i32_0 : i32, i32
  }
  func.func @transform_5(%arg0: i32) -> (i32, i32) {
    %c0_i32 = arith.constant 0 : i32
    %c0_i32_0 = arith.constant 0 : i32
    %c0_i32_1 = arith.constant 0 : i32
    return %c0_i32, %c0_i32_0 : i32, i32
  }
  func.func @transform_6(%arg0: i32) -> (i32, i32) {
    %c0_i32 = arith.constant 0 : i32
    %c0_i32_0 = arith.constant 0 : i32
    %c0_i32_1 = arith.constant 0 : i32
    return %c0_i32, %c0_i32_0 : i32, i32
  }
  func.func @transform_7(%arg0: i32) -> (i32, i32) {
    %c0_i32 = arith.constant 0 : i32
    %c0_i32_0 = arith.constant 0 : i32
    %c0_i32_1 = arith.constant 0 : i32
    return %c0_i32, %c0_i32_0 : i32, i32
  }
  func.func @transform_8(%arg0: i32) -> (i32, i32) {
    %c0_i32 = arith.constant 0 : i32
    %c0_i32_0 = arith.constant 0 : i32
    %c0_i32_1 = arith.constant 0 : i32
    return %c0_i32, %c0_i32_0 : i32, i32
  }
  func.func @transform_9(%arg0: i32) -> (i32, i32) {
    %c0_i32 = arith.constant 0 : i32
    %c0_i32_0 = arith.constant 0 : i32
    %c0_i32_1 = arith.constant 0 : i32
    return %c0_i32, %c0_i32_0 : i32, i32
  }
  func.func @transform_10(%arg0: i32) -> (i32, i32) {
    %c0_i32 = arith.constant 0 : i32
    %c0_i32_0 = arith.constant 0 : i32
    %c0_i32_1 = arith.constant 0 : i32
    return %c0_i32, %c0_i32_0 : i32, i32
  }
  func.func @transform_11(%arg0: i32) -> (i32, i32, i32) {
    %c0_i32 = arith.constant 0 : i32
    %c0_i32_0 = arith.constant 0 : i32
    %c0_i32_1 = arith.constant 0 : i32
    return %arg0, %c0_i32, %c0_i32_0 : i32, i32, i32
  }
}

module attributes {stable_mosaic.version = 11 : i64} {
  func.func @kernel(%arg0: i32, %arg1: memref<2x16x4xf32, #tpu.memory_space<vmem>>, %arg2: memref<256x128xbf16, #tpu.memory_space<vmem>>, %arg3: memref<1x128xf32, #tpu.memory_space<vmem>>, %arg4: memref<256x128xbf16, #tpu.memory_space<vmem>>, %arg5: memref<1x128xf32, #tpu.memory_space<vmem>>, %arg6: memref<128x128xbf16, #tpu.memory_space<vmem>>, %arg7: memref<1x128xf32, #tpu.memory_space<vmem>>, %arg8: memref<256x128xbf16, #tpu.memory_space<vmem>>, %arg9: memref<1x128xf32, #tpu.memory_space<vmem>>, %arg10: memref<256x128xbf16, #tpu.memory_space<vmem>>, %arg11: memref<1x128xf32, #tpu.memory_space<vmem>>, %arg12: memref<2x16x128xf32, #tpu.memory_space<vmem>>, %arg13: memref<48x128xbf16, #tpu.memory_space<vmem>>) attributes {dimension_semantics = [#tpu.dimension_semantics<parallel>], iteration_bounds = array<i64: 2>, scalar_prefetch = 0 : i64, scratch_operands = 1 : i64, tpu.core_type = #tpu.core_type<tc>, window_params = [{transform_indices = @transform_0, window_bounds = array<i64: 2, 16, 4>}, {pipeline_mode = #tpu.pipeline_mode<synchronous>, transform_indices = @transform_1, window_bounds = array<i64: 256, 128>}, {pipeline_mode = #tpu.pipeline_mode<synchronous>, transform_indices = @transform_2, window_bounds = array<i64: 1, 128>}, {pipeline_mode = #tpu.pipeline_mode<synchronous>, transform_indices = @transform_3, window_bounds = array<i64: 256, 128>}, {pipeline_mode = #tpu.pipeline_mode<synchronous>, transform_indices = @transform_4, window_bounds = array<i64: 1, 128>}, {pipeline_mode = #tpu.pipeline_mode<synchronous>, transform_indices = @transform_5, window_bounds = array<i64: 128, 128>}, {pipeline_mode = #tpu.pipeline_mode<synchronous>, transform_indices = @transform_6, window_bounds = array<i64: 1, 128>}, {pipeline_mode = #tpu.pipeline_mode<synchronous>, transform_indices = @transform_7, window_bounds = array<i64: 256, 128>}, {pipeline_mode = #tpu.pipeline_mode<synchronous>, transform_indices = @transform_8, window_bounds = array<i64: 1, 128>}, {pipeline_mode = #tpu.pipeline_mode<synchronous>, transform_indices = @transform_9, window_bounds = array<i64: 256, 128>}, {pipeline_mode = #tpu.pipeline_mode<synchronous>, transform_indices = @transform_10, window_bounds = array<i64: 1, 128>}, {transform_indices = @transform_11, window_bounds = array<i64: 2, 16, 128>}]} {
    %c0 = arith.constant 0 : index
    %c0_0 = arith.constant 0 : index
    %c0_1 = arith.constant 0 : index
    %0 = vector.load %arg1[%c0, %c0_0, %c0_1] : memref<2x16x4xf32, #tpu.memory_space<vmem>>, vector<1x16x4xf32>
    %1 = vector.shape_cast %0 : vector<1x16x4xf32> to vector<16x4xf32>
    %cst = arith.constant 0.000000e+00 : f32
    %2 = vector.broadcast %cst : f32 to vector<16x124xf32>
    %3 = tpu.concatenate %1, %2 in 1 : vector<16x4xf32>, vector<16x124xf32> -> vector<16x128xf32>
    %cst_2 = arith.constant 0.000000e+00 : f32
    %4 = vector.broadcast %cst_2 : f32 to vector<8x128xf32>
    %5 = tpu.concatenate %4, %3 in 0 : vector<8x128xf32>, vector<16x128xf32> -> vector<24x128xf32>
    %6 = arith.truncf %5 : vector<24x128xf32> to vector<24x128xbf16>
    %c0_3 = arith.constant 0 : index
    %c0_4 = arith.constant 0 : index
    %7 = vector.load %arg13[%c0_3, %c0_4] : memref<48x128xbf16, #tpu.memory_space<vmem>>, vector<24x128xbf16>
    tpu.vector_store %arg13[%c0_3, %c0_4], %6 {strides = array<i32>} : memref<48x128xbf16, #tpu.memory_space<vmem>>, vector<24x128xbf16>,
    %c1 = arith.constant 1 : index
    %c0_5 = arith.constant 0 : index
    %c0_6 = arith.constant 0 : index
    %8 = vector.load %arg1[%c1, %c0_5, %c0_6] : memref<2x16x4xf32, #tpu.memory_space<vmem>>, vector<1x16x4xf32>
    %9 = vector.shape_cast %8 : vector<1x16x4xf32> to vector<16x4xf32>
    %cst_7 = arith.constant 0.000000e+00 : f32
    %10 = vector.broadcast %cst_7 : f32 to vector<16x124xf32>
    %11 = tpu.concatenate %9, %10 in 1 : vector<16x4xf32>, vector<16x124xf32> -> vector<16x128xf32>
    %cst_8 = arith.constant 0.000000e+00 : f32
    %12 = vector.broadcast %cst_8 : f32 to vector<8x128xf32>
    %13 = tpu.concatenate %12, %11 in 0 : vector<8x128xf32>, vector<16x128xf32> -> vector<24x128xf32>
    %14 = arith.truncf %13 : vector<24x128xf32> to vector<24x128xbf16>
    %c24 = arith.constant 24 : index
    %c0_9 = arith.constant 0 : index
    %15 = vector.load %arg13[%c24, %c0_9] : memref<48x128xbf16, #tpu.memory_space<vmem>>, vector<24x128xbf16>
    tpu.vector_store %arg13[%c24, %c0_9], %14 {strides = array<i32>} : memref<48x128xbf16, #tpu.memory_space<vmem>>, vector<24x128xbf16>,
    %c8 = arith.constant 8 : index
    %c0_10 = arith.constant 0 : index
    %16 = vector.load %arg13[%c8, %c0_10] : memref<48x128xbf16, #tpu.memory_space<vmem>>, vector<16x128xbf16>
    %c32 = arith.constant 32 : index
    %c0_11 = arith.constant 0 : index
    %17 = vector.load %arg13[%c32, %c0_11] : memref<48x128xbf16, #tpu.memory_space<vmem>>, vector<16x128xbf16>
    %18 = tpu.concatenate %16, %17 in 0 : vector<16x128xbf16>, vector<16x128xbf16> -> vector<32x128xbf16>
    %c7 = arith.constant 7 : index
    %c0_12 = arith.constant 0 : index
    %19 = vector.load %arg13[%c7, %c0_12] : memref<48x128xbf16, #tpu.memory_space<vmem>>, vector<16x128xbf16>
    %c8_13 = arith.constant 8 : index
    %c0_14 = arith.constant 0 : index
    %20 = vector.load %arg13[%c8_13, %c0_14] : memref<48x128xbf16, #tpu.memory_space<vmem>>, vector<16x128xbf16>
    %21 = tpu.concatenate %19, %20 in 1 : vector<16x128xbf16>, vector<16x128xbf16> -> vector<16x256xbf16>
    %c31 = arith.constant 31 : index
    %c0_15 = arith.constant 0 : index
    %22 = vector.load %arg13[%c31, %c0_15] : memref<48x128xbf16, #tpu.memory_space<vmem>>, vector<16x128xbf16>
    %c32_16 = arith.constant 32 : index
    %c0_17 = arith.constant 0 : index
    %23 = vector.load %arg13[%c32_16, %c0_17] : memref<48x128xbf16, #tpu.memory_space<vmem>>, vector<16x128xbf16>
    %24 = tpu.concatenate %22, %23 in 1 : vector<16x128xbf16>, vector<16x128xbf16> -> vector<16x256xbf16>
    %25 = tpu.concatenate %21, %24 in 0 : vector<16x256xbf16>, vector<16x256xbf16> -> vector<32x256xbf16>
    %c0_18 = arith.constant 0 : index
    %c0_19 = arith.constant 0 : index
    %26 = vector.load %arg2[%c0_18, %c0_19] : memref<256x128xbf16, #tpu.memory_space<vmem>>, vector<256x128xbf16>
    %cst_20 = arith.constant dense<0.000000e+00> : vector<32x128xf32>
    %27 = tpu.matmul %25, %26, %cst_20 {dimension_numbers = #tpu.dot_dimension_numbers<[1], [0], [0], [1], [0, 0, 1, 1], [], []>} : vector<32x256xbf16>, vector<256x128xbf16>, vector<32x128xf32> -> vector<32x128xf32>
    %c0_21 = arith.constant 0 : index
    %c0_22 = arith.constant 0 : index
    %28 = vector.load %arg3[%c0_21, %c0_22] : memref<1x128xf32, #tpu.memory_space<vmem>>, vector<1x128xf32>
    %29 = vector.broadcast %28 : vector<1x128xf32> to vector<32x128xf32>
    %30 = arith.addf %27, %29 : vector<32x128xf32>
    %cst_23 = arith.constant 0.000000e+00 : f32
    %31 = vector.broadcast %cst_23 : f32 to vector<32x128xf32>
    %32 = arith.maximumf %30, %31 : vector<32x128xf32>
    %33 = arith.truncf %32 : vector<32x128xf32> to vector<32x128xbf16>
    %34 = vector.extract_strided_slice %33 {offsets = [0, 0], sizes = [16, 128], strides = [1, 1]} : vector<32x128xbf16> to vector<16x128xbf16>
    %c8_24 = arith.constant 8 : index
    %c0_25 = arith.constant 0 : index
    %35 = vector.load %arg13[%c8_24, %c0_25] : memref<48x128xbf16, #tpu.memory_space<vmem>>, vector<16x128xbf16>
    tpu.vector_store %arg13[%c8_24, %c0_25], %34 {strides = array<i32>} : memref<48x128xbf16, #tpu.memory_space<vmem>>, vector<16x128xbf16>,
    %36 = vector.extract_strided_slice %33 {offsets = [16, 0], sizes = [16, 128], strides = [1, 1]} : vector<32x128xbf16> to vector<16x128xbf16>
    %c32_26 = arith.constant 32 : index
    %c0_27 = arith.constant 0 : index
    %37 = vector.load %arg13[%c32_26, %c0_27] : memref<48x128xbf16, #tpu.memory_space<vmem>>, vector<16x128xbf16>
    tpu.vector_store %arg13[%c32_26, %c0_27], %36 {strides = array<i32>} : memref<48x128xbf16, #tpu.memory_space<vmem>>, vector<16x128xbf16>,
    %c7_28 = arith.constant 7 : index
    %c0_29 = arith.constant 0 : index
    %38 = vector.load %arg13[%c7_28, %c0_29] : memref<48x128xbf16, #tpu.memory_space<vmem>>, vector<16x128xbf16>
    %c8_30 = arith.constant 8 : index
    %c0_31 = arith.constant 0 : index
    %39 = vector.load %arg13[%c8_30, %c0_31] : memref<48x128xbf16, #tpu.memory_space<vmem>>, vector<16x128xbf16>
    %40 = tpu.concatenate %38, %39 in 1 : vector<16x128xbf16>, vector<16x128xbf16> -> vector<16x256xbf16>
    %c31_32 = arith.constant 31 : index
    %c0_33 = arith.constant 0 : index
    %41 = vector.load %arg13[%c31_32, %c0_33] : memref<48x128xbf16, #tpu.memory_space<vmem>>, vector<16x128xbf16>
    %c32_34 = arith.constant 32 : index
    %c0_35 = arith.constant 0 : index
    %42 = vector.load %arg13[%c32_34, %c0_35] : memref<48x128xbf16, #tpu.memory_space<vmem>>, vector<16x128xbf16>
    %43 = tpu.concatenate %41, %42 in 1 : vector<16x128xbf16>, vector<16x128xbf16> -> vector<16x256xbf16>
    %44 = tpu.concatenate %40, %43 in 0 : vector<16x256xbf16>, vector<16x256xbf16> -> vector<32x256xbf16>
    %c0_36 = arith.constant 0 : index
    %c0_37 = arith.constant 0 : index
    %45 = vector.load %arg4[%c0_36, %c0_37] : memref<256x128xbf16, #tpu.memory_space<vmem>>, vector<256x128xbf16>
    %cst_38 = arith.constant dense<0.000000e+00> : vector<32x128xf32>
    %46 = tpu.matmul %44, %45, %cst_38 {dimension_numbers = #tpu.dot_dimension_numbers<[1], [0], [0], [1], [0, 0, 1, 1], [], []>} : vector<32x256xbf16>, vector<256x128xbf16>, vector<32x128xf32> -> vector<32x128xf32>
    %c0_39 = arith.constant 0 : index
    %c0_40 = arith.constant 0 : index
    %47 = vector.load %arg5[%c0_39, %c0_40] : memref<1x128xf32, #tpu.memory_space<vmem>>, vector<1x128xf32>
    %48 = vector.broadcast %47 : vector<1x128xf32> to vector<32x128xf32>
    %49 = arith.addf %46, %48 : vector<32x128xf32>
    %cst_41 = arith.constant 0.000000e+00 : f32
    %50 = vector.broadcast %cst_41 : f32 to vector<32x128xf32>
    %51 = arith.maximumf %49, %50 : vector<32x128xf32>
    %c0_42 = arith.constant 0 : index
    %c0_43 = arith.constant 0 : index
    %52 = vector.load %arg6[%c0_42, %c0_43] : memref<128x128xbf16, #tpu.memory_space<vmem>>, vector<128x128xbf16>
    %cst_44 = arith.constant dense<0.000000e+00> : vector<32x128xf32>
    %53 = tpu.matmul %18, %52, %cst_44 {dimension_numbers = #tpu.dot_dimension_numbers<[1], [0], [0], [1], [0, 0, 1, 1], [], []>} : vector<32x128xbf16>, vector<128x128xbf16>, vector<32x128xf32> -> vector<32x128xf32>
    %c0_45 = arith.constant 0 : index
    %c0_46 = arith.constant 0 : index
    %54 = vector.load %arg7[%c0_45, %c0_46] : memref<1x128xf32, #tpu.memory_space<vmem>>, vector<1x128xf32>
    %55 = vector.broadcast %54 : vector<1x128xf32> to vector<32x128xf32>
    %56 = arith.addf %53, %55 : vector<32x128xf32>
    %57 = arith.addf %51, %56 : vector<32x128xf32>
    %cst_47 = arith.constant 0.000000e+00 : f32
    %58 = vector.broadcast %cst_47 : f32 to vector<32x128xf32>
    %59 = arith.maximumf %57, %58 : vector<32x128xf32>
    %60 = arith.truncf %59 : vector<32x128xf32> to vector<32x128xbf16>
    %61 = vector.extract_strided_slice %60 {offsets = [0, 0], sizes = [16, 128], strides = [1, 1]} : vector<32x128xbf16> to vector<16x128xbf16>
    %c8_48 = arith.constant 8 : index
    %c0_49 = arith.constant 0 : index
    %62 = vector.load %arg13[%c8_48, %c0_49] : memref<48x128xbf16, #tpu.memory_space<vmem>>, vector<16x128xbf16>
    tpu.vector_store %arg13[%c8_48, %c0_49], %61 {strides = array<i32>} : memref<48x128xbf16, #tpu.memory_space<vmem>>, vector<16x128xbf16>,
    %63 = vector.extract_strided_slice %60 {offsets = [16, 0], sizes = [16, 128], strides = [1, 1]} : vector<32x128xbf16> to vector<16x128xbf16>
    %c32_50 = arith.constant 32 : index
    %c0_51 = arith.constant 0 : index
    %64 = vector.load %arg13[%c32_50, %c0_51] : memref<48x128xbf16, #tpu.memory_space<vmem>>, vector<16x128xbf16>
    tpu.vector_store %arg13[%c32_50, %c0_51], %63 {strides = array<i32>} : memref<48x128xbf16, #tpu.memory_space<vmem>>, vector<16x128xbf16>,
    %c8_52 = arith.constant 8 : index
    %c0_53 = arith.constant 0 : index
    %65 = vector.load %arg13[%c8_52, %c0_53] : memref<48x128xbf16, #tpu.memory_space<vmem>>, vector<16x128xbf16>
    %c32_54 = arith.constant 32 : index
    %c0_55 = arith.constant 0 : index
    %66 = vector.load %arg13[%c32_54, %c0_55] : memref<48x128xbf16, #tpu.memory_space<vmem>>, vector<16x128xbf16>
    %67 = tpu.concatenate %65, %66 in 0 : vector<16x128xbf16>, vector<16x128xbf16> -> vector<32x128xbf16>
    %c6 = arith.constant 6 : index
    %c0_56 = arith.constant 0 : index
    %68 = vector.load %arg13[%c6, %c0_56] : memref<48x128xbf16, #tpu.memory_space<vmem>>, vector<16x128xbf16>
    %c8_57 = arith.constant 8 : index
    %c0_58 = arith.constant 0 : index
    %69 = vector.load %arg13[%c8_57, %c0_58] : memref<48x128xbf16, #tpu.memory_space<vmem>>, vector<16x128xbf16>
    %70 = tpu.concatenate %68, %69 in 1 : vector<16x128xbf16>, vector<16x128xbf16> -> vector<16x256xbf16>
    %c30 = arith.constant 30 : index
    %c0_59 = arith.constant 0 : index
    %71 = vector.load %arg13[%c30, %c0_59] : memref<48x128xbf16, #tpu.memory_space<vmem>>, vector<16x128xbf16>
    %c32_60 = arith.constant 32 : index
    %c0_61 = arith.constant 0 : index
    %72 = vector.load %arg13[%c32_60, %c0_61] : memref<48x128xbf16, #tpu.memory_space<vmem>>, vector<16x128xbf16>
    %73 = tpu.concatenate %71, %72 in 1 : vector<16x128xbf16>, vector<16x128xbf16> -> vector<16x256xbf16>
    %74 = tpu.concatenate %70, %73 in 0 : vector<16x256xbf16>, vector<16x256xbf16> -> vector<32x256xbf16>
    %c0_62 = arith.constant 0 : index
    %c0_63 = arith.constant 0 : index
    %75 = vector.load %arg8[%c0_62, %c0_63] : memref<256x128xbf16, #tpu.memory_space<vmem>>, vector<256x128xbf16>
    %cst_64 = arith.constant dense<0.000000e+00> : vector<32x128xf32>
    %76 = tpu.matmul %74, %75, %cst_64 {dimension_numbers = #tpu.dot_dimension_numbers<[1], [0], [0], [1], [0, 0, 1, 1], [], []>} : vector<32x256xbf16>, vector<256x128xbf16>, vector<32x128xf32> -> vector<32x128xf32>
    %c0_65 = arith.constant 0 : index
    %c0_66 = arith.constant 0 : index
    %77 = vector.load %arg9[%c0_65, %c0_66] : memref<1x128xf32, #tpu.memory_space<vmem>>, vector<1x128xf32>
    %78 = vector.broadcast %77 : vector<1x128xf32> to vector<32x128xf32>
    %79 = arith.addf %76, %78 : vector<32x128xf32>
    %cst_67 = arith.constant 0.000000e+00 : f32
    %80 = vector.broadcast %cst_67 : f32 to vector<32x128xf32>
    %81 = arith.maximumf %79, %80 : vector<32x128xf32>
    %82 = arith.truncf %81 : vector<32x128xf32> to vector<32x128xbf16>
    %83 = vector.extract_strided_slice %82 {offsets = [0, 0], sizes = [16, 128], strides = [1, 1]} : vector<32x128xbf16> to vector<16x128xbf16>
    %c8_68 = arith.constant 8 : index
    %c0_69 = arith.constant 0 : index
    %84 = vector.load %arg13[%c8_68, %c0_69] : memref<48x128xbf16, #tpu.memory_space<vmem>>, vector<16x128xbf16>
    tpu.vector_store %arg13[%c8_68, %c0_69], %83 {strides = array<i32>} : memref<48x128xbf16, #tpu.memory_space<vmem>>, vector<16x128xbf16>,
    %85 = vector.extract_strided_slice %82 {offsets = [16, 0], sizes = [16, 128], strides = [1, 1]} : vector<32x128xbf16> to vector<16x128xbf16>
    %c32_70 = arith.constant 32 : index
    %c0_71 = arith.constant 0 : index
    %86 = vector.load %arg13[%c32_70, %c0_71] : memref<48x128xbf16, #tpu.memory_space<vmem>>, vector<16x128xbf16>
    tpu.vector_store %arg13[%c32_70, %c0_71], %85 {strides = array<i32>} : memref<48x128xbf16, #tpu.memory_space<vmem>>, vector<16x128xbf16>,
    %c6_72 = arith.constant 6 : index
    %c0_73 = arith.constant 0 : index
    %87 = vector.load %arg13[%c6_72, %c0_73] : memref<48x128xbf16, #tpu.memory_space<vmem>>, vector<16x128xbf16>
    %c8_74 = arith.constant 8 : index
    %c0_75 = arith.constant 0 : index
    %88 = vector.load %arg13[%c8_74, %c0_75] : memref<48x128xbf16, #tpu.memory_space<vmem>>, vector<16x128xbf16>
    %89 = tpu.concatenate %87, %88 in 1 : vector<16x128xbf16>, vector<16x128xbf16> -> vector<16x256xbf16>
    %c30_76 = arith.constant 30 : index
    %c0_77 = arith.constant 0 : index
    %90 = vector.load %arg13[%c30_76, %c0_77] : memref<48x128xbf16, #tpu.memory_space<vmem>>, vector<16x128xbf16>
    %c32_78 = arith.constant 32 : index
    %c0_79 = arith.constant 0 : index
    %91 = vector.load %arg13[%c32_78, %c0_79] : memref<48x128xbf16, #tpu.memory_space<vmem>>, vector<16x128xbf16>
    %92 = tpu.concatenate %90, %91 in 1 : vector<16x128xbf16>, vector<16x128xbf16> -> vector<16x256xbf16>
    %93 = tpu.concatenate %89, %92 in 0 : vector<16x256xbf16>, vector<16x256xbf16> -> vector<32x256xbf16>
    %c0_80 = arith.constant 0 : index
    %c0_81 = arith.constant 0 : index
    %94 = vector.load %arg10[%c0_80, %c0_81] : memref<256x128xbf16, #tpu.memory_space<vmem>>, vector<256x128xbf16>
    %cst_82 = arith.constant dense<0.000000e+00> : vector<32x128xf32>
    %95 = tpu.matmul %93, %94, %cst_82 {dimension_numbers = #tpu.dot_dimension_numbers<[1], [0], [0], [1], [0, 0, 1, 1], [], []>} : vector<32x256xbf16>, vector<256x128xbf16>, vector<32x128xf32> -> vector<32x128xf32>
    %c0_83 = arith.constant 0 : index
    %c0_84 = arith.constant 0 : index
    %96 = vector.load %arg11[%c0_83, %c0_84] : memref<1x128xf32, #tpu.memory_space<vmem>>, vector<1x128xf32>
    %97 = vector.broadcast %96 : vector<1x128xf32> to vector<32x128xf32>
    %98 = arith.addf %95, %97 : vector<32x128xf32>
    %cst_85 = arith.constant 0.000000e+00 : f32
    %99 = vector.broadcast %cst_85 : f32 to vector<32x128xf32>
    %100 = arith.maximumf %98, %99 : vector<32x128xf32>
    %101 = arith.extf %67 : vector<32x128xbf16> to vector<32x128xf32>
    %102 = arith.addf %100, %101 : vector<32x128xf32>
    %cst_86 = arith.constant 0.000000e+00 : f32
    %103 = vector.broadcast %cst_86 : f32 to vector<32x128xf32>
    %104 = arith.maximumf %102, %103 : vector<32x128xf32>
    %105 = vector.extract_strided_slice %104 {offsets = [0, 0], sizes = [16, 128], strides = [1, 1]} : vector<32x128xf32> to vector<16x128xf32>
    %c0_87 = arith.constant 0 : index
    %c0_88 = arith.constant 0 : index
    %c0_89 = arith.constant 0 : index
    %106 = vector.load %arg12[%c0_87, %c0_88, %c0_89] : memref<2x16x128xf32, #tpu.memory_space<vmem>>, vector<1x16x128xf32>
    %107 = vector.shape_cast %106 : vector<1x16x128xf32> to vector<16x128xf32>
    %108 = vector.shape_cast %105 : vector<16x128xf32> to vector<1x16x128xf32>
    tpu.vector_store %arg12[%c0_87, %c0_88, %c0_89], %108 {strides = array<i32>} : memref<2x16x128xf32, #tpu.memory_space<vmem>>, vector<1x16x128xf32>,
    %109 = vector.extract_strided_slice %104 {offsets = [16, 0], sizes = [16, 128], strides = [1, 1]} : vector<32x128xf32> to vector<16x128xf32>
    %c1_90 = arith.constant 1 : index
    %c0_91 = arith.constant 0 : index
    %c0_92 = arith.constant 0 : index
    %110 = vector.load %arg12[%c1_90, %c0_91, %c0_92] : memref<2x16x128xf32, #tpu.memory_space<vmem>>, vector<1x16x128xf32>
    %111 = vector.shape_cast %110 : vector<1x16x128xf32> to vector<16x128xf32>
    %112 = vector.shape_cast %109 : vector<16x128xf32> to vector<1x16x128xf32>
    tpu.vector_store %arg12[%c1_90, %c0_91, %c0_92], %112 {strides = array<i32>} : memref<2x16x128xf32, #tpu.memory_space<vmem>>, vector<1x16x128xf32>,
    return
  }
  func.func @transform_0(%arg0: i32) -> (i32, i32, i32) {
    %c0_i32 = arith.constant 0 : i32
    %c0_i32_0 = arith.constant 0 : i32
    %c0_i32_1 = arith.constant 0 : i32
    return %arg0, %c0_i32, %c0_i32_0 : i32, i32, i32
  }
  func.func @transform_1(%arg0: i32) -> (i32, i32) {
    %c0_i32 = arith.constant 0 : i32
    %c0_i32_0 = arith.constant 0 : i32
    %c0_i32_1 = arith.constant 0 : i32
    return %c0_i32, %c0_i32_0 : i32, i32
  }
  func.func @transform_2(%arg0: i32) -> (i32, i32) {
    %c0_i32 = arith.constant 0 : i32
    %c0_i32_0 = arith.constant 0 : i32
    %c0_i32_1 = arith.constant 0 : i32
    return %c0_i32, %c0_i32_0 : i32, i32
  }
  func.func @transform_3(%arg0: i32) -> (i32, i32) {
    %c0_i32 = arith.constant 0 : i32
    %c0_i32_0 = arith.constant 0 : i32
    %c0_i32_1 = arith.constant 0 : i32
    return %c0_i32, %c0_i32_0 : i32, i32
  }
  func.func @transform_4(%arg0: i32) -> (i32, i32) {
    %c0_i32 = arith.constant 0 : i32
    %c0_i32_0 = arith.constant 0 : i32
    %c0_i32_1 = arith.constant 0 : i32
    return %c0_i32, %c0_i32_0 : i32, i32
  }
  func.func @transform_5(%arg0: i32) -> (i32, i32) {
    %c0_i32 = arith.constant 0 : i32
    %c0_i32_0 = arith.constant 0 : i32
    %c0_i32_1 = arith.constant 0 : i32
    return %c0_i32, %c0_i32_0 : i32, i32
  }
  func.func @transform_6(%arg0: i32) -> (i32, i32) {
    %c0_i32 = arith.constant 0 : i32
    %c0_i32_0 = arith.constant 0 : i32
    %c0_i32_1 = arith.constant 0 : i32
    return %c0_i32, %c0_i32_0 : i32, i32
  }
  func.func @transform_7(%arg0: i32) -> (i32, i32) {
    %c0_i32 = arith.constant 0 : i32
    %c0_i32_0 = arith.constant 0 : i32
    %c0_i32_1 = arith.constant 0 : i32
    return %c0_i32, %c0_i32_0 : i32, i32
  }
  func.func @transform_8(%arg0: i32) -> (i32, i32) {
    %c0_i32 = arith.constant 0 : i32
    %c0_i32_0 = arith.constant 0 : i32
    %c0_i32_1 = arith.constant 0 : i32
    return %c0_i32, %c0_i32_0 : i32, i32
  }
  func.func @transform_9(%arg0: i32) -> (i32, i32) {
    %c0_i32 = arith.constant 0 : i32
    %c0_i32_0 = arith.constant 0 : i32
    %c0_i32_1 = arith.constant 0 : i32
    return %c0_i32, %c0_i32_0 : i32, i32
  }
  func.func @transform_10(%arg0: i32) -> (i32, i32) {
    %c0_i32 = arith.constant 0 : i32
    %c0_i32_0 = arith.constant 0 : i32
    %c0_i32_1 = arith.constant 0 : i32
    return %c0_i32, %c0_i32_0 : i32, i32
  }
  func.func @transform_11(%arg0: i32) -> (i32, i32, i32) {
    %c0_i32 = arith.constant 0 : i32
    %c0_i32_0 = arith.constant 0 : i32
    %c0_i32_1 = arith.constant 0 : i32
    return %arg0, %c0_i32, %c0_i32_0 : i32, i32, i32
  }
}

</mosaic_0001>

<llo_original>
// kernel: taconvnet_forward.1
$region0: #{taconvnet_forward.1}
  #allocation0 [shape = 'u32[]', space=smem, size = 0x4, offset = 0x4, fixed_abs, tag = 'smem constant byte address 0x4 - core index']
  #allocation1 [shape = 'u32[144,128]{1,0:T(1,128)}', space=vmem, size = 0x12000, scoped, tag = 'internal scratch']
  #allocation2 [shape = 'bf16[48,128]{1,0:T(8,128)(2,1)}', space=vmem, size = 0x3000, scoped, tag = 'scratch operand']
  %s0 = inlined_call_operand.vmem [shape: f32[4,16,4], index: 0, kind: input, shape index: {}]
  %s1 = inlined_call_operand.hbm [shape: bf16[256,128], index: 1, kind: input, shape index: {}]
  %s2 = inlined_call_operand.vmem [shape: f32[1,128], index: 2, kind: input, shape index: {}]
  %s3 = inlined_call_operand.hbm [shape: bf16[256,128], index: 3, kind: input, shape index: {}]
  %s4 = inlined_call_operand.vmem [shape: f32[1,128], index: 4, kind: input, shape index: {}]
  %s5 = inlined_call_operand.vmem [shape: bf16[128,128], index: 5, kind: input, shape index: {}]
  %s6 = inlined_call_operand.vmem [shape: f32[1,128], index: 6, kind: input, shape index: {}]
  %s7 = inlined_call_operand.hbm [shape: bf16[256,128], index: 7, kind: input, shape index: {}]
  %s8 = inlined_call_operand.vmem [shape: f32[1,128], index: 8, kind: input, shape index: {}]
  %s9 = inlined_call_operand.hbm [shape: bf16[256,128], index: 9, kind: input, shape index: {}]
  %s10 = inlined_call_operand.vmem [shape: f32[1,128], index: 10, kind: input, shape index: {}]
  %s11 = inlined_call_operand.vmem [shape: f32[4,16,128], index: 11, kind: output, shape index: {}]
  %s12 = sld [smem:[#allocation0]]
  $region93: #{taconvnet_forward.1} parent=0
    _
  %s14 = ssub.s32 1, %s12
  %s15 = scalar_select 0, %s14, %s12
  $region1: #{taconvnet_forward.1} parent=0
    #allocation3 [shape = 'u8[65536]{0}', space=vmem, size = 0x10000, scoped, tag = 'input window, operand 1, single buffered']
    #allocation4 [shape = 's32[2]{0}', space=sflag, size = 0x8, scoped, tag = 'scoped memory for taconvnet_forward.1']
    #allocation5 [shape = 'u8[65536]{0}', space=vmem, size = 0x10000, scoped, tag = 'input window, operand 3, single buffered']
    #allocation6 [shape = 's32[1]{0}', space=sflag, size = 0x4, scoped, tag = 'scoped memory for taconvnet_forward.1']
    #allocation7 [shape = 'u8[65536]{0}', space=vmem, size = 0x10000, scoped, tag = 'input window, operand 7, single buffered']
    #allocation8 [shape = 'u8[65536]{0}', space=vmem, size = 0x10000, scoped, tag = 'input window, operand 9, single buffered']
    #allocation9 [shape = 's32[1]{0}', space=sflag, size = 0x4, scoped, tag = 'scoped memory for taconvnet_forward.1']
    %16 = vsyncpa [#allocation4], 0
    %17 = vsyncpa [#allocation6], 0
    %18 = vsyncpa [#allocation9], 0
    loop: start=0, step=1, limit=4
    $region2: #{taconvnet_forward.1} parent=1 // loop_pre_header
      _
    $region3: #{taconvnet_forward.1} parent=1 // loop_header
      %s20 = sphi 0, %s24
      %p21 = scmp.ge.s32.totalorder %s20, 4
      %s30 = sphi 0, %s32
      %s33 = sphi 0, %s30
      %s34 = sphi 0, %s33
      %s50 = sphi 0, %s34
      %s54 = sphi 0, %s54
      %s56 = sphi 0, %s54
      %s57 = sphi 0, %s56
      %s71 = sphi 0, %s57
      %s75 = sphi 0, %s75
      %s77 = sphi 0, %s75
      %s78 = sphi 0, %s77
      %s92 = sphi 0, %s78
      %s96 = sphi 0, %s96
      %s98 = sphi 0, %s96
      %s99 = sphi 0, %s98
      %s113 = sphi 0, %s99
      %s117 = sphi 0, %s117
      %s119 = sphi 0, %s117
      %s120 = sphi 0, %s119
      %s134 = sphi 0, %s120
      %s138 = sphi 0, %s138
      %s140 = sphi 0, %s138
      %s141 = sphi 0, %s140
      %s155 = sphi 0, %s141
      %s159 = sphi 0, %s159
      %s161 = sphi 0, %s159
      %s162 = sphi 0, %s161
      %s176 = sphi 0, %s162
      %s180 = sphi 0, %s180
      %s182 = sphi 0, %s180
      %s183 = sphi 0, %s182
      %s197 = sphi 0, %s183
      %s201 = sphi 0, %s201
      %s203 = sphi 0, %s201
      %s204 = sphi 0, %s203
      %s218 = sphi 0, %s204
      %s222 = sphi 0, %s222
      %s224 = sphi 0, %s222
      %s225 = sphi 0, %s224
      %s239 = sphi 0, %s225
      %s243 = sphi 0, %s243
      %s245 = sphi 0, %s243
      %s246 = sphi 0, %s245
      %s260 = sphi 0, %s246
      %s266 = sphi 0, %s268
      %s269 = sphi 0, %s266
      %s270 = sphi 0, %s269
      %s286 = sphi 0, %s270
    $region4: #{taconvnet_forward.1} parent=1 // loop_header_branch
      %23 = sbr.rel (%p21) target = $region8
    $region5: #{taconvnet_forward.1} parent=1 // loop_body
      %s25 = ssub.s32 %s20, 1
      %s26 = ssub.s32 %s20, 2
      %s27 = sadd.s32 %s20, 1
      %s28 = ssub.s32 %s20, %s27
      %p29 = scmp.eq.s32.totalorder %s28, 0
      %s31 = sadd.s32 %s30, 1
      %s32 = scalar_select %p29, %s30, %s31
      %p35 = pneg %p29
      %p36 = scmp.eq.s32.totalorder %s20, 1
      %p37 = por %p35, %p36
      %p38 = scmp.ne.s32.totalorder %s30, %s33
      %p39 = scmp.eq.s32.totalorder %s20, 0
      %p40 = por %p38, %p39
      %p41 = scmp.ne.s32.totalorder %s30, %s33
      %p42 = scmp.eq.s32.totalorder %s25, 1
      %p43 = por %p41, %p42
      %p44 = scmp.ne.s32.totalorder %s33, %s34
      %p45 = scmp.eq.s32.totalorder %s25, 0
      %p46 = por %p44, %p45
      %p47 = scmp.ne.s32.totalorder %s33, %s34
      %p48 = scmp.eq.s32.totalorder %s26, 1
      %p49 = por %p47, %p48
      %p51 = scmp.ne.s32.totalorder %s34, %s50
      %p52 = scmp.eq.s32.totalorder %s26, 0
      %p53 = por %p51, %p52
      %s55 = sadd.s32 %s54, 1
      %p58 = scmp.eq.s32.totalorder %s20, 1
      %p59 = scmp.ne.s32.totalorder %s54, %s56
      %p60 = scmp.eq.s32.totalorder %s20, 0
      %p61 = por %p59, %p60
      %p62 = scmp.ne.s32.totalorder %s54, %s56
      %p63 = scmp.eq.s32.totalorder %s25, 1
      %p64 = por %p62, %p63
      %p65 = scmp.ne.s32.totalorder %s56, %s57
      %p66 = scmp.eq.s32.totalorder %s25, 0
      %p67 = por %p65, %p66
      %p68 = scmp.ne.s32.totalorder %s56, %s57
      %p69 = scmp.eq.s32.totalorder %s26, 1
      %p70 = por %p68, %p69
      %p72 = scmp.ne.s32.totalorder %s57, %s71
      %p73 = scmp.eq.s32.totalorder %s26, 0
      %p74 = por %p72, %p73
      %s76 = sadd.s32 %s75, 1
      %p79 = scmp.eq.s32.totalorder %s20, 1
      %p80 = scmp.ne.s32.totalorder %s75, %s77
      %p81 = scmp.eq.s32.totalorder %s20, 0
      %p82 = por %p80, %p81
      %p83 = scmp.ne.s32.totalorder %s75, %s77
      %p84 = scmp.eq.s32.totalorder %s25, 1
      %p85 = por %p83, %p84
      %p86 = scmp.ne.s32.totalorder %s77, %s78
      %p87 = scmp.eq.s32.totalorder %s25, 0
      %p88 = por %p86, %p87
      %p89 = scmp.ne.s32.totalorder %s77, %s78
      %p90 = scmp.eq.s32.totalorder %s26, 1
      %p91 = por %p89, %p90
      %p93 = scmp.ne.s32.totalorder %s78, %s92
      %p94 = scmp.eq.s32.totalorder %s26, 0
      %p95 = por %p93, %p94
      %s97 = sadd.s32 %s96, 1
      %p100 = scmp.eq.s32.totalorder %s20, 1
      %p101 = scmp.ne.s32.totalorder %s96, %s98
      %p102 = scmp.eq.s32.totalorder %s20, 0
      %p103 = por %p101, %p102
      %p104 = scmp.ne.s32.totalorder %s96, %s98
      %p105 = scmp.eq.s32.totalorder %s25, 1
      %p106 = por %p104, %p105
      %p107 = scmp.ne.s32.totalorder %s98, %s99
      %p108 = scmp.eq.s32.totalorder %s25, 0
      %p109 = por %p107, %p108
      %p110 = scmp.ne.s32.totalorder %s98, %s99
      %p111 = scmp.eq.s32.totalorder %s26, 1
      %p112 = por %p110, %p111
      %p114 = scmp.ne.s32.totalorder %s99, %s113
      %p115 = scmp.eq.s32.totalorder %s26, 0
      %p116 = por %p114, %p115
      %s118 = sadd.s32 %s117, 1
      %p121 = scmp.eq.s32.totalorder %s20, 1
      %p122 = scmp.ne.s32.totalorder %s117, %s119
      %p123 = scmp.eq.s32.totalorder %s20, 0
      %p124 = por %p122, %p123
      %p125 = scmp.ne.s32.totalorder %s117, %s119
      %p126 = scmp.eq.s32.totalorder %s25, 1
      %p127 = por %p125, %p126
      %p128 = scmp.ne.s32.totalorder %s119, %s120
      %p129 = scmp.eq.s32.totalorder %s25, 0
      %p130 = por %p128, %p129
      %p131 = scmp.ne.s32.totalorder %s119, %s120
      %p132 = scmp.eq.s32.totalorder %s26, 1
      %p133 = por %p131, %p132
      %p135 = scmp.ne.s32.totalorder %s120, %s134
      %p136 = scmp.eq.s32.totalorder %s26, 0
      %p137 = por %p135, %p136
      %s139 = sadd.s32 %s138, 1
      %p142 = scmp.eq.s32.totalorder %s20, 1
      %p143 = scmp.ne.s32.totalorder %s138, %s140
      %p144 = scmp.eq.s32.totalorder %s20, 0
      %p145 = por %p143, %p144
      %p146 = scmp.ne.s32.totalorder %s138, %s140
      %p147 = scmp.eq.s32.totalorder %s25, 1
      %p148 = por %p146, %p147
      %p149 = scmp.ne.s32.totalorder %s140, %s141
      %p150 = scmp.eq.s32.totalorder %s25, 0
      %p151 = por %p149, %p150
      %p152 = scmp.ne.s32.totalorder %s140, %s141
      %p153 = scmp.eq.s32.totalorder %s26, 1
      %p154 = por %p152, %p153
      %p156 = scmp.ne.s32.totalorder %s141, %s155
      %p157 = scmp.eq.s32.totalorder %s26, 0
      %p158 = por %p156, %p157
      %s160 = sadd.s32 %s159, 1
      %p163 = scmp.eq.s32.totalorder %s20, 1
      %p164 = scmp.ne.s32.totalorder %s159, %s161
      %p165 = scmp.eq.s32.totalorder %s20, 0
      %p166 = por %p164, %p165
      %p167 = scmp.ne.s32.totalorder %s159, %s161
      %p168 = scmp.eq.s32.totalorder %s25, 1
      %p169 = por %p167, %p168
      %p170 = scmp.ne.s32.totalorder %s161, %s162
      %p171 = scmp.eq.s32.totalorder %s25, 0
      %p172 = por %p170, %p171
      %p173 = scmp.ne.s32.totalorder %s161, %s162
      %p174 = scmp.eq.s32.totalorder %s26, 1
      %p175 = por %p173, %p174
      %p177 = scmp.ne.s32.totalorder %s162, %s176
      %p178 = scmp.eq.s32.totalorder %s26, 0
      %p179 = por %p177, %p178
      %s181 = sadd.s32 %s180, 1
      %p184 = scmp.eq.s32.totalorder %s20, 1
      %p185 = scmp.ne.s32.totalorder %s180, %s182
      %p186 = scmp.eq.s32.totalorder %s20, 0
      %p187 = por %p185, %p186
      %p188 = scmp.ne.s32.totalorder %s180, %s182
      %p189 = scmp.eq.s32.totalorder %s25, 1
      %p190 = por %p188, %p189
      %p191 = scmp.ne.s32.totalorder %s182, %s183
      %p192 = scmp.eq.s32.totalorder %s25, 0
      %p193 = por %p191, %p192
      %p194 = scmp.ne.s32.totalorder %s182, %s183
      %p195 = scmp.eq.s32.totalorder %s26, 1
      %p196 = por %p194, %p195
      %p198 = scmp.ne.s32.totalorder %s183, %s197
      %p199 = scmp.eq.s32.totalorder %s26, 0
      %p200 = por %p198, %p199
      %s202 = sadd.s32 %s201, 1
      %p205 = scmp.eq.s32.totalorder %s20, 1
      %p206 = scmp.ne.s32.totalorder %s201, %s203
      %p207 = scmp.eq.s32.totalorder %s20, 0
      %p208 = por %p206, %p207
      %p209 = scmp.ne.s32.totalorder %s201, %s203
      %p210 = scmp.eq.s32.totalorder %s25, 1
      %p211 = por %p209, %p210
      %p212 = scmp.ne.s32.totalorder %s203, %s204
      %p213 = scmp.eq.s32.totalorder %s25, 0
      %p214 = por %p212, %p213
      %p215 = scmp.ne.s32.totalorder %s203, %s204
      %p216 = scmp.eq.s32.totalorder %s26, 1
      %p217 = por %p215, %p216
      %p219 = scmp.ne.s32.totalorder %s204, %s218
      %p220 = scmp.eq.s32.totalorder %s26, 0
      %p221 = por %p219, %p220
      %s223 = sadd.s32 %s222, 1
      %p226 = scmp.eq.s32.totalorder %s20, 1
      %p227 = scmp.ne.s32.totalorder %s222, %s224
      %p228 = scmp.eq.s32.totalorder %s20, 0
      %p229 = por %p227, %p228
      %p230 = scmp.ne.s32.totalorder %s222, %s224
      %p231 = scmp.eq.s32.totalorder %s25, 1
      %p232 = por %p230, %p231
      %p233 = scmp.ne.s32.totalorder %s224, %s225
      %p234 = scmp.eq.s32.totalorder %s25, 0
      %p235 = por %p233, %p234
      %p236 = scmp.ne.s32.totalorder %s224, %s225
      %p237 = scmp.eq.s32.totalorder %s26, 1
      %p238 = por %p236, %p237
      %p240 = scmp.ne.s32.totalorder %s225, %s239
      %p241 = scmp.eq.s32.totalorder %s26, 0
      %p242 = por %p240, %p241
      %s244 = sadd.s32 %s243, 1
      %p247 = scmp.eq.s32.totalorder %s20, 1
      %p248 = scmp.ne.s32.totalorder %s243, %s245
      %p249 = scmp.eq.s32.totalorder %s20, 0
      %p250 = por %p248, %p249
      %p251 = scmp.ne.s32.totalorder %s243, %s245
      %p252 = scmp.eq.s32.totalorder %s25, 1
      %p253 = por %p251, %p252
      %p254 = scmp.ne.s32.totalorder %s245, %s246
      %p255 = scmp.eq.s32.totalorder %s25, 0
      %p256 = por %p254, %p255
      %p257 = scmp.ne.s32.totalorder %s245, %s246
      %p258 = scmp.eq.s32.totalorder %s26, 1
      %p259 = por %p257, %p258
      %p261 = scmp.ne.s32.totalorder %s246, %s260
      %p262 = scmp.eq.s32.totalorder %s26, 0
      %p263 = por %p261, %p262
      %s264 = ssub.s32 %s20, %s27
      %p265 = scmp.eq.s32.totalorder %s264, 0
      %s267 = sadd.s32 %s266, 1
      %s268 = scalar_select %p265, %s266, %s267
      %p271 = pneg %p265
      %p272 = scmp.eq.s32.totalorder %s20, 1
      %p273 = por %p271, %p272
      %p274 = scmp.ne.s32.totalorder %s266, %s269
      %p275 = scmp.eq.s32.totalorder %s20, 0
      %p276 = por %p274, %p275
      %p277 = scmp.ne.s32.totalorder %s266, %s269
      %p278 = scmp.eq.s32.totalorder %s25, 1
      %p279 = por %p277, %p278
      %p280 = scmp.ne.s32.totalorder %s269, %s270
      %p281 = scmp.eq.s32.totalorder %s25, 0
      %p282 = por %p280, %p281
      %p283 = scmp.ne.s32.totalorder %s269, %s270
      %p284 = scmp.eq.s32.totalorder %s26, 1
      %p285 = por %p283, %p284
      %p287 = scmp.ne.s32.totalorder %s270, %s286
      %p288 = scmp.eq.s32.totalorder %s26, 0
      %p289 = por %p287, %p288
      %p290 = scmp.le.s32.totalorder 1, %s20
      %p291 = scmp.lt.s32.totalorder %s20, 3
      %p292 = pnand %p290, %p291
      %p293 = pneg %p292
      // Predicated region
      $region9: #{taconvnet_forward.1} parent=5 // pred_check
        _
      $region10: #{taconvnet_forward.1} parent=5 // pred_check_branch
        %295 = sbr.rel (%p292) target = $region12
      $region11: #{taconvnet_forward.1} parent=5 // pred_region
        %s296 = ssub.s32 %s20, 1
        // Predicated region
        $region13: #{taconvnet_forward.1} parent=11 // pred_check
          %p297 = pneg %p67
        $region14: #{taconvnet_forward.1} parent=11 // pred_check_branch
          %299 = sbr.rel (%p297) target = $region16
        $region15: #{taconvnet_forward.1} parent=11 // pred_region
          %s301 = ssub.s32 2048, 2048
          %302 = vsyncadd [#allocation4], %s301
          %s303 = sshll.u32 [#allocation3], 4
          %s304 = int_to_ptr.vmem [resolvable:$true] %s303
          %309 = dma.hbm_to_vmem [thread:$0]  %s1, 2048, %s304, [#allocation4], 64, 64, 4
        $region16: #{taconvnet_forward.1} parent=11 // pred_fallthru
          _
        // Predicated region
        $region17: #{taconvnet_forward.1} parent=11 // pred_check
          %p310 = pneg %p88
        $region18: #{taconvnet_forward.1} parent=11 // pred_check_branch
          %312 = sbr.rel (%p310) target = $region20
        $region19: #{taconvnet_forward.1} parent=11 // pred_region
          _
        $region20: #{taconvnet_forward.1} parent=11 // pred_fallthru
          _
        // Predicated region
        $region21: #{taconvnet_forward.1} parent=11 // pred_check
          %p313 = pneg %p109
        $region22: #{taconvnet_forward.1} parent=11 // pred_check_branch
          %315 = sbr.rel (%p313) target = $region24
        $region23: #{taconvnet_forward.1} parent=11 // pred_region
          %s317 = ssub.s32 2048, 2048
          %318 = vsyncadd [#allocation6], %s317
          %s319 = sshll.u32 [#allocation5], 4
          %s320 = int_to_ptr.vmem [resolvable:$true] %s319
          %325 = dma.hbm_to_vmem [thread:$0]  %s3, 2048, %s320, [#allocation6], 64, 64, 4
        $region24: #{taconvnet_forward.1} parent=11 // pred_fallthru
          _
        // Predicated region
        $region25: #{taconvnet_forward.1} parent=11 // pred_check
          %p326 = pneg %p130
        $region26: #{taconvnet_forward.1} parent=11 // pred_check_branch
          %328 = sbr.rel (%p326) target = $region28
        $region27: #{taconvnet_forward.1} parent=11 // pred_region
          _
        $region28: #{taconvnet_forward.1} parent=11 // pred_fallthru
          _
        // Predicated region
        $region29: #{taconvnet_forward.1} parent=11 // pred_check
          %p329 = pneg %p151
        $region30: #{taconvnet_forward.1} parent=11 // pred_check_branch
          %331 = sbr.rel (%p329) target = $region32
        $region31: #{taconvnet_forward.1} parent=11 // pred_region
          _
        $region32: #{taconvnet_forward.1} parent=11 // pred_fallthru
          _
        // Predicated region
        $region33: #{taconvnet_forward.1} parent=11 // pred_check
          %p332 = pneg %p172
        $region34: #{taconvnet_forward.1} parent=11 // pred_check_branch
          %334 = sbr.rel (%p332) target = $region36
        $region35: #{taconvnet_forward.1} parent=11 // pred_region
          _
        $region36: #{taconvnet_forward.1} parent=11 // pred_fallthru
          _
        // Predicated region
        $region37: #{taconvnet_forward.1} parent=11 // pred_check
          %p335 = pneg %p193
        $region38: #{taconvnet_forward.1} parent=11 // pred_check_branch
          %337 = sbr.rel (%p335) target = $region40
        $region39: #{taconvnet_forward.1} parent=11 // pred_region
          %s339 = ssub.s32 2048, 2048
          %340 = vsyncadd [#allocation6], %s339
          %s341 = sshll.u32 [#allocation7], 4
          %s342 = int_to_ptr.vmem [resolvable:$true] %s341
          %347 = dma.hbm_to_vmem [thread:$0]  %s7, 2048, %s342, [#allocation6], 64, 64, 4
        $region40: #{taconvnet_forward.1} parent=11 // pred_fallthru
          _
        // Predicated region
        $region41: #{taconvnet_forward.1} parent=11 // pred_check
          %p348 = pneg %p214
        $region42: #{taconvnet_forward.1} parent=11 // pred_check_branch
          %350 = sbr.rel (%p348) target = $region44
        $region43: #{taconvnet_forward.1} parent=11 // pred_region
          _
        $region44: #{taconvnet_forward.1} parent=11 // pred_fallthru
          _
        // Predicated region
        $region45: #{taconvnet_forward.1} parent=11 // pred_check
          %p351 = pneg %p235
        $region46: #{taconvnet_forward.1} parent=11 // pred_check_branch
          %353 = sbr.rel (%p351) target = $region48
        $region47: #{taconvnet_forward.1} parent=11 // pred_region
          %s355 = ssub.s32 2048, 2048
          %356 = vsyncadd [#allocation9], %s355
          %s357 = sshll.u32 [#allocation8], 4
          %s358 = int_to_ptr.vmem [resolvable:$true] %s357
          %363 = dma.hbm_to_vmem [thread:$0]  %s9, 2048, %s358, [#allocation9], 64, 64, 4
        $region48: #{taconvnet_forward.1} parent=11 // pred_fallthru
          _
        // Predicated region
        $region49: #{taconvnet_forward.1} parent=11 // pred_check
          %p364 = pneg %p256
        $region50: #{taconvnet_forward.1} parent=11 // pred_check_branch
          %366 = sbr.rel (%p364) target = $region52
        $region51: #{taconvnet_forward.1} parent=11 // pred_region
          _
        $region52: #{taconvnet_forward.1} parent=11 // pred_fallthru
          _
      $region12: #{taconvnet_forward.1} parent=5 // pred_fallthru
        _
      %p367 = scmp.lt.s32.totalorder %s20, 2
      // Predicated region
      $region53: #{taconvnet_forward.1} parent=5 // pred_check
        %p368 = pneg %p367
      $region54: #{taconvnet_forward.1} parent=5 // pred_check_branch
        %370 = sbr.rel (%p368) target = $region56
      $region55: #{taconvnet_forward.1} parent=5 // pred_region
        // Predicated region
        $region57: #{taconvnet_forward.1} parent=55 // pred_check
          %p371 = pneg %p40
        $region58: #{taconvnet_forward.1} parent=55 // pred_check_branch
          %373 = sbr.rel (%p371) target = $region60
        $region59: #{taconvnet_forward.1} parent=55 // pred_region
          %s374 = smul.u32 2, %s20
          %p375 = scmp.lt.s32.totalorder %s374, 3
          %s376 = scalar_select %p375, %s374, 3
          %s377 = smul.addr %s376, 2
          %s378 = smul.addr %s377, 8
          %s379 = scalar_lea.vmem %s0, %s378
          %s380 = smul.u32 2, %s20
        $region60: #{taconvnet_forward.1} parent=55 // pred_fallthru
          _
      $region56: #{taconvnet_forward.1} parent=5 // pred_fallthru
        _
      %p381 = scmp.le.s32.totalorder 1, %s20
      %p382 = scmp.lt.s32.totalorder %s20, 3
      %p383 = pnand %p381, %p382
      %p384 = pneg %p383
      // Predicated region
      $region61: #{taconvnet_forward.1} parent=5 // pred_check
        _
      $region62: #{taconvnet_forward.1} parent=5 // pred_check_branch
        %386 = sbr.rel (%p383) target = $region64
      $region63: #{taconvnet_forward.1} parent=5 // pred_region
        %s387 = ssub.s32 %s20, 1
        // Predicated region
        $region65: #{taconvnet_forward.1} parent=63 // pred_check
          %p388 = pneg %p67
        $region66: #{taconvnet_forward.1} parent=63 // pred_check_branch
          %390 = sbr.rel (%p388) target = $region68
        $region67: #{taconvnet_forward.1} parent=63 // pred_region
          %391 = dma.done [#allocation4], 2048
        $region68: #{taconvnet_forward.1} parent=63 // pred_fallthru
          _
        // Predicated region
        $region69: #{taconvnet_forward.1} parent=63 // pred_check
          %p392 = pneg %p109
        $region70: #{taconvnet_forward.1} parent=63 // pred_check_branch
          %394 = sbr.rel (%p392) target = $region72
        $region71: #{taconvnet_forward.1} parent=63 // pred_region
          %395 = dma.done [#allocation6], 2048
        $region72: #{taconvnet_forward.1} parent=63 // pred_fallthru
          _
        // Predicated region
        $region73: #{taconvnet_forward.1} parent=63 // pred_check
          %p396 = pneg %p193
        $region74: #{taconvnet_forward.1} parent=63 // pred_check_branch
          %398 = sbr.rel (%p396) target = $region76
        $region75: #{taconvnet_forward.1} parent=63 // pred_region
          %399 = dma.done [#allocation6], 2048
        $region76: #{taconvnet_forward.1} parent=63 // pred_fallthru
          _
        // Predicated region
        $region77: #{taconvnet_forward.1} parent=63 // pred_check
          %p400 = pneg %p235
        $region78: #{taconvnet_forward.1} parent=63 // pred_check_branch
          %402 = sbr.rel (%p400) target = $region80
        $region79: #{taconvnet_forward.1} parent=63 // pred_region
          %403 = dma.done [#allocation9], 2048
        $region80: #{taconvnet_forward.1} parent=63 // pred_fallthru
          _
        %s404 = smul.u32 2, %s25
        %p405 = scmp.lt.s32.totalorder %s404, 3
        %s406 = scalar_select %p405, %s404, 3
        %s407 = smul.addr %s406, 2
        %s408 = smul.addr %s407, 8
        %s409 = scalar_lea.vmem %s0, %s408
        %p410 = pneg %p46
        %p411 = pneg %p43
        %p412 = pneg %p67
        %p413 = pneg %p64
        %p414 = pneg %p88
        %p415 = pneg %p85
        %p416 = pneg %p109
        %p417 = pneg %p106
        %p418 = pneg %p130
        %p419 = pneg %p127
        %p420 = pneg %p151
        %p421 = pneg %p148
        %p422 = pneg %p172
        %p423 = pneg %p169
        %p424 = pneg %p193
        %p425 = pneg %p190
        %p426 = pneg %p214
        %p427 = pneg %p211
        %p428 = pneg %p235
        %p429 = pneg %p232
        %p430 = pneg %p256
        %p431 = pneg %p253
        %p432 = pneg %p282
        %p433 = pneg %p279
        %s434 = smul.u32 2, %s25
        %p435 = scmp.lt.s32.totalorder %s434, 3
        %s436 = scalar_select %p435, %s434, 3
        %s437 = smul.addr %s436, 2
        %s438 = smul.addr %s437, 8
        %s439 = scalar_lea.vmem %s11, %s438
        %s440 = smul.u32 2, %s25
        %p441 = scmp.lt.s32.totalorder %s440, 3
        %s442 = scalar_select %p441, %s440, 3
        %s443 = smul.addr %s442, 2
        %s444 = smul.addr %s443, 8
        %s445 = scalar_lea.vmem %s0, %s444
        %s446 = smul.u32 2, %s25
        %s447 = smul.u32 2, %s25
        %p448 = scmp.lt.s32.totalorder %s447, 3
        %s449 = scalar_select %p448, %s447, 3
        %s450 = smul.addr %s449, 2
        %s451 = smul.addr %s450, 8
        %s452 = scalar_lea.vmem %s11, %s451
        %s453 = smul.u32 2, %s25
        %v455 = vld [vmem:[%s445] sm:$0xff]
        %v456 = vld [vmem:[%s445 + $0x8] sm:$0xff]
        %vm457 = vcmask 31744
        %v458 = vsel %vm457, %v455, 0.0
        %v459 = vsel %vm457, %v456, 0.0
        %v460 = vpack.c.bf16 %v458, 0.0
        %v461 = vpack.c.bf16 %v459, %v459
        %v464 = vunpack.c.l.b16 %v460
        %v465 = vunpack.c.h.b16 %v460
        %v466 = vunpack.c.l.b16 %v461
        %v467 = vpack.c.b16 %v464, %v464
        %v468 = vpack.c.b16 %v465, %v465
        %v469 = vpack.c.b16 %v466, %v466
        %473 = vst [vmem:[#allocation2] sm:$0xf] %v467
        %474 = vst [vmem:[#allocation2 + $0x4] sm:$0xf] %v468
        %475 = vst [vmem:[#allocation2 + $0x8] sm:$0xf] %v469
        %s476 = scalar_lea.vmem %s445, 16
        %v477 = vld [vmem:[%s476] sm:$0xff]
        %v478 = vld [vmem:[%s476 + $0x8] sm:$0xff]
        %v479 = vsel %vm457, %v477, 0.0
        %v480 = vsel %vm457, %v478, 0.0
        %v481 = vpack.c.bf16 %v479, 0.0
        %v482 = vpack.c.bf16 %v480, %v480
        %v485 = vunpack.c.l.b16 %v481
        %v486 = vunpack.c.h.b16 %v481
        %v487 = vunpack.c.l.b16 %v482
        %v488 = vpack.c.b16 %v485, %v485
        %v489 = vpack.c.b16 %v486, %v486
        %v490 = vpack.c.b16 %v487, %v487
        %494 = vst [vmem:[#allocation2 + $0xc] sm:$0xf] %v488
        %495 = vst [vmem:[#allocation2 + $0x10] sm:$0xf] %v489
        %496 = vst [vmem:[#allocation2 + $0x14] sm:$0xf] %v490
        %v497 = vld [vmem:[#allocation2 + $0x4] sm:$0xf]
        %v498 = vld [vmem:[#allocation2 + $0x8] sm:$0xf]
        %v499 = vld [vmem:[#allocation2 + $0x10] sm:$0xf]
        %v500 = vld [vmem:[#allocation2 + $0x14] sm:$0xf]
        %v503 = vunpack.c.l.b16 %v497
        %v504 = vunpack.c.l.b16 %v498
        %v505 = vpack.c.b16 %v504, %v503
        %v509 = vunpack.c.l.b16 %v499
        %v510 = vunpack.c.l.b16 %v500
        %v511 = vpack.c.b16 %v510, %v509
        %v513 = vld [vmem:[#allocation2] sm:$0x8]
        %v515 = vunpack.c.l.b16 %v513
        %v516 = vpack.c.b16 %v503, %v515
        %v517 = vpack.c.b16 %v504, %v504
        %v519 = vshrl.u32 %v505, 16
        %v521 = vrot.slane %v519, 4
        %v522 = vshll.u32 %v505, 16
        %v524 = vrot.slane %v522, 5
        %v525 = vor.u32 %v521, %v524
        %v526 = vld [vmem:[#allocation2 + $0xc] sm:$0x8]
        %v528 = vunpack.c.l.b16 %v526
        %v529 = vpack.c.b16 %v509, %v528
        %v530 = vpack.c.b16 %v510, %v510
        %v532 = vshrl.u32 %v511, 16
        %v534 = vrot.slane %v532, 4
        %v535 = vshll.u32 %v511, 16
        %v537 = vrot.slane %v535, 5
        %v538 = vor.u32 %v534, %v537
        %vm539 = vsmask.f32 4352
        %v541 = vshrl.u32 %v516, 16
        %v543 = vrot.slane %v541, 3
        %v544 = vshll.u32 %v516, 16
        %v546 = vrot.slane %v544, 4
        %v547 = vor.u32 %v543, %v546
        %v549 = vshrl.u32 %v517, 16
        %v551 = vrot.slane %v549, 3
        %v552 = vshll.u32 %v517, 16
        %v554 = vrot.slane %v552, 4
        %v555 = vor.u32 %v551, %v554
        %v556 = vsel %vm539, %v547, %v555
        %v558 = vshrl.u32 %v525, 16
        %v560 = vrot.slane %v558, 3
        %v561 = vshll.u32 %v525, 16
        %v563 = vrot.slane %v561, 4
        %v564 = vor.u32 %v560, %v563
        %v565 = vsel %vm539, %v564, %v564
        %v569 = vshrl.u32 %v529, 16
        %v571 = vrot.slane %v569, 3
        %v572 = vshll.u32 %v529, 16
        %v574 = vrot.slane %v572, 4
        %v575 = vor.u32 %v571, %v574
        %v577 = vshrl.u32 %v530, 16
        %v579 = vrot.slane %v577, 3
        %v580 = vshll.u32 %v530, 16
        %v582 = vrot.slane %v580, 4
        %v583 = vor.u32 %v579, %v582
        %v584 = vsel %vm539, %v575, %v583
        %v586 = vshrl.u32 %v538, 16
        %v588 = vrot.slane %v586, 3
        %v589 = vshll.u32 %v538, 16
        %v591 = vrot.slane %v589, 4
        %v592 = vor.u32 %v588, %v591
        %v593 = vsel %vm539, %v592, %v592
        %v596 = vld [vmem:[#allocation3] sm:$0xf]
        %v597 = vld [vmem:[#allocation3 + $0x4] sm:$0xf]
        %v598 = vld [vmem:[#allocation3 + $0x8] sm:$0xf]
        %v599 = vld [vmem:[#allocation3 + $0xc] sm:$0xf]
        %v600 = vld [vmem:[#allocation3 + $0x10] sm:$0xf]
        %v601 = vld [vmem:[#allocation3 + $0x14] sm:$0xf]
        %v602 = vld [vmem:[#allocation3 + $0x18] sm:$0xf]
        %v603 = vld [vmem:[#allocation3 + $0x1c] sm:$0xf]
        %v604 = vld [vmem:[#allocation3 + $0x20] sm:$0xf]
        %v605 = vld [vmem:[#allocation3 + $0x24] sm:$0xf]
        %v606 = vld [vmem:[#allocation3 + $0x28] sm:$0xf]
        %v607 = vld [vmem:[#allocation3 + $0x2c] sm:$0xf]
        %v608 = vld [vmem:[#allocation3 + $0x30] sm:$0xf]
        %v609 = vld [vmem:[#allocation3 + $0x34] sm:$0xf]
        %v610 = vld [vmem:[#allocation3 + $0x38] sm:$0xf]
        %v611 = vld [vmem:[#allocation3 + $0x3c] sm:$0xf]
        %v612 = vld [vmem:[#allocation3 + $0x40] sm:$0xf]
        %v613 = vld [vmem:[#allocation3 + $0x44] sm:$0xf]
        %v614 = vld [vmem:[#allocation3 + $0x48] sm:$0xf]
        %v615 = vld [vmem:[#allocation3 + $0x4c] sm:$0xf]
        %v616 = vld [vmem:[#allocation3 + $0x50] sm:$0xf]
        %v617 = vld [vmem:[#allocation3 + $0x54] sm:$0xf]
        %v618 = vld [vmem:[#allocation3 + $0x58] sm:$0xf]
        %v619 = vld [vmem:[#allocation3 + $0x5c] sm:$0xf]
        %v620 = vld [vmem:[#allocation3 + $0x60] sm:$0xf]
        %v621 = vld [vmem:[#allocation3 + $0x64] sm:$0xf]
        %v622 = vld [vmem:[#allocation3 + $0x68] sm:$0xf]
        %v623 = vld [vmem:[#allocation3 + $0x6c] sm:$0xf]
        %v624 = vld [vmem:[#allocation3 + $0x70] sm:$0xf]
        %v625 = vld [vmem:[#allocation3 + $0x74] sm:$0xf]
        %v626 = vld [vmem:[#allocation3 + $0x78] sm:$0xf]
        %v627 = vld [vmem:[#allocation3 + $0x7c] sm:$0xf]
        %v628 = vld [vmem:[%s2] sm:$0x1]
        %v630 = vlaneseq
        %v631 = vshrl.u32 %v630, 7
        %v632 = vsub.s32 0, %v631
        %v633 = vrot.slane %v628, %v632
        %v667 = vunpack.c.l.b16 %v596
        %v668 = vunpack.c.l.b16 %v597
        %v669 = vunpack.c.l.b16 %v598
        %v670 = vunpack.c.l.b16 %v599
        %v671 = vunpack.c.l.b16 %v600
        %v672 = vunpack.c.l.b16 %v601
        %v673 = vunpack.c.l.b16 %v602
        %v674 = vunpack.c.l.b16 %v603
        %v675 = vunpack.c.l.b16 %v604
        %v676 = vunpack.c.l.b16 %v605
        %v677 = vunpack.c.l.b16 %v606
        %v678 = vunpack.c.l.b16 %v607
        %v679 = vunpack.c.l.b16 %v608
        %v680 = vunpack.c.l.b16 %v609
        %v681 = vunpack.c.l.b16 %v610
        %v682 = vunpack.c.l.b16 %v611
        %v683 = vunpack.c.l.b16 %v612
        %v684 = vunpack.c.l.b16 %v613
        %v685 = vunpack.c.l.b16 %v614
        %v686 = vunpack.c.l.b16 %v615
        %v687 = vunpack.c.l.b16 %v616
        %v688 = vunpack.c.l.b16 %v617
        %v689 = vunpack.c.l.b16 %v618
        %v690 = vunpack.c.l.b16 %v619
        %v691 = vunpack.c.l.b16 %v620
        %v692 = vunpack.c.l.b16 %v621
        %v693 = vunpack.c.l.b16 %v622
        %v694 = vunpack.c.l.b16 %v623
        %v695 = vunpack.c.l.b16 %v624
        %v696 = vunpack.c.l.b16 %v625
        %v697 = vunpack.c.l.b16 %v626
        %v698 = vunpack.c.l.b16 %v627
        %v699 = vpack.c.b16 %v668, %v667
        %v700 = vpack.c.b16 %v670, %v669
        %v701 = vpack.c.b16 %v672, %v671
        %v702 = vpack.c.b16 %v674, %v673
        %v703 = vpack.c.b16 %v676, %v675
        %v704 = vpack.c.b16 %v678, %v677
        %v705 = vpack.c.b16 %v680, %v679
        %v706 = vpack.c.b16 %v682, %v681
        %v707 = vpack.c.b16 %v684, %v683
        %v708 = vpack.c.b16 %v686, %v685
        %v709 = vpack.c.b16 %v688, %v687
        %v710 = vpack.c.b16 %v690, %v689
        %v711 = vpack.c.b16 %v692, %v691
        %v712 = vpack.c.b16 %v694, %v693
        %v713 = vpack.c.b16 %v696, %v695
        %v714 = vpack.c.b16 %v698, %v697
        %731 = vmatprep.subr.bf16.mxu0 0
        %732 = vmatpush1.bf16.msra.mxu0 %v706
        %733 = vmatprep.subr.bf16.mxu0 0
        %734 = vmatpush1.bf16.msra.mxu0 %v705
        %735 = vmatprep.subr.bf16.mxu0 0
        %736 = vmatpush1.bf16.msra.mxu0 %v704
        %737 = vmatprep.subr.bf16.mxu0 0
        %738 = vmatpush1.bf16.msra.mxu0 %v703
        %739 = vmatprep.subr.bf16.mxu0 0
        %740 = vmatpush1.bf16.msra.mxu0 %v702
        %741 = vmatprep.subr.bf16.mxu0 0
        %742 = vmatpush1.bf16.msra.mxu0 %v701
        %743 = vmatprep.subr.bf16.mxu0 0
        %744 = vmatpush1.bf16.msra.mxu0 %v700
        %745 = vmatprep.subr.bf16.mxu0 0
        %746 = vmatpush1.bf16.msra.mxu0 %v699
        %747 = vmatprep.subr.bf16.mxu0 0
        %748 = vmatpush2.bf16.msra.mxu0 %v714
        %749 = vmatprep.subr.bf16.mxu0 0
        %750 = vmatpush2.bf16.msra.mxu0 %v713
        %751 = vmatprep.subr.bf16.mxu0 0
        %752 = vmatpush2.bf16.msra.mxu0 %v712
        %753 = vmatprep.subr.bf16.mxu0 0
        %754 = vmatpush2.bf16.msra.mxu0 %v711
        %755 = vmatprep.subr.bf16.mxu0 0
        %756 = vmatpush2.bf16.msra.mxu0 %v710
        %757 = vmatprep.subr.bf16.mxu0 0
        %758 = vmatpush2.bf16.msra.mxu0 %v709
        %759 = vmatprep.subr.bf16.mxu0 0
        %760 = vmatpush2.bf16.msra.mxu0 %v708
        %761 = vmatprep.subr.bf16.mxu0 0
        %762 = vmatpush2.bf16.msra.mxu0 %v707
        %763 = vmatprep.mubr.bf16.mxu0 %v565
        %764 = vmatmul.mubr.bf16.gmra.mxu0 %v556
        %v765 = vpop.f32.mrf.mxu0
        %v766 = vadd.f32 %v633, %v765
        %v767 = vpop.f32.mrf.mxu0
        %v768 = vpop.f32.mrf.mxu0
        %v769 = vadd.f32 %v633, %v768
        %v770 = vpop.f32.mrf.mxu0
        %771 = vmatprep.mubr.bf16.mxu0 %v593
        %772 = vmatmul.mubr.bf16.gmra.mxu0 %v584
        %v773 = vpop.f32.mrf.mxu0
        %v774 = vadd.f32 %v633, %v773
        %v775 = vpop.f32.mrf.mxu0
        %v776 = vpop.f32.mrf.mxu0
        %v777 = vadd.f32 %v633, %v776
        %v778 = vpop.f32.mrf.mxu0
        %779 = vdwg.mxu0
        %v780 = vmax.f32 %v766, 0.0
        %v781 = vmax.f32 %v769, 0.0
        %v782 = vmax.f32 %v774, 0.0
        %v783 = vmax.f32 %v777, 0.0
        %v784 = vpack.c.bf16 %v781, %v780
        %v785 = vpack.c.bf16 %v783, %v782
        %v787 = vunpack.c.l.b16 %v784
        %v788 = vunpack.c.h.b16 %v784
        %v789 = vpack.c.b16 %v787, %v787
        %v790 = vpack.c.b16 %v788, %v788
        %793 = vst [vmem:[#allocation2 + $0x4] sm:$0xf] %v789
        %794 = vst [vmem:[#allocation2 + $0x8] sm:$0xf] %v790
        %v796 = vunpack.c.l.b16 %v785
        %v797 = vunpack.c.h.b16 %v785
        %v798 = vpack.c.b16 %v796, %v796
        %v799 = vpack.c.b16 %v797, %v797
        %802 = vst [vmem:[#allocation2 + $0x10] sm:$0xf] %v798
        %803 = vst [vmem:[#allocation2 + $0x14] sm:$0xf] %v799
        %v804 = vld [vmem:[#allocation2] sm:$0x8]
        %v805 = vld [vmem:[#allocation2 + $0x4] sm:$0xf]
        %v806 = vld [vmem:[#allocation2 + $0x8] sm:$0xf]
        %v810 = vunpack.c.l.b16 %v804
        %v811 = vunpack.c.l.b16 %v805
        %v812 = vunpack.c.l.b16 %v806
        %v813 = vpack.c.b16 %v811, %v810
        %v814 = vpack.c.b16 %v812, %v812
        %v815 = vpack.c.b16 %v812, %v811
        %v817 = vshrl.u32 %v815, 16
        %v819 = vrot.slane %v817, 4
        %v820 = vshll.u32 %v815, 16
        %v822 = vrot.slane %v820, 5
        %v823 = vor.u32 %v819, %v822
        %v824 = vld [vmem:[#allocation2 + $0xc] sm:$0x8]
        %v825 = vld [vmem:[#allocation2 + $0x10] sm:$0xf]
        %v826 = vld [vmem:[#allocation2 + $0x14] sm:$0xf]
        %v830 = vunpack.c.l.b16 %v824
        %v831 = vunpack.c.l.b16 %v825
        %v832 = vunpack.c.l.b16 %v826
        %v833 = vpack.c.b16 %v831, %v830
        %v834 = vpack.c.b16 %v832, %v832
        %v835 = vpack.c.b16 %v832, %v831
        %v837 = vshrl.u32 %v835, 16
        %v839 = vrot.slane %v837, 4
        %v840 = vshll.u32 %v835, 16
        %v842 = vrot.slane %v840, 5
        %v843 = vor.u32 %v839, %v842
        %v845 = vshrl.u32 %v813, 16
        %v847 = vrot.slane %v845, 3
        %v848 = vshll.u32 %v813, 16
        %v850 = vrot.slane %v848, 4
        %v851 = vor.u32 %v847, %v850
        %v853 = vshrl.u32 %v814, 16
        %v855 = vrot.slane %v853, 3
        %v856 = vshll.u32 %v814, 16
        %v858 = vrot.slane %v856, 4
        %v859 = vor.u32 %v855, %v858
        %v860 = vsel %vm539, %v851, %v859
        %v862 = vshrl.u32 %v823, 16
        %v864 = vrot.slane %v862, 3
        %v865 = vshll.u32 %v823, 16
        %v867 = vrot.slane %v865, 4
        %v868 = vor.u32 %v864, %v867
        %v869 = vsel %vm539, %v868, %v868
        %v873 = vshrl.u32 %v833, 16
        %v875 = vrot.slane %v873, 3
        %v876 = vshll.u32 %v833, 16
        %v878 = vrot.slane %v876, 4
        %v879 = vor.u32 %v875, %v878
        %v881 = vshrl.u32 %v834, 16
        %v883 = vrot.slane %v881, 3
        %v884 = vshll.u32 %v834, 16
        %v886 = vrot.slane %v884, 4
        %v887 = vor.u32 %v883, %v886
        %v888 = vsel %vm539, %v879, %v887
        %v890 = vshrl.u32 %v843, 16
        %v892 = vrot.slane %v890, 3
        %v893 = vshll.u32 %v843, 16
        %v895 = vrot.slane %v893, 4
        %v896 = vor.u32 %v892, %v895
        %v897 = vsel %vm539, %v896, %v896
        %v900 = vld [vmem:[#allocation5] sm:$0xf]
        %v901 = vld [vmem:[#allocation5 + $0x4] sm:$0xf]
        %v902 = vld [vmem:[#allocation5 + $0x8] sm:$0xf]
        %v903 = vld [vmem:[#allocation5 + $0xc] sm:$0xf]
        %v904 = vld [vmem:[#allocation5 + $0x10] sm:$0xf]
        %v905 = vld [vmem:[#allocation5 + $0x14] sm:$0xf]
        %v906 = vld [vmem:[#allocation5 + $0x18] sm:$0xf]
        %v907 = vld [vmem:[#allocation5 + $0x1c] sm:$0xf]
        %v908 = vld [vmem:[#allocation5 + $0x20] sm:$0xf]
        %v909 = vld [vmem:[#allocation5 + $0x24] sm:$0xf]
        %v910 = vld [vmem:[#allocation5 + $0x28] sm:$0xf]
        %v911 = vld [vmem:[#allocation5 + $0x2c] sm:$0xf]
        %v912 = vld [vmem:[#allocation5 + $0x30] sm:$0xf]
        %v913 = vld [vmem:[#allocation5 + $0x34] sm:$0xf]
        %v914 = vld [vmem:[#allocation5 + $0x38] sm:$0xf]
        %v915 = vld [vmem:[#allocation5 + $0x3c] sm:$0xf]
        %v916 = vld [vmem:[#allocation5 + $0x40] sm:$0xf]
        %v917 = vld [vmem:[#allocation5 + $0x44] sm:$0xf]
        %v918 = vld [vmem:[#allocation5 + $0x48] sm:$0xf]
        %v919 = vld [vmem:[#allocation5 + $0x4c] sm:$0xf]
        %v920 = vld [vmem:[#allocation5 + $0x50] sm:$0xf]
        %v921 = vld [vmem:[#allocation5 + $0x54] sm:$0xf]
        %v922 = vld [vmem:[#allocation5 + $0x58] sm:$0xf]
        %v923 = vld [vmem:[#allocation5 + $0x5c] sm:$0xf]
        %v924 = vld [vmem:[#allocation5 + $0x60] sm:$0xf]
        %v925 = vld [vmem:[#allocation5 + $0x64] sm:$0xf]
        %v926 = vld [vmem:[#allocation5 + $0x68] sm:$0xf]
        %v927 = vld [vmem:[#allocation5 + $0x6c] sm:$0xf]
        %v928 = vld [vmem:[#allocation5 + $0x70] sm:$0xf]
        %v929 = vld [vmem:[#allocation5 + $0x74] sm:$0xf]
        %v930 = vld [vmem:[#allocation5 + $0x78] sm:$0xf]
        %v931 = vld [vmem:[#allocation5 + $0x7c] sm:$0xf]
        %v932 = vld [vmem:[%s4] sm:$0x1]
        %v934 = vlaneseq
        %v935 = vshrl.u32 %v934, 7
        %v936 = vsub.s32 0, %v935
        %v937 = vrot.slane %v932, %v936
        %v971 = vunpack.c.l.b16 %v900
        %v972 = vunpack.c.l.b16 %v901
        %v973 = vunpack.c.l.b16 %v902
        %v974 = vunpack.c.l.b16 %v903
        %v975 = vunpack.c.l.b16 %v904
        %v976 = vunpack.c.l.b16 %v905
        %v977 = vunpack.c.l.b16 %v906
        %v978 = vunpack.c.l.b16 %v907
        %v979 = vunpack.c.l.b16 %v908
        %v980 = vunpack.c.l.b16 %v909
        %v981 = vunpack.c.l.b16 %v910
        %v982 = vunpack.c.l.b16 %v911
        %v983 = vunpack.c.l.b16 %v912
        %v984 = vunpack.c.l.b16 %v913
        %v985 = vunpack.c.l.b16 %v914
        %v986 = vunpack.c.l.b16 %v915
        %v987 = vunpack.c.l.b16 %v916
        %v988 = vunpack.c.l.b16 %v917
        %v989 = vunpack.c.l.b16 %v918
        %v990 = vunpack.c.l.b16 %v919
        %v991 = vunpack.c.l.b16 %v920
        %v992 = vunpack.c.l.b16 %v921
        %v993 = vunpack.c.l.b16 %v922
        %v994 = vunpack.c.l.b16 %v923
        %v995 = vunpack.c.l.b16 %v924
        %v996 = vunpack.c.l.b16 %v925
        %v997 = vunpack.c.l.b16 %v926
        %v998 = vunpack.c.l.b16 %v927
        %v999 = vunpack.c.l.b16 %v928
        %v1000 = vunpack.c.l.b16 %v929
        %v1001 = vunpack.c.l.b16 %v930
        %v1002 = vunpack.c.l.b16 %v931
        %v1003 = vpack.c.b16 %v972, %v971
        %v1004 = vpack.c.b16 %v974, %v973
        %v1005 = vpack.c.b16 %v976, %v975
        %v1006 = vpack.c.b16 %v978, %v977
        %v1007 = vpack.c.b16 %v980, %v979
        %v1008 = vpack.c.b16 %v982, %v981
        %v1009 = vpack.c.b16 %v984, %v983
        %v1010 = vpack.c.b16 %v986, %v985
        %v1011 = vpack.c.b16 %v988, %v987
        %v1012 = vpack.c.b16 %v990, %v989
        %v1013 = vpack.c.b16 %v992, %v991
        %v1014 = vpack.c.b16 %v994, %v993
        %v1015 = vpack.c.b16 %v996, %v995
        %v1016 = vpack.c.b16 %v998, %v997
        %v1017 = vpack.c.b16 %v1000, %v999
        %v1018 = vpack.c.b16 %v1002, %v1001
        %1035 = vmatprep.subr.bf16.mxu0 0
        %1036 = vmatpush1.bf16.msra.mxu0 %v1010
        %1037 = vmatprep.subr.bf16.mxu0 0
        %1038 = vmatpush1.bf16.msra.mxu0 %v1009
        %1039 = vmatprep.subr.bf16.mxu0 0
        %1040 = vmatpush1.bf16.msra.mxu0 %v1008
        %1041 = vmatprep.subr.bf16.mxu0 0
        %1042 = vmatpush1.bf16.msra.mxu0 %v1007
        %1043 = vmatprep.subr.bf16.mxu0 0
        %1044 = vmatpush1.bf16.msra.mxu0 %v1006
        %1045 = vmatprep.subr.bf16.mxu0 0
        %1046 = vmatpush1.bf16.msra.mxu0 %v1005
        %1047 = vmatprep.subr.bf16.mxu0 0
        %1048 = vmatpush1.bf16.msra.mxu0 %v1004
        %1049 = vmatprep.subr.bf16.mxu0 0
        %1050 = vmatpush1.bf16.msra.mxu0 %v1003
        %1051 = vmatprep.subr.bf16.mxu0 0
        %1052 = vmatpush2.bf16.msra.mxu0 %v1018
        %1053 = vmatprep.subr.bf16.mxu0 0
        %1054 = vmatpush2.bf16.msra.mxu0 %v1017
        %1055 = vmatprep.subr.bf16.mxu0 0
        %1056 = vmatpush2.bf16.msra.mxu0 %v1016
        %1057 = vmatprep.subr.bf16.mxu0 0
        %1058 = vmatpush2.bf16.msra.mxu0 %v1015
        %1059 = vmatprep.subr.bf16.mxu0 0
        %1060 = vmatpush2.bf16.msra.mxu0 %v1014
        %1061 = vmatprep.subr.bf16.mxu0 0
        %1062 = vmatpush2.bf16.msra.mxu0 %v1013
        %1063 = vmatprep.subr.bf16.mxu0 0
        %1064 = vmatpush2.bf16.msra.mxu0 %v1012
        %1065 = vmatprep.subr.bf16.mxu0 0
        %1066 = vmatpush2.bf16.msra.mxu0 %v1011
        %1067 = vmatprep.mubr.bf16.mxu0 %v869
        %1068 = vmatmul.mubr.bf16.gmra.mxu0 %v860
        %v1069 = vpop.f32.mrf.mxu0
        %v1070 = vadd.f32 %v937, %v1069
        %v1071 = vpop.f32.mrf.mxu0
        %v1072 = vpop.f32.mrf.mxu0
        %v1073 = vadd.f32 %v937, %v1072
        %v1074 = vpop.f32.mrf.mxu0
        %1075 = vmatprep.mubr.bf16.mxu0 %v897
        %1076 = vmatmul.mubr.bf16.gmra.mxu0 %v888
        %v1077 = vpop.f32.mrf.mxu0
        %v1078 = vadd.f32 %v937, %v1077
        %v1079 = vpop.f32.mrf.mxu0
        %v1080 = vpop.f32.mrf.mxu0
        %v1081 = vadd.f32 %v937, %v1080
        %v1082 = vpop.f32.mrf.mxu0
        %1083 = vdwg.mxu0
        %v1084 = vmax.f32 %v1070, 0.0
        %v1085 = vmax.f32 %v1073, 0.0
        %v1086 = vmax.f32 %v1078, 0.0
        %v1087 = vmax.f32 %v1081, 0.0
        %v1088 = vld [vmem:[%s5] sm:$0xf]
        %v1089 = vld [vmem:[%s5 + $0x4] sm:$0xf]
        %v1090 = vld [vmem:[%s5 + $0x8] sm:$0xf]
        %v1091 = vld [vmem:[%s5 + $0xc] sm:$0xf]
        %v1092 = vld [vmem:[%s5 + $0x10] sm:$0xf]
        %v1093 = vld [vmem:[%s5 + $0x14] sm:$0xf]
        %v1094 = vld [vmem:[%s5 + $0x18] sm:$0xf]
        %v1095 = vld [vmem:[%s5 + $0x1c] sm:$0xf]
        %v1096 = vld [vmem:[%s5 + $0x20] sm:$0xf]
        %v1097 = vld [vmem:[%s5 + $0x24] sm:$0xf]
        %v1098 = vld [vmem:[%s5 + $0x28] sm:$0xf]
        %v1099 = vld [vmem:[%s5 + $0x2c] sm:$0xf]
        %v1100 = vld [vmem:[%s5 + $0x30] sm:$0xf]
        %v1101 = vld [vmem:[%s5 + $0x34] sm:$0xf]
        %v1102 = vld [vmem:[%s5 + $0x38] sm:$0xf]
        %v1103 = vld [vmem:[%s5 + $0x3c] sm:$0xf]
        %v1104 = vld [vmem:[%s6] sm:$0x1]
        %v1106 = vlaneseq
        %v1107 = vshrl.u32 %v1106, 7
        %v1108 = vsub.s32 0, %v1107
        %v1109 = vrot.slane %v1104, %v1108
        %v1127 = vunpack.c.l.b16 %v1088
        %v1128 = vunpack.c.l.b16 %v1089
        %v1129 = vunpack.c.l.b16 %v1090
        %v1130 = vunpack.c.l.b16 %v1091
        %v1131 = vunpack.c.l.b16 %v1092
        %v1132 = vunpack.c.l.b16 %v1093
        %v1133 = vunpack.c.l.b16 %v1094
        %v1134 = vunpack.c.l.b16 %v1095
        %v1135 = vunpack.c.l.b16 %v1096
        %v1136 = vunpack.c.l.b16 %v1097
        %v1137 = vunpack.c.l.b16 %v1098
        %v1138 = vunpack.c.l.b16 %v1099
        %v1139 = vunpack.c.l.b16 %v1100
        %v1140 = vunpack.c.l.b16 %v1101
        %v1141 = vunpack.c.l.b16 %v1102
        %v1142 = vunpack.c.l.b16 %v1103
        %v1143 = vpack.c.b16 %v1128, %v1127
        %v1144 = vpack.c.b16 %v1130, %v1129
        %v1145 = vpack.c.b16 %v1132, %v1131
        %v1146 = vpack.c.b16 %v1134, %v1133
        %v1147 = vpack.c.b16 %v1136, %v1135
        %v1148 = vpack.c.b16 %v1138, %v1137
        %v1149 = vpack.c.b16 %v1140, %v1139
        %v1150 = vpack.c.b16 %v1142, %v1141
        %1159 = vmatprep.subr.bf16.mxu0 0
        %1160 = vmatpush1.bf16.msra.mxu0 %v1150
        %1161 = vmatprep.subr.bf16.mxu0 0
        %1162 = vmatpush1.bf16.msra.mxu0 %v1149
        %1163 = vmatprep.subr.bf16.mxu0 0
        %1164 = vmatpush1.bf16.msra.mxu0 %v1148
        %1165 = vmatprep.subr.bf16.mxu0 0
        %1166 = vmatpush1.bf16.msra.mxu0 %v1147
        %1167 = vmatprep.subr.bf16.mxu0 0
        %1168 = vmatpush1.bf16.msra.mxu0 %v1146
        %1169 = vmatprep.subr.bf16.mxu0 0
        %1170 = vmatpush1.bf16.msra.mxu0 %v1145
        %1171 = vmatprep.subr.bf16.mxu0 0
        %1172 = vmatpush1.bf16.msra.mxu0 %v1144
        %1173 = vmatprep.subr.bf16.mxu0 0
        %1174 = vmatpush1.bf16.msra.mxu0 %v1143
        %1175 = vmatprep.subr.bf16.mxu0 0
        %1176 = vmatpush2.bf16.msra.mxu0 0
        %1177 = vmatprep.subr.bf16.mxu0 0
        %1178 = vmatpush2.bf16.msra.mxu0 0
        %1179 = vmatprep.subr.bf16.mxu0 0
        %1180 = vmatpush2.bf16.msra.mxu0 0
        %1181 = vmatprep.subr.bf16.mxu0 0
        %1182 = vmatpush2.bf16.msra.mxu0 0
        %1183 = vmatprep.subr.bf16.mxu0 0
        %1184 = vmatpush2.bf16.msra.mxu0 0
        %1185 = vmatprep.subr.bf16.mxu0 0
        %1186 = vmatpush2.bf16.msra.mxu0 0
        %1187 = vmatprep.subr.bf16.mxu0 0
        %1188 = vmatpush2.bf16.msra.mxu0 0
        %1189 = vmatprep.subr.bf16.mxu0 0
        %1190 = vmatpush2.bf16.msra.mxu0 0
        %1191 = vmatprep.mubr.bf16.mxu0 0
        %1192 = vmatmul.mubr.bf16.gmra.mxu0 %v505
        %v1193 = vpop.f32.mrf.mxu0
        %v1194 = vadd.f32 %v1109, %v1193
        %v1195 = vpop.f32.mrf.mxu0
        %v1196 = vpop.f32.mrf.mxu0
        %v1197 = vadd.f32 %v1109, %v1196
        %v1198 = vpop.f32.mrf.mxu0
        %1199 = vmatprep.mubr.bf16.mxu0 0
        %1200 = vmatmul.mubr.bf16.gmra.mxu0 %v511
        %v1201 = vpop.f32.mrf.mxu0
        %v1202 = vadd.f32 %v1109, %v1201
        %v1203 = vpop.f32.mrf.mxu0
        %v1204 = vpop.f32.mrf.mxu0
        %v1205 = vadd.f32 %v1109, %v1204
        %v1206 = vpop.f32.mrf.mxu0
        %1207 = vdwg.mxu0
        %v1208 = vadd.f32 %v1084, %v1194
        %v1209 = vadd.f32 %v1085, %v1197
        %v1210 = vadd.f32 %v1086, %v1202
        %v1211 = vadd.f32 %v1087, %v1205
        %v1212 = vmax.f32 %v1208, 0.0
        %v1213 = vmax.f32 %v1209, 0.0
        %v1214 = vmax.f32 %v1210, 0.0
        %v1215 = vmax.f32 %v1211, 0.0
        %v1216 = vpack.c.bf16 %v1213, %v1212
        %v1217 = vpack.c.bf16 %v1215, %v1214
        %v1219 = vunpack.c.l.b16 %v1216
        %v1220 = vunpack.c.h.b16 %v1216
        %v1221 = vpack.c.b16 %v1219, %v1219
        %v1222 = vpack.c.b16 %v1220, %v1220
        %1225 = vst [vmem:[#allocation2 + $0x4] sm:$0xf] %v1221
        %1226 = vst [vmem:[#allocation2 + $0x8] sm:$0xf] %v1222
        %v1228 = vunpack.c.l.b16 %v1217
        %v1229 = vunpack.c.h.b16 %v1217
        %v1230 = vpack.c.b16 %v1228, %v1228
        %v1231 = vpack.c.b16 %v1229, %v1229
        %1234 = vst [vmem:[#allocation2 + $0x10] sm:$0xf] %v1230
        %1235 = vst [vmem:[#allocation2 + $0x14] sm:$0xf] %v1231
        %v1236 = vld [vmem:[#allocation2 + $0x4] sm:$0xf]
        %v1237 = vld [vmem:[#allocation2 + $0x8] sm:$0xf]
        %v1238 = vld [vmem:[#allocation2 + $0x10] sm:$0xf]
        %v1239 = vld [vmem:[#allocation2 + $0x14] sm:$0xf]
        %v1242 = vunpack.c.l.b16 %v1236
        %v1243 = vunpack.c.l.b16 %v1237
        %v1244 = vpack.c.b16 %v1243, %v1242
        %v1248 = vunpack.c.l.b16 %v1238
        %v1249 = vunpack.c.l.b16 %v1239
        %v1250 = vpack.c.b16 %v1249, %v1248
        %v1252 = vld [vmem:[#allocation2] sm:$0x8]
        %v1253 = vld [vmem:[#allocation2 + $0x8] sm:$0x7]
        %v1256 = vunpack.c.l.b16 %v1252
        %v1257 = vunpack.c.l.b16 %v1253
        %v1258 = vpack.c.b16 %v1242, %v1256
        %v1259 = vpack.c.b16 %v1257, %v1257
        %v1260 = vrot.slane %v1244, 5
        %v1261 = vld [vmem:[#allocation2 + $0xc] sm:$0x8]
        %v1262 = vld [vmem:[#allocation2 + $0x14] sm:$0x7]
        %v1265 = vunpack.c.l.b16 %v1261
        %v1266 = vunpack.c.l.b16 %v1262
        %v1267 = vpack.c.b16 %v1248, %v1265
        %v1268 = vpack.c.b16 %v1266, %v1266
        %v1269 = vrot.slane %v1250, 5
        %vm1270 = vcmask 1044480
        %v1271 = vrot.slane %v1258, 3
        %v1272 = vrot.slane %v1259, 3
        %v1273 = vsel %vm1270, %v1271, %v1272
        %v1274 = vrot.slane %v1260, 3
        %v1275 = vsel %vm1270, %v1274, %v1274
        %v1278 = vrot.slane %v1267, 3
        %v1279 = vrot.slane %v1268, 3
        %v1280 = vsel %vm1270, %v1278, %v1279
        %v1281 = vrot.slane %v1269, 3
        %v1282 = vsel %vm1270, %v1281, %v1281
        %v1285 = vld [vmem:[#allocation7] sm:$0xf]
        %v1286 = vld [vmem:[#allocation7 + $0x4] sm:$0xf]
        %v1287 = vld [vmem:[#allocation7 + $0x8] sm:$0xf]
        %v1288 = vld [vmem:[#allocation7 + $0xc] sm:$0xf]
        %v1289 = vld [vmem:[#allocation7 + $0x10] sm:$0xf]
        %v1290 = vld [vmem:[#allocation7 + $0x14] sm:$0xf]
        %v1291 = vld [vmem:[#allocation7 + $0x18] sm:$0xf]
        %v1292 = vld [vmem:[#allocation7 + $0x1c] sm:$0xf]
        %v1293 = vld [vmem:[#allocation7 + $0x20] sm:$0xf]
        %v1294 = vld [vmem:[#allocation7 + $0x24] sm:$0xf]
        %v1295 = vld [vmem:[#allocation7 + $0x28] sm:$0xf]
        %v1296 = vld [vmem:[#allocation7 + $0x2c] sm:$0xf]
        %v1297 = vld [vmem:[#allocation7 + $0x30] sm:$0xf]
        %v1298 = vld [vmem:[#allocation7 + $0x34] sm:$0xf]
        %v1299 = vld [vmem:[#allocation7 + $0x38] sm:$0xf]
        %v1300 = vld [vmem:[#allocation7 + $0x3c] sm:$0xf]
        %v1301 = vld [vmem:[#allocation7 + $0x40] sm:$0xf]
        %v1302 = vld [vmem:[#allocation7 + $0x44] sm:$0xf]
        %v1303 = vld [vmem:[#allocation7 + $0x48] sm:$0xf]
        %v1304 = vld [vmem:[#allocation7 + $0x4c] sm:$0xf]
        %v1305 = vld [vmem:[#allocation7 + $0x50] sm:$0xf]
        %v1306 = vld [vmem:[#allocation7 + $0x54] sm:$0xf]
        %v1307 = vld [vmem:[#allocation7 + $0x58] sm:$0xf]
        %v1308 = vld [vmem:[#allocation7 + $0x5c] sm:$0xf]
        %v1309 = vld [vmem:[#allocation7 + $0x60] sm:$0xf]
        %v1310 = vld [vmem:[#allocation7 + $0x64] sm:$0xf]
        %v1311 = vld [vmem:[#allocation7 + $0x68] sm:$0xf]
        %v1312 = vld [vmem:[#allocation7 + $0x6c] sm:$0xf]
        %v1313 = vld [vmem:[#allocation7 + $0x70] sm:$0xf]
        %v1314 = vld [vmem:[#allocation7 + $0x74] sm:$0xf]
        %v1315 = vld [vmem:[#allocation7 + $0x78] sm:$0xf]
        %v1316 = vld [vmem:[#allocation7 + $0x7c] sm:$0xf]
        %v1317 = vld [vmem:[%s8] sm:$0x1]
        %v1319 = vlaneseq
        %v1320 = vshrl.u32 %v1319, 7
        %v1321 = vsub.s32 0, %v1320
        %v1322 = vrot.slane %v1317, %v1321
        %v1356 = vunpack.c.l.b16 %v1285
        %v1357 = vunpack.c.l.b16 %v1286
        %v1358 = vunpack.c.l.b16 %v1287
        %v1359 = vunpack.c.l.b16 %v1288
        %v1360 = vunpack.c.l.b16 %v1289
        %v1361 = vunpack.c.l.b16 %v1290
        %v1362 = vunpack.c.l.b16 %v1291
        %v1363 = vunpack.c.l.b16 %v1292
        %v1364 = vunpack.c.l.b16 %v1293
        %v1365 = vunpack.c.l.b16 %v1294
        %v1366 = vunpack.c.l.b16 %v1295
        %v1367 = vunpack.c.l.b16 %v1296
        %v1368 = vunpack.c.l.b16 %v1297
        %v1369 = vunpack.c.l.b16 %v1298
        %v1370 = vunpack.c.l.b16 %v1299
        %v1371 = vunpack.c.l.b16 %v1300
        %v1372 = vunpack.c.l.b16 %v1301
        %v1373 = vunpack.c.l.b16 %v1302
        %v1374 = vunpack.c.l.b16 %v1303
        %v1375 = vunpack.c.l.b16 %v1304
        %v1376 = vunpack.c.l.b16 %v1305
        %v1377 = vunpack.c.l.b16 %v1306
        %v1378 = vunpack.c.l.b16 %v1307
        %v1379 = vunpack.c.l.b16 %v1308
        %v1380 = vunpack.c.l.b16 %v1309
        %v1381 = vunpack.c.l.b16 %v1310
        %v1382 = vunpack.c.l.b16 %v1311
        %v1383 = vunpack.c.l.b16 %v1312
        %v1384 = vunpack.c.l.b16 %v1313
        %v1385 = vunpack.c.l.b16 %v1314
        %v1386 = vunpack.c.l.b16 %v1315
        %v1387 = vunpack.c.l.b16 %v1316
        %v1388 = vpack.c.b16 %v1357, %v1356
        %v1389 = vpack.c.b16 %v1359, %v1358
        %v1390 = vpack.c.b16 %v1361, %v1360
        %v1391 = vpack.c.b16 %v1363, %v1362
        %v1392 = vpack.c.b16 %v1365, %v1364
        %v1393 = vpack.c.b16 %v1367, %v1366
        %v1394 = vpack.c.b16 %v1369, %v1368
        %v1395 = vpack.c.b16 %v1371, %v1370
        %v1396 = vpack.c.b16 %v1373, %v1372
        %v1397 = vpack.c.b16 %v1375, %v1374
        %v1398 = vpack.c.b16 %v1377, %v1376
        %v1399 = vpack.c.b16 %v1379, %v1378
        %v1400 = vpack.c.b16 %v1381, %v1380
        %v1401 = vpack.c.b16 %v1383, %v1382
        %v1402 = vpack.c.b16 %v1385, %v1384
        %v1403 = vpack.c.b16 %v1387, %v1386
        %1420 = vmatprep.subr.bf16.mxu0 0
        %1421 = vmatpush1.bf16.msra.mxu0 %v1395
        %1422 = vmatprep.subr.bf16.mxu0 0
        %1423 = vmatpush1.bf16.msra.mxu0 %v1394
        %1424 = vmatprep.subr.bf16.mxu0 0
        %1425 = vmatpush1.bf16.msra.mxu0 %v1393
        %1426 = vmatprep.subr.bf16.mxu0 0
        %1427 = vmatpush1.bf16.msra.mxu0 %v1392
        %1428 = vmatprep.subr.bf16.mxu0 0
        %1429 = vmatpush1.bf16.msra.mxu0 %v1391
        %1430 = vmatprep.subr.bf16.mxu0 0
        %1431 = vmatpush1.bf16.msra.mxu0 %v1390
        %1432 = vmatprep.subr.bf16.mxu0 0
        %1433 = vmatpush1.bf16.msra.mxu0 %v1389
        %1434 = vmatprep.subr.bf16.mxu0 0
        %1435 = vmatpush1.bf16.msra.mxu0 %v1388
        %1436 = vmatprep.subr.bf16.mxu0 0
        %1437 = vmatpush2.bf16.msra.mxu0 %v1403
        %1438 = vmatprep.subr.bf16.mxu0 0
        %1439 = vmatpush2.bf16.msra.mxu0 %v1402
        %1440 = vmatprep.subr.bf16.mxu0 0
        %1441 = vmatpush2.bf16.msra.mxu0 %v1401
        %1442 = vmatprep.subr.bf16.mxu0 0
        %1443 = vmatpush2.bf16.msra.mxu0 %v1400
        %1444 = vmatprep.subr.bf16.mxu0 0
        %1445 = vmatpush2.bf16.msra.mxu0 %v1399
        %1446 = vmatprep.subr.bf16.mxu0 0
        %1447 = vmatpush2.bf16.msra.mxu0 %v1398
        %1448 = vmatprep.subr.bf16.mxu0 0
        %1449 = vmatpush2.bf16.msra.mxu0 %v1397
        %1450 = vmatprep.subr.bf16.mxu0 0
        %1451 = vmatpush2.bf16.msra.mxu0 %v1396
        %1452 = vmatprep.mubr.bf16.mxu0 %v1275
        %1453 = vmatmul.mubr.bf16.gmra.mxu0 %v1273
        %v1454 = vpop.f32.mrf.mxu0
        %v1455 = vadd.f32 %v1322, %v1454
        %v1456 = vpop.f32.mrf.mxu0
        %v1457 = vpop.f32.mrf.mxu0
        %v1458 = vadd.f32 %v1322, %v1457
        %v1459 = vpop.f32.mrf.mxu0
        %1460 = vmatprep.mubr.bf16.mxu0 %v1282
        %1461 = vmatmul.mubr.bf16.gmra.mxu0 %v1280
        %v1462 = vpop.f32.mrf.mxu0
        %v1463 = vadd.f32 %v1322, %v1462
        %v1464 = vpop.f32.mrf.mxu0
        %v1465 = vpop.f32.mrf.mxu0
        %v1466 = vadd.f32 %v1322, %v1465
        %v1467 = vpop.f32.mrf.mxu0
        %1468 = vdwg.mxu0
        %v1469 = vmax.f32 %v1455, 0.0
        %v1470 = vmax.f32 %v1458, 0.0
        %v1471 = vmax.f32 %v1463, 0.0
        %v1472 = vmax.f32 %v1466, 0.0
        %v1473 = vpack.c.bf16 %v1470, %v1469
        %v1474 = vpack.c.bf16 %v1472, %v1471
        %v1476 = vunpack.c.l.b16 %v1473
        %v1477 = vunpack.c.h.b16 %v1473
        %v1478 = vpack.c.b16 %v1476, %v1476
        %v1479 = vpack.c.b16 %v1477, %v1477
        %1482 = vst [vmem:[#allocation2 + $0x4] sm:$0xf] %v1478
        %1483 = vst [vmem:[#allocation2 + $0x8] sm:$0xf] %v1479
        %v1485 = vunpack.c.l.b16 %v1474
        %v1486 = vunpack.c.h.b16 %v1474
        %v1487 = vpack.c.b16 %v1485, %v1485
        %v1488 = vpack.c.b16 %v1486, %v1486
        %1491 = vst [vmem:[#allocation2 + $0x10] sm:$0xf] %v1487
        %1492 = vst [vmem:[#allocation2 + $0x14] sm:$0xf] %v1488
        %v1493 = vld [vmem:[#allocation2] sm:$0x8]
        %v1494 = vld [vmem:[#allocation2 + $0x4] sm:$0xf]
        %v1495 = vld [vmem:[#allocation2 + $0x8] sm:$0x7]
        %v1496 = vld [vmem:[#allocation2 + $0x8] sm:$0xf]
        %v1500 = vunpack.c.l.b16 %v1493
        %v1501 = vunpack.c.l.b16 %v1494
        %v1502 = vunpack.c.l.b16 %v1495
        %v1503 = vpack.c.b16 %v1501, %v1500
        %v1504 = vpack.c.b16 %v1502, %v1502
        %v1506 = vunpack.c.l.b16 %v1496
        %v1507 = vpack.c.b16 %v1506, %v1501
        %v1508 = vrot.slane %v1507, 5
        %v1509 = vld [vmem:[#allocation2 + $0xc] sm:$0x8]
        %v1510 = vld [vmem:[#allocation2 + $0x10] sm:$0xf]
        %v1511 = vld [vmem:[#allocation2 + $0x14] sm:$0x7]
        %v1512 = vld [vmem:[#allocation2 + $0x14] sm:$0xf]
        %v1516 = vunpack.c.l.b16 %v1509
        %v1517 = vunpack.c.l.b16 %v1510
        %v1518 = vunpack.c.l.b16 %v1511
        %v1519 = vpack.c.b16 %v1517, %v1516
        %v1520 = vpack.c.b16 %v1518, %v1518
        %v1522 = vunpack.c.l.b16 %v1512
        %v1523 = vpack.c.b16 %v1522, %v1517
        %v1524 = vrot.slane %v1523, 5
        %v1525 = vrot.slane %v1503, 3
        %v1526 = vrot.slane %v1504, 3
        %v1527 = vsel %vm1270, %v1525, %v1526
        %v1528 = vrot.slane %v1508, 3
        %v1529 = vsel %vm1270, %v1528, %v1528
        %v1532 = vrot.slane %v1519, 3
        %v1533 = vrot.slane %v1520, 3
        %v1534 = vsel %vm1270, %v1532, %v1533
        %v1535 = vrot.slane %v1524, 3
        %v1536 = vsel %vm1270, %v1535, %v1535
        %v1539 = vld [vmem:[#allocation8] sm:$0xf]
        %v1540 = vld [vmem:[#allocation8 + $0x4] sm:$0xf]
        %v1541 = vld [vmem:[#allocation8 + $0x8] sm:$0xf]
        %v1542 = vld [vmem:[#allocation8 + $0xc] sm:$0xf]
        %v1543 = vld [vmem:[#allocation8 + $0x10] sm:$0xf]
        %v1544 = vld [vmem:[#allocation8 + $0x14] sm:$0xf]
        %v1545 = vld [vmem:[#allocation8 + $0x18] sm:$0xf]
        %v1546 = vld [vmem:[#allocation8 + $0x1c] sm:$0xf]
        %v1547 = vld [vmem:[#allocation8 + $0x20] sm:$0xf]
        %v1548 = vld [vmem:[#allocation8 + $0x24] sm:$0xf]
        %v1549 = vld [vmem:[#allocation8 + $0x28] sm:$0xf]
        %v1550 = vld [vmem:[#allocation8 + $0x2c] sm:$0xf]
        %v1551 = vld [vmem:[#allocation8 + $0x30] sm:$0xf]
        %v1552 = vld [vmem:[#allocation8 + $0x34] sm:$0xf]
        %v1553 = vld [vmem:[#allocation8 + $0x38] sm:$0xf]
        %v1554 = vld [vmem:[#allocation8 + $0x3c] sm:$0xf]
        %v1555 = vld [vmem:[#allocation8 + $0x40] sm:$0xf]
        %v1556 = vld [vmem:[#allocation8 + $0x44] sm:$0xf]
        %v1557 = vld [vmem:[#allocation8 + $0x48] sm:$0xf]
        %v1558 = vld [vmem:[#allocation8 + $0x4c] sm:$0xf]
        %v1559 = vld [vmem:[#allocation8 + $0x50] sm:$0xf]
        %v1560 = vld [vmem:[#allocation8 + $0x54] sm:$0xf]
        %v1561 = vld [vmem:[#allocation8 + $0x58] sm:$0xf]
        %v1562 = vld [vmem:[#allocation8 + $0x5c] sm:$0xf]
        %v1563 = vld [vmem:[#allocation8 + $0x60] sm:$0xf]
        %v1564 = vld [vmem:[#allocation8 + $0x64] sm:$0xf]
        %v1565 = vld [vmem:[#allocation8 + $0x68] sm:$0xf]
        %v1566 = vld [vmem:[#allocation8 + $0x6c] sm:$0xf]
        %v1567 = vld [vmem:[#allocation8 + $0x70] sm:$0xf]
        %v1568 = vld [vmem:[#allocation8 + $0x74] sm:$0xf]
        %v1569 = vld [vmem:[#allocation8 + $0x78] sm:$0xf]
        %v1570 = vld [vmem:[#allocation8 + $0x7c] sm:$0xf]
        %v1571 = vld [vmem:[%s10] sm:$0x1]
        %v1573 = vlaneseq
        %v1574 = vshrl.u32 %v1573, 7
        %v1575 = vsub.s32 0, %v1574
        %v1576 = vrot.slane %v1571, %v1575
        %v1610 = vunpack.c.l.b16 %v1539
        %v1611 = vunpack.c.l.b16 %v1540
        %v1612 = vunpack.c.l.b16 %v1541
        %v1613 = vunpack.c.l.b16 %v1542
        %v1614 = vunpack.c.l.b16 %v1543
        %v1615 = vunpack.c.l.b16 %v1544
        %v1616 = vunpack.c.l.b16 %v1545
        %v1617 = vunpack.c.l.b16 %v1546
        %v1618 = vunpack.c.l.b16 %v1547
        %v1619 = vunpack.c.l.b16 %v1548
        %v1620 = vunpack.c.l.b16 %v1549
        %v1621 = vunpack.c.l.b16 %v1550
        %v1622 = vunpack.c.l.b16 %v1551
        %v1623 = vunpack.c.l.b16 %v1552
        %v1624 = vunpack.c.l.b16 %v1553
        %v1625 = vunpack.c.l.b16 %v1554
        %v1626 = vunpack.c.l.b16 %v1555
        %v1627 = vunpack.c.l.b16 %v1556
        %v1628 = vunpack.c.l.b16 %v1557
        %v1629 = vunpack.c.l.b16 %v1558
        %v1630 = vunpack.c.l.b16 %v1559
        %v1631 = vunpack.c.l.b16 %v1560
        %v1632 = vunpack.c.l.b16 %v1561
        %v1633 = vunpack.c.l.b16 %v1562
        %v1634 = vunpack.c.l.b16 %v1563
        %v1635 = vunpack.c.l.b16 %v1564
        %v1636 = vunpack.c.l.b16 %v1565
        %v1637 = vunpack.c.l.b16 %v1566
        %v1638 = vunpack.c.l.b16 %v1567
        %v1639 = vunpack.c.l.b16 %v1568
        %v1640 = vunpack.c.l.b16 %v1569
        %v1641 = vunpack.c.l.b16 %v1570
        %v1642 = vpack.c.b16 %v1611, %v1610
        %v1643 = vpack.c.b16 %v1613, %v1612
        %v1644 = vpack.c.b16 %v1615, %v1614
        %v1645 = vpack.c.b16 %v1617, %v1616
        %v1646 = vpack.c.b16 %v1619, %v1618
        %v1647 = vpack.c.b16 %v1621, %v1620
        %v1648 = vpack.c.b16 %v1623, %v1622
        %v1649 = vpack.c.b16 %v1625, %v1624
        %v1650 = vpack.c.b16 %v1627, %v1626
        %v1651 = vpack.c.b16 %v1629, %v1628
        %v1652 = vpack.c.b16 %v1631, %v1630
        %v1653 = vpack.c.b16 %v1633, %v1632
        %v1654 = vpack.c.b16 %v1635, %v1634
        %v1655 = vpack.c.b16 %v1637, %v1636
        %v1656 = vpack.c.b16 %v1639, %v1638
        %v1657 = vpack.c.b16 %v1641, %v1640
        %1674 = vmatprep.subr.bf16.mxu0 0
        %1675 = vmatpush1.bf16.msra.mxu0 %v1649
        %1676 = vmatprep.subr.bf16.mxu0 0
        %1677 = vmatpush1.bf16.msra.mxu0 %v1648
        %1678 = vmatprep.subr.bf16.mxu0 0
        %1679 = vmatpush1.bf16.msra.mxu0 %v1647
        %1680 = vmatprep.subr.bf16.mxu0 0
        %1681 = vmatpush1.bf16.msra.mxu0 %v1646
        %1682 = vmatprep.subr.bf16.mxu0 0
        %1683 = vmatpush1.bf16.msra.mxu0 %v1645
        %1684 = vmatprep.subr.bf16.mxu0 0
        %1685 = vmatpush1.bf16.msra.mxu0 %v1644
        %1686 = vmatprep.subr.bf16.mxu0 0
        %1687 = vmatpush1.bf16.msra.mxu0 %v1643
        %1688 = vmatprep.subr.bf16.mxu0 0
        %1689 = vmatpush1.bf16.msra.mxu0 %v1642
        %1690 = vmatprep.subr.bf16.mxu0 0
        %1691 = vmatpush2.bf16.msra.mxu0 %v1657
        %1692 = vmatprep.subr.bf16.mxu0 0
        %1693 = vmatpush2.bf16.msra.mxu0 %v1656
        %1694 = vmatprep.subr.bf16.mxu0 0
        %1695 = vmatpush2.bf16.msra.mxu0 %v1655
        %1696 = vmatprep.subr.bf16.mxu0 0
        %1697 = vmatpush2.bf16.msra.mxu0 %v1654
        %1698 = vmatprep.subr.bf16.mxu0 0
        %1699 = vmatpush2.bf16.msra.mxu0 %v1653
        %1700 = vmatprep.subr.bf16.mxu0 0
        %1701 = vmatpush2.bf16.msra.mxu0 %v1652
        %1702 = vmatprep.subr.bf16.mxu0 0
        %1703 = vmatpush2.bf16.msra.mxu0 %v1651
        %1704 = vmatprep.subr.bf16.mxu0 0
        %1705 = vmatpush2.bf16.msra.mxu0 %v1650
        %1706 = vmatprep.mubr.bf16.mxu0 %v1529
        %1707 = vmatmul.mubr.bf16.gmra.mxu0 %v1527
        %v1708 = vpop.f32.mrf.mxu0
        %v1709 = vadd.f32 %v1576, %v1708
        %v1710 = vpop.f32.mrf.mxu0
        %v1711 = vpop.f32.mrf.mxu0
        %v1712 = vadd.f32 %v1576, %v1711
        %v1713 = vpop.f32.mrf.mxu0
        %1714 = vmatprep.mubr.bf16.mxu0 %v1536
        %1715 = vmatmul.mubr.bf16.gmra.mxu0 %v1534
        %v1716 = vpop.f32.mrf.mxu0
        %v1717 = vadd.f32 %v1576, %v1716
        %v1718 = vpop.f32.mrf.mxu0
        %v1719 = vpop.f32.mrf.mxu0
        %v1720 = vadd.f32 %v1576, %v1719
        %v1721 = vpop.f32.mrf.mxu0
        %1722 = vdwg.mxu0
        %v1723 = vmax.f32 %v1709, 0.0
        %v1724 = vmax.f32 %v1712, 0.0
        %v1725 = vmax.f32 %v1717, 0.0
        %v1726 = vmax.f32 %v1720, 0.0
        %v1727 = vunpack.c.l.bf16 %v1244
        %v1728 = vunpack.c.h.bf16 %v1244
        %v1729 = vunpack.c.l.bf16 %v1250
        %v1730 = vunpack.c.h.bf16 %v1250
        %v1731 = vadd.f32 %v1723, %v1727
        %v1732 = vadd.f32 %v1724, %v1728
        %v1733 = vadd.f32 %v1725, %v1729
        %v1734 = vadd.f32 %v1726, %v1730
        %v1735 = vmax.f32 %v1731, 0.0
        %v1736 = vmax.f32 %v1732, 0.0
        %v1737 = vmax.f32 %v1733, 0.0
        %v1738 = vmax.f32 %v1734, 0.0
        %1739 = vst [vmem:[%s452] sm:$0xff] %v1735
        %1740 = vst [vmem:[%s452 + $0x8] sm:$0xff] %v1736
        %s1741 = scalar_lea.vmem %s452, 16
        %1742 = vst [vmem:[%s1741] sm:$0xff] %v1737
        %1743 = vst [vmem:[%s1741 + $0x8] sm:$0xff] %v1738
        %s1744 = smul.u32 2, %s25
        %p1745 = scmp.lt.s32.totalorder %s1744, 3
        %s1746 = scalar_select %p1745, %s1744, 3
        %s1747 = smul.addr %s1746, 2
        %s1748 = smul.addr %s1747, 8
        %s1749 = scalar_lea.vmem %s11, %s1748
        // Predicated region
        $region81: #{taconvnet_forward.1} parent=63 // pred_check
          %p1750 = pneg %p279
        $region82: #{taconvnet_forward.1} parent=63 // pred_check_branch
          %1752 = sbr.rel (%p1750) target = $region84
        $region83: #{taconvnet_forward.1} parent=63 // pred_region
          %s1753 = smul.u32 2, %s25
        $region84: #{taconvnet_forward.1} parent=63 // pred_fallthru
          _
      $region64: #{taconvnet_forward.1} parent=5 // pred_fallthru
        _
      %p1754 = scmp.le.s32.totalorder 2, %s20
      // Predicated region
      $region85: #{taconvnet_forward.1} parent=5 // pred_check
        %p1755 = pneg %p1754
      $region86: #{taconvnet_forward.1} parent=5 // pred_check_branch
        %1757 = sbr.rel (%p1755) target = $region88
      $region87: #{taconvnet_forward.1} parent=5 // pred_region
        %s1758 = ssub.s32 %s20, 2
        // Predicated region
        $region89: #{taconvnet_forward.1} parent=87 // pred_check
          %p1759 = pneg %p285
        $region90: #{taconvnet_forward.1} parent=87 // pred_check_branch
          %1761 = sbr.rel (%p1759) target = $region92
        $region91: #{taconvnet_forward.1} parent=87 // pred_region
          %s1762 = smul.u32 2, %s26
          %p1763 = scmp.lt.s32.totalorder %s1762, 3
          %s1764 = scalar_select %p1763, %s1762, 3
          %s1765 = smul.addr %s1764, 2
          %s1766 = smul.addr %s1765, 8
          %s1767 = scalar_lea.vmem %s11, %s1766
        $region92: #{taconvnet_forward.1} parent=87 // pred_fallthru
          _
      $region88: #{taconvnet_forward.1} parent=5 // pred_fallthru
        _
    $region6: #{taconvnet_forward.1} parent=1 // loop_footer
      %s24 = sadd.s32 1, %s20
    $region7: #{taconvnet_forward.1} parent=1 // loop_footer_branch
      %19 = sbr.rel target = $region3
    $region8: #{taconvnet_forward.1} parent=1 // loop_exit
      _
    %1768 = vsyncpa [#allocation4], 1
    %s1769 = scalar_lea.sflag [#allocation4], 1
    %1770 = vsyncpa %s1769, 1
    %1771 = vsyncpa [#allocation6], 1
    %1772 = vsyncpa [#allocation9], 1

// kernel: taconvnet_forward.1
$region0: #{taconvnet_forward.1}
  #allocation0 [shape = 'u32[]', space=smem, size = 0x4, offset = 0x4, fixed_abs, tag = 'smem constant byte address 0x4 - core index']
  #allocation1 [shape = 'u32[144,128]{1,0:T(1,128)}', space=vmem, size = 0x12000, scoped, tag = 'internal scratch']
  #allocation2 [shape = 'bf16[48,128]{1,0:T(8,128)(2,1)}', space=vmem, size = 0x3000, scoped, tag = 'scratch operand']
  %s0 = inlined_call_operand.vmem [shape: f32[4,16,4], index: 0, kind: input, shape index: {}]
  %s1 = inlined_call_operand.hbm [shape: bf16[256,128], index: 1, kind: input, shape index: {}]
  %s2 = inlined_call_operand.vmem [shape: f32[1,128], index: 2, kind: input, shape index: {}]
  %s3 = inlined_call_operand.hbm [shape: bf16[256,128], index: 3, kind: input, shape index: {}]
  %s4 = inlined_call_operand.vmem [shape: f32[1,128], index: 4, kind: input, shape index: {}]
  %s5 = inlined_call_operand.vmem [shape: bf16[128,128], index: 5, kind: input, shape index: {}]
  %s6 = inlined_call_operand.vmem [shape: f32[1,128], index: 6, kind: input, shape index: {}]
  %s7 = inlined_call_operand.hbm [shape: bf16[256,128], index: 7, kind: input, shape index: {}]
  %s8 = inlined_call_operand.vmem [shape: f32[1,128], index: 8, kind: input, shape index: {}]
  %s9 = inlined_call_operand.hbm [shape: bf16[256,128], index: 9, kind: input, shape index: {}]
  %s10 = inlined_call_operand.vmem [shape: f32[1,128], index: 10, kind: input, shape index: {}]
  %s11 = inlined_call_operand.vmem [shape: f32[4,16,128], index: 11, kind: output, shape index: {}]
  %s12 = sld [smem:[#allocation0]]
  $region93: #{taconvnet_forward.1} parent=0
    _
  %s14 = ssub.s32 1, %s12
  %s15 = scalar_select 0, %s14, %s12
  $region1: #{taconvnet_forward.1} parent=0
    #allocation3 [shape = 'u8[65536]{0}', space=vmem, size = 0x10000, scoped, tag = 'input window, operand 1, single buffered']
    #allocation4 [shape = 's32[2]{0}', space=sflag, size = 0x8, scoped, tag = 'scoped memory for taconvnet_forward.1']
    #allocation5 [shape = 'u8[65536]{0}', space=vmem, size = 0x10000, scoped, tag = 'input window, operand 3, single buffered']
    #allocation6 [shape = 's32[1]{0}', space=sflag, size = 0x4, scoped, tag = 'scoped memory for taconvnet_forward.1']
    #allocation7 [shape = 'u8[65536]{0}', space=vmem, size = 0x10000, scoped, tag = 'input window, operand 7, single buffered']
    #allocation8 [shape = 'u8[65536]{0}', space=vmem, size = 0x10000, scoped, tag = 'input window, operand 9, single buffered']
    #allocation9 [shape = 's32[1]{0}', space=sflag, size = 0x4, scoped, tag = 'scoped memory for taconvnet_forward.1']
    %16 = vsyncpa [#allocation4], 0
    %17 = vsyncpa [#allocation6], 0
    %18 = vsyncpa [#allocation9], 0
    loop: start=0, step=1, limit=4
    $region2: #{taconvnet_forward.1} parent=1 // loop_pre_header
      _
    $region3: #{taconvnet_forward.1} parent=1 // loop_header
      %s20 = sphi 0, %s24
      %p21 = scmp.ge.s32.totalorder %s20, 4
      %s30 = sphi 0, %s32
      %s33 = sphi 0, %s30
      %s34 = sphi 0, %s33
      %s50 = sphi 0, %s34
      %s54 = sphi 0, %s54
      %s56 = sphi 0, %s54
      %s57 = sphi 0, %s56
      %s71 = sphi 0, %s57
      %s75 = sphi 0, %s75
      %s77 = sphi 0, %s75
      %s78 = sphi 0, %s77
      %s92 = sphi 0, %s78
      %s96 = sphi 0, %s96
      %s98 = sphi 0, %s96
      %s99 = sphi 0, %s98
      %s113 = sphi 0, %s99
      %s117 = sphi 0, %s117
      %s119 = sphi 0, %s117
      %s120 = sphi 0, %s119
      %s134 = sphi 0, %s120
      %s138 = sphi 0, %s138
      %s140 = sphi 0, %s138
      %s141 = sphi 0, %s140
      %s155 = sphi 0, %s141
      %s159 = sphi 0, %s159
      %s161 = sphi 0, %s159
      %s162 = sphi 0, %s161
      %s176 = sphi 0, %s162
      %s180 = sphi 0, %s180
      %s182 = sphi 0, %s180
      %s183 = sphi 0, %s182
      %s197 = sphi 0, %s183
      %s201 = sphi 0, %s201
      %s203 = sphi 0, %s201
      %s204 = sphi 0, %s203
      %s218 = sphi 0, %s204
      %s222 = sphi 0, %s222
      %s224 = sphi 0, %s222
      %s225 = sphi 0, %s224
      %s239 = sphi 0, %s225
      %s243 = sphi 0, %s243
      %s245 = sphi 0, %s243
      %s246 = sphi 0, %s245
      %s260 = sphi 0, %s246
      %s266 = sphi 0, %s268
      %s269 = sphi 0, %s266
      %s270 = sphi 0, %s269
      %s286 = sphi 0, %s270
    $region4: #{taconvnet_forward.1} parent=1 // loop_header_branch
      %23 = sbr.rel (%p21) target = $region8
    $region5: #{taconvnet_forward.1} parent=1 // loop_body
      %s25 = ssub.s32 %s20, 1
      %s26 = ssub.s32 %s20, 2
      %s27 = sadd.s32 %s20, 1
      %s28 = ssub.s32 %s20, %s27
      %p29 = scmp.eq.s32.totalorder %s28, 0
      %s31 = sadd.s32 %s30, 1
      %s32 = scalar_select %p29, %s30, %s31
      %p35 = pneg %p29
      %p36 = scmp.eq.s32.totalorder %s20, 1
      %p37 = por %p35, %p36
      %p38 = scmp.ne.s32.totalorder %s30, %s33
      %p39 = scmp.eq.s32.totalorder %s20, 0
      %p40 = por %p38, %p39
      %p41 = scmp.ne.s32.totalorder %s30, %s33
      %p42 = scmp.eq.s32.totalorder %s25, 1
      %p43 = por %p41, %p42
      %p44 = scmp.ne.s32.totalorder %s33, %s34
      %p45 = scmp.eq.s32.totalorder %s25, 0
      %p46 = por %p44, %p45
      %p47 = scmp.ne.s32.totalorder %s33, %s34
      %p48 = scmp.eq.s32.totalorder %s26, 1
      %p49 = por %p47, %p48
      %p51 = scmp.ne.s32.totalorder %s34, %s50
      %p52 = scmp.eq.s32.totalorder %s26, 0
      %p53 = por %p51, %p52
      %s55 = sadd.s32 %s54, 1
      %p58 = scmp.eq.s32.totalorder %s20, 1
      %p59 = scmp.ne.s32.totalorder %s54, %s56
      %p60 = scmp.eq.s32.totalorder %s20, 0
      %p61 = por %p59, %p60
      %p62 = scmp.ne.s32.totalorder %s54, %s56
      %p63 = scmp.eq.s32.totalorder %s25, 1
      %p64 = por %p62, %p63
      %p65 = scmp.ne.s32.totalorder %s56, %s57
      %p66 = scmp.eq.s32.totalorder %s25, 0
      %p67 = por %p65, %p66
      %p68 = scmp.ne.s32.totalorder %s56, %s57
      %p69 = scmp.eq.s32.totalorder %s26, 1
      %p70 = por %p68, %p69
      %p72 = scmp.ne.s32.totalorder %s57, %s71
      %p73 = scmp.eq.s32.totalorder %s26, 0
      %p74 = por %p72, %p73
      %s76 = sadd.s32 %s75, 1
      %p79 = scmp.eq.s32.totalorder %s20, 1
      %p80 = scmp.ne.s32.totalorder %s75, %s77
      %p81 = scmp.eq.s32.totalorder %s20, 0
      %p82 = por %p80, %p81
      %p83 = scmp.ne.s32.totalorder %s75, %s77
      %p84 = scmp.eq.s32.totalorder %s25, 1
      %p85 = por %p83, %p84
      %p86 = scmp.ne.s32.totalorder %s77, %s78
      %p87 = scmp.eq.s32.totalorder %s25, 0
      %p88 = por %p86, %p87
      %p89 = scmp.ne.s32.totalorder %s77, %s78
      %p90 = scmp.eq.s32.totalorder %s26, 1
      %p91 = por %p89, %p90
      %p93 = scmp.ne.s32.totalorder %s78, %s92
      %p94 = scmp.eq.s32.totalorder %s26, 0
      %p95 = por %p93, %p94
      %s97 = sadd.s32 %s96, 1
      %p100 = scmp.eq.s32.totalorder %s20, 1
      %p101 = scmp.ne.s32.totalorder %s96, %s98
      %p102 = scmp.eq.s32.totalorder %s20, 0
      %p103 = por %p101, %p102
      %p104 = scmp.ne.s32.totalorder %s96, %s98
      %p105 = scmp.eq.s32.totalorder %s25, 1
      %p106 = por %p104, %p105
      %p107 = scmp.ne.s32.totalorder %s98, %s99
      %p108 = scmp.eq.s32.totalorder %s25, 0
      %p109 = por %p107, %p108
      %p110 = scmp.ne.s32.totalorder %s98, %s99
      %p111 = scmp.eq.s32.totalorder %s26, 1
      %p112 = por %p110, %p111
      %p114 = scmp.ne.s32.totalorder %s99, %s113
      %p115 = scmp.eq.s32.totalorder %s26, 0
      %p116 = por %p114, %p115
      %s118 = sadd.s32 %s117, 1
      %p121 = scmp.eq.s32.totalorder %s20, 1
      %p122 = scmp.ne.s32.totalorder %s117, %s119
      %p123 = scmp.eq.s32.totalorder %s20, 0
      %p124 = por %p122, %p123
      %p125 = scmp.ne.s32.totalorder %s117, %s119
      %p126 = scmp.eq.s32.totalorder %s25, 1
      %p127 = por %p125, %p126
      %p128 = scmp.ne.s32.totalorder %s119, %s120
      %p129 = scmp.eq.s32.totalorder %s25, 0
      %p130 = por %p128, %p129
      %p131 = scmp.ne.s32.totalorder %s119, %s120
      %p132 = scmp.eq.s32.totalorder %s26, 1
      %p133 = por %p131, %p132
      %p135 = scmp.ne.s32.totalorder %s120, %s134
      %p136 = scmp.eq.s32.totalorder %s26, 0
      %p137 = por %p135, %p136
      %s139 = sadd.s32 %s138, 1
      %p142 = scmp.eq.s32.totalorder %s20, 1
      %p143 = scmp.ne.s32.totalorder %s138, %s140
      %p144 = scmp.eq.s32.totalorder %s20, 0
      %p145 = por %p143, %p144
      %p146 = scmp.ne.s32.totalorder %s138, %s140
      %p147 = scmp.eq.s32.totalorder %s25, 1
      %p148 = por %p146, %p147
      %p149 = scmp.ne.s32.totalorder %s140, %s141
      %p150 = scmp.eq.s32.totalorder %s25, 0
      %p151 = por %p149, %p150
      %p152 = scmp.ne.s32.totalorder %s140, %s141
      %p153 = scmp.eq.s32.totalorder %s26, 1
      %p154 = por %p152, %p153
      %p156 = scmp.ne.s32.totalorder %s141, %s155
      %p157 = scmp.eq.s32.totalorder %s26, 0
      %p158 = por %p156, %p157
      %s160 = sadd.s32 %s159, 1
      %p163 = scmp.eq.s32.totalorder %s20, 1
      %p164 = scmp.ne.s32.totalorder %s159, %s161
      %p165 = scmp.eq.s32.totalorder %s20, 0
      %p166 = por %p164, %p165
      %p167 = scmp.ne.s32.totalorder %s159, %s161
      %p168 = scmp.eq.s32.totalorder %s25, 1
      %p169 = por %p167, %p168
      %p170 = scmp.ne.s32.totalorder %s161, %s162
      %p171 = scmp.eq.s32.totalorder %s25, 0
      %p172 = por %p170, %p171
      %p173 = scmp.ne.s32.totalorder %s161, %s162
      %p174 = scmp.eq.s32.totalorder %s26, 1
      %p175 = por %p173, %p174
      %p177 = scmp.ne.s32.totalorder %s162, %s176
      %p178 = scmp.eq.s32.totalorder %s26, 0
      %p179 = por %p177, %p178
      %s181 = sadd.s32 %s180, 1
      %p184 = scmp.eq.s32.totalorder %s20, 1
      %p185 = scmp.ne.s32.totalorder %s180, %s182
      %p186 = scmp.eq.s32.totalorder %s20, 0
      %p187 = por %p185, %p186
      %p188 = scmp.ne.s32.totalorder %s180, %s182
      %p189 = scmp.eq.s32.totalorder %s25, 1
      %p190 = por %p188, %p189
      %p191 = scmp.ne.s32.totalorder %s182, %s183
      %p192 = scmp.eq.s32.totalorder %s25, 0
      %p193 = por %p191, %p192
      %p194 = scmp.ne.s32.totalorder %s182, %s183
      %p195 = scmp.eq.s32.totalorder %s26, 1
      %p196 = por %p194, %p195
      %p198 = scmp.ne.s32.totalorder %s183, %s197
      %p199 = scmp.eq.s32.totalorder %s26, 0
      %p200 = por %p198, %p199
      %s202 = sadd.s32 %s201, 1
      %p205 = scmp.eq.s32.totalorder %s20, 1
      %p206 = scmp.ne.s32.totalorder %s201, %s203
      %p207 = scmp.eq.s32.totalorder %s20, 0
      %p208 = por %p206, %p207
      %p209 = scmp.ne.s32.totalorder %s201, %s203
      %p210 = scmp.eq.s32.totalorder %s25, 1
      %p211 = por %p209, %p210
      %p212 = scmp.ne.s32.totalorder %s203, %s204
      %p213 = scmp.eq.s32.totalorder %s25, 0
      %p214 = por %p212, %p213
      %p215 = scmp.ne.s32.totalorder %s203, %s204
      %p216 = scmp.eq.s32.totalorder %s26, 1
      %p217 = por %p215, %p216
      %p219 = scmp.ne.s32.totalorder %s204, %s218
      %p220 = scmp.eq.s32.totalorder %s26, 0
      %p221 = por %p219, %p220
      %s223 = sadd.s32 %s222, 1
      %p226 = scmp.eq.s32.totalorder %s20, 1
      %p227 = scmp.ne.s32.totalorder %s222, %s224
      %p228 = scmp.eq.s32.totalorder %s20, 0
      %p229 = por %p227, %p228
      %p230 = scmp.ne.s32.totalorder %s222, %s224
      %p231 = scmp.eq.s32.totalorder %s25, 1
      %p232 = por %p230, %p231
      %p233 = scmp.ne.s32.totalorder %s224, %s225
      %p234 = scmp.eq.s32.totalorder %s25, 0
      %p235 = por %p233, %p234
      %p236 = scmp.ne.s32.totalorder %s224, %s225
      %p237 = scmp.eq.s32.totalorder %s26, 1
      %p238 = por %p236, %p237
      %p240 = scmp.ne.s32.totalorder %s225, %s239
      %p241 = scmp.eq.s32.totalorder %s26, 0
      %p242 = por %p240, %p241
      %s244 = sadd.s32 %s243, 1
      %p247 = scmp.eq.s32.totalorder %s20, 1
      %p248 = scmp.ne.s32.totalorder %s243, %s245
      %p249 = scmp.eq.s32.totalorder %s20, 0
      %p250 = por %p248, %p249
      %p251 = scmp.ne.s32.totalorder %s243, %s245
      %p252 = scmp.eq.s32.totalorder %s25, 1
      %p253 = por %p251, %p252
      %p254 = scmp.ne.s32.totalorder %s245, %s246
      %p255 = scmp.eq.s32.totalorder %s25, 0
      %p256 = por %p254, %p255
      %p257 = scmp.ne.s32.totalorder %s245, %s246
      %p258 = scmp.eq.s32.totalorder %s26, 1
      %p259 = por %p257, %p258
      %p261 = scmp.ne.s32.totalorder %s246, %s260
      %p262 = scmp.eq.s32.totalorder %s26, 0
      %p263 = por %p261, %p262
      %s264 = ssub.s32 %s20, %s27
      %p265 = scmp.eq.s32.totalorder %s264, 0
      %s267 = sadd.s32 %s266, 1
      %s268 = scalar_select %p265, %s266, %s267
      %p271 = pneg %p265
      %p272 = scmp.eq.s32.totalorder %s20, 1
      %p273 = por %p271, %p272
      %p274 = scmp.ne.s32.totalorder %s266, %s269
      %p275 = scmp.eq.s32.totalorder %s20, 0
      %p276 = por %p274, %p275
      %p277 = scmp.ne.s32.totalorder %s266, %s269
      %p278 = scmp.eq.s32.totalorder %s25, 1
      %p279 = por %p277, %p278
      %p280 = scmp.ne.s32.totalorder %s269, %s270
      %p281 = scmp.eq.s32.totalorder %s25, 0
      %p282 = por %p280, %p281
      %p283 = scmp.ne.s32.totalorder %s269, %s270
      %p284 = scmp.eq.s32.totalorder %s26, 1
      %p285 = por %p283, %p284
      %p287 = scmp.ne.s32.totalorder %s270, %s286
      %p288 = scmp.eq.s32.totalorder %s26, 0
      %p289 = por %p287, %p288
      %p290 = scmp.le.s32.totalorder 1, %s20
      %p291 = scmp.lt.s32.totalorder %s20, 3
      %p292 = pnand %p290, %p291
      %p293 = pneg %p292
      // Predicated region
      $region9: #{taconvnet_forward.1} parent=5 // pred_check
        _
      $region10: #{taconvnet_forward.1} parent=5 // pred_check_branch
        %295 = sbr.rel (%p292) target = $region12
      $region11: #{taconvnet_forward.1} parent=5 // pred_region
        %s296 = ssub.s32 %s20, 1
        // Predicated region
        $region13: #{taconvnet_forward.1} parent=11 // pred_check
          %p297 = pneg %p67
        $region14: #{taconvnet_forward.1} parent=11 // pred_check_branch
          %299 = sbr.rel (%p297) target = $region16
        $region15: #{taconvnet_forward.1} parent=11 // pred_region
          %s301 = ssub.s32 2048, 2048
          %302 = vsyncadd [#allocation4], %s301
          %s303 = sshll.u32 [#allocation3], 4
          %s304 = int_to_ptr.vmem [resolvable:$true] %s303
          %309 = dma.hbm_to_vmem [thread:$0]  %s1, 2048, %s304, [#allocation4], 64, 64, 4
        $region16: #{taconvnet_forward.1} parent=11 // pred_fallthru
          _
        // Predicated region
        $region17: #{taconvnet_forward.1} parent=11 // pred_check
          %p310 = pneg %p88
        $region18: #{taconvnet_forward.1} parent=11 // pred_check_branch
          %312 = sbr.rel (%p310) target = $region20
        $region19: #{taconvnet_forward.1} parent=11 // pred_region
          _
        $region20: #{taconvnet_forward.1} parent=11 // pred_fallthru
          _
        // Predicated region
        $region21: #{taconvnet_forward.1} parent=11 // pred_check
          %p313 = pneg %p109
        $region22: #{taconvnet_forward.1} parent=11 // pred_check_branch
          %315 = sbr.rel (%p313) target = $region24
        $region23: #{taconvnet_forward.1} parent=11 // pred_region
          %s317 = ssub.s32 2048, 2048
          %318 = vsyncadd [#allocation6], %s317
          %s319 = sshll.u32 [#allocation5], 4
          %s320 = int_to_ptr.vmem [resolvable:$true] %s319
          %325 = dma.hbm_to_vmem [thread:$0]  %s3, 2048, %s320, [#allocation6], 64, 64, 4
        $region24: #{taconvnet_forward.1} parent=11 // pred_fallthru
          _
        // Predicated region
        $region25: #{taconvnet_forward.1} parent=11 // pred_check
          %p326 = pneg %p130
        $region26: #{taconvnet_forward.1} parent=11 // pred_check_branch
          %328 = sbr.rel (%p326) target = $region28
        $region27: #{taconvnet_forward.1} parent=11 // pred_region
          _
        $region28: #{taconvnet_forward.1} parent=11 // pred_fallthru
          _
        // Predicated region
        $region29: #{taconvnet_forward.1} parent=11 // pred_check
          %p329 = pneg %p151
        $region30: #{taconvnet_forward.1} parent=11 // pred_check_branch
          %331 = sbr.rel (%p329) target = $region32
        $region31: #{taconvnet_forward.1} parent=11 // pred_region
          _
        $region32: #{taconvnet_forward.1} parent=11 // pred_fallthru
          _
        // Predicated region
        $region33: #{taconvnet_forward.1} parent=11 // pred_check
          %p332 = pneg %p172
        $region34: #{taconvnet_forward.1} parent=11 // pred_check_branch
          %334 = sbr.rel (%p332) target = $region36
        $region35: #{taconvnet_forward.1} parent=11 // pred_region
          _
        $region36: #{taconvnet_forward.1} parent=11 // pred_fallthru
          _
        // Predicated region
        $region37: #{taconvnet_forward.1} parent=11 // pred_check
          %p335 = pneg %p193
        $region38: #{taconvnet_forward.1} parent=11 // pred_check_branch
          %337 = sbr.rel (%p335) target = $region40
        $region39: #{taconvnet_forward.1} parent=11 // pred_region
          %s339 = ssub.s32 2048, 2048
          %340 = vsyncadd [#allocation6], %s339
          %s341 = sshll.u32 [#allocation7], 4
          %s342 = int_to_ptr.vmem [resolvable:$true] %s341
          %347 = dma.hbm_to_vmem [thread:$0]  %s7, 2048, %s342, [#allocation6], 64, 64, 4
        $region40: #{taconvnet_forward.1} parent=11 // pred_fallthru
          _
        // Predicated region
        $region41: #{taconvnet_forward.1} parent=11 // pred_check
          %p348 = pneg %p214
        $region42: #{taconvnet_forward.1} parent=11 // pred_check_branch
          %350 = sbr.rel (%p348) target = $region44
        $region43: #{taconvnet_forward.1} parent=11 // pred_region
          _
        $region44: #{taconvnet_forward.1} parent=11 // pred_fallthru
          _
        // Predicated region
        $region45: #{taconvnet_forward.1} parent=11 // pred_check
          %p351 = pneg %p235
        $region46: #{taconvnet_forward.1} parent=11 // pred_check_branch
          %353 = sbr.rel (%p351) target = $region48
        $region47: #{taconvnet_forward.1} parent=11 // pred_region
          %s355 = ssub.s32 2048, 2048
          %356 = vsyncadd [#allocation9], %s355
          %s357 = sshll.u32 [#allocation8], 4
          %s358 = int_to_ptr.vmem [resolvable:$true] %s357
          %363 = dma.hbm_to_vmem [thread:$0]  %s9, 2048, %s358, [#allocation9], 64, 64, 4
        $region48: #{taconvnet_forward.1} parent=11 // pred_fallthru
          _
        // Predicated region
        $region49: #{taconvnet_forward.1} parent=11 // pred_check
          %p364 = pneg %p256
        $region50: #{taconvnet_forward.1} parent=11 // pred_check_branch
          %366 = sbr.rel (%p364) target = $region52
        $region51: #{taconvnet_forward.1} parent=11 // pred_region
          _
        $region52: #{taconvnet_forward.1} parent=11 // pred_fallthru
          _
      $region12: #{taconvnet_forward.1} parent=5 // pred_fallthru
        _
      %p367 = scmp.lt.s32.totalorder %s20, 2
      // Predicated region
      $region53: #{taconvnet_forward.1} parent=5 // pred_check
        %p368 = pneg %p367
      $region54: #{taconvnet_forward.1} parent=5 // pred_check_branch
        %370 = sbr.rel (%p368) target = $region56
      $region55: #{taconvnet_forward.1} parent=5 // pred_region
        // Predicated region
        $region57: #{taconvnet_forward.1} parent=55 // pred_check
          %p371 = pneg %p40
        $region58: #{taconvnet_forward.1} parent=55 // pred_check_branch
          %373 = sbr.rel (%p371) target = $region60
        $region59: #{taconvnet_forward.1} parent=55 // pred_region
          %s374 = smul.u32 2, %s20
          %p375 = scmp.lt.s32.totalorder %s374, 3
          %s376 = scalar_select %p375, %s374, 3
          %s377 = smul.addr %s376, 2
          %s378 = smul.addr %s377, 8
          %s379 = scalar_lea.vmem %s0, %s378
          %s380 = smul.u32 2, %s20
        $region60: #{taconvnet_forward.1} parent=55 // pred_fallthru
          _
      $region56: #{taconvnet_forward.1} parent=5 // pred_fallthru
        _
      %p381 = scmp.le.s32.totalorder 1, %s20
      %p382 = scmp.lt.s32.totalorder %s20, 3
      %p383 = pnand %p381, %p382
      %p384 = pneg %p383
      // Predicated region
      $region61: #{taconvnet_forward.1} parent=5 // pred_check
        _
      $region62: #{taconvnet_forward.1} parent=5 // pred_check_branch
        %386 = sbr.rel (%p383) target = $region64
      $region63: #{taconvnet_forward.1} parent=5 // pred_region
        %s387 = ssub.s32 %s20, 1
        // Predicated region
        $region65: #{taconvnet_forward.1} parent=63 // pred_check
          %p388 = pneg %p67
        $region66: #{taconvnet_forward.1} parent=63 // pred_check_branch
          %390 = sbr.rel (%p388) target = $region68
        $region67: #{taconvnet_forward.1} parent=63 // pred_region
          %391 = dma.done [#allocation4], 2048
        $region68: #{taconvnet_forward.1} parent=63 // pred_fallthru
          _
        // Predicated region
        $region69: #{taconvnet_forward.1} parent=63 // pred_check
          %p392 = pneg %p109
        $region70: #{taconvnet_forward.1} parent=63 // pred_check_branch
          %394 = sbr.rel (%p392) target = $region72
        $region71: #{taconvnet_forward.1} parent=63 // pred_region
          %395 = dma.done [#allocation6], 2048
        $region72: #{taconvnet_forward.1} parent=63 // pred_fallthru
          _
        // Predicated region
        $region73: #{taconvnet_forward.1} parent=63 // pred_check
          %p396 = pneg %p193
        $region74: #{taconvnet_forward.1} parent=63 // pred_check_branch
          %398 = sbr.rel (%p396) target = $region76
        $region75: #{taconvnet_forward.1} parent=63 // pred_region
          %399 = dma.done [#allocation6], 2048
        $region76: #{taconvnet_forward.1} parent=63 // pred_fallthru
          _
        // Predicated region
        $region77: #{taconvnet_forward.1} parent=63 // pred_check
          %p400 = pneg %p235
        $region78: #{taconvnet_forward.1} parent=63 // pred_check_branch
          %402 = sbr.rel (%p400) target = $region80
        $region79: #{taconvnet_forward.1} parent=63 // pred_region
          %403 = dma.done [#allocation9], 2048
        $region80: #{taconvnet_forward.1} parent=63 // pred_fallthru
          _
        %s404 = smul.u32 2, %s25
        %p405 = scmp.lt.s32.totalorder %s404, 3
        %s406 = scalar_select %p405, %s404, 3
        %s407 = smul.addr %s406, 2
        %s408 = smul.addr %s407, 8
        %s409 = scalar_lea.vmem %s0, %s408
        %p410 = pneg %p46
        %p411 = pneg %p43
        %p412 = pneg %p67
        %p413 = pneg %p64
        %p414 = pneg %p88
        %p415 = pneg %p85
        %p416 = pneg %p109
        %p417 = pneg %p106
        %p418 = pneg %p130
        %p419 = pneg %p127
        %p420 = pneg %p151
        %p421 = pneg %p148
        %p422 = pneg %p172
        %p423 = pneg %p169
        %p424 = pneg %p193
        %p425 = pneg %p190
        %p426 = pneg %p214
        %p427 = pneg %p211
        %p428 = pneg %p235
        %p429 = pneg %p232
        %p430 = pneg %p256
        %p431 = pneg %p253
        %p432 = pneg %p282
        %p433 = pneg %p279
        %s434 = smul.u32 2, %s25
        %p435 = scmp.lt.s32.totalorder %s434, 3
        %s436 = scalar_select %p435, %s434, 3
        %s437 = smul.addr %s436, 2
        %s438 = smul.addr %s437, 8
        %s439 = scalar_lea.vmem %s11, %s438
        %s440 = smul.u32 2, %s25
        %p441 = scmp.lt.s32.totalorder %s440, 3
        %s442 = scalar_select %p441, %s440, 3
        %s443 = smul.addr %s442, 2
        %s444 = smul.addr %s443, 8
        %s445 = scalar_lea.vmem %s0, %s444
        %s446 = smul.u32 2, %s25
        %s447 = smul.u32 2, %s25
        %p448 = scmp.lt.s32.totalorder %s447, 3
        %s449 = scalar_select %p448, %s447, 3
        %s450 = smul.addr %s449, 2
        %s451 = smul.addr %s450, 8
        %s452 = scalar_lea.vmem %s11, %s451
        %s453 = smul.u32 2, %s25
        %v455 = vld [vmem:[%s445] sm:$0xff]
        %v456 = vld [vmem:[%s445 + $0x8] sm:$0xff]
        %vm457 = vcmask 31744
        %v458 = vsel %vm457, %v455, 0.0
        %v459 = vsel %vm457, %v456, 0.0
        %v460 = vpack.c.bf16 %v458, 0.0
        %v461 = vpack.c.bf16 %v459, %v459
        %v464 = vunpack.c.l.b16 %v460
        %v465 = vunpack.c.h.b16 %v460
        %v466 = vunpack.c.l.b16 %v461
        %v467 = vpack.c.b16 %v464, %v464
        %v468 = vpack.c.b16 %v465, %v465
        %v469 = vpack.c.b16 %v466, %v466
        %473 = vst [vmem:[#allocation2] sm:$0xf] %v467
        %474 = vst [vmem:[#allocation2 + $0x4] sm:$0xf] %v468
        %475 = vst [vmem:[#allocation2 + $0x8] sm:$0xf] %v469
        %s476 = scalar_lea.vmem %s445, 16
        %v477 = vld [vmem:[%s476] sm:$0xff]
        %v478 = vld [vmem:[%s476 + $0x8] sm:$0xff]
        %v479 = vsel %vm457, %v477, 0.0
        %v480 = vsel %vm457, %v478, 0.0
        %v481 = vpack.c.bf16 %v479, 0.0
        %v482 = vpack.c.bf16 %v480, %v480
        %v485 = vunpack.c.l.b16 %v481
        %v486 = vunpack.c.h.b16 %v481
        %v487 = vunpack.c.l.b16 %v482
        %v488 = vpack.c.b16 %v485, %v485
        %v489 = vpack.c.b16 %v486, %v486
        %v490 = vpack.c.b16 %v487, %v487
        %494 = vst [vmem:[#allocation2 + $0xc] sm:$0xf] %v488
        %495 = vst [vmem:[#allocation2 + $0x10] sm:$0xf] %v489
        %496 = vst [vmem:[#allocation2 + $0x14] sm:$0xf] %v490
        %v497 = vld [vmem:[#allocation2 + $0x4] sm:$0xf]
        %v498 = vld [vmem:[#allocation2 + $0x8] sm:$0xf]
        %v499 = vld [vmem:[#allocation2 + $0x10] sm:$0xf]
        %v500 = vld [vmem:[#allocation2 + $0x14] sm:$0xf]
        %v503 = vunpack.c.l.b16 %v497
        %v504 = vunpack.c.l.b16 %v498
        %v505 = vpack.c.b16 %v504, %v503
        %v509 = vunpack.c.l.b16 %v499
        %v510 = vunpack.c.l.b16 %v500
        %v511 = vpack.c.b16 %v510, %v509
        %v513 = vld [vmem:[#allocation2] sm:$0x8]
        %v515 = vunpack.c.l.b16 %v513
        %v516 = vpack.c.b16 %v503, %v515
        %v517 = vpack.c.b16 %v504, %v504
        %v519 = vshrl.u32 %v505, 16
        %v521 = vrot.slane %v519, 4
        %v522 = vshll.u32 %v505, 16
        %v524 = vrot.slane %v522, 5
        %v525 = vor.u32 %v521, %v524
        %v526 = vld [vmem:[#allocation2 + $0xc] sm:$0x8]
        %v528 = vunpack.c.l.b16 %v526
        %v529 = vpack.c.b16 %v509, %v528
        %v530 = vpack.c.b16 %v510, %v510
        %v532 = vshrl.u32 %v511, 16
        %v534 = vrot.slane %v532, 4
        %v535 = vshll.u32 %v511, 16
        %v537 = vrot.slane %v535, 5
        %v538 = vor.u32 %v534, %v537
        %vm539 = vsmask.f32 4352
        %v541 = vshrl.u32 %v516, 16
        %v543 = vrot.slane %v541, 3
        %v544 = vshll.u32 %v516, 16
        %v546 = vrot.slane %v544, 4
        %v547 = vor.u32 %v543, %v546
        %v549 = vshrl.u32 %v517, 16
        %v551 = vrot.slane %v549, 3
        %v552 = vshll.u32 %v517, 16
        %v554 = vrot.slane %v552, 4
        %v555 = vor.u32 %v551, %v554
        %v556 = vsel %vm539, %v547, %v555
        %v558 = vshrl.u32 %v525, 16
        %v560 = vrot.slane %v558, 3
        %v561 = vshll.u32 %v525, 16
        %v563 = vrot.slane %v561, 4
        %v564 = vor.u32 %v560, %v563
        %v565 = vsel %vm539, %v564, %v564
        %v569 = vshrl.u32 %v529, 16
        %v571 = vrot.slane %v569, 3
        %v572 = vshll.u32 %v529, 16
        %v574 = vrot.slane %v572, 4
        %v575 = vor.u32 %v571, %v574
        %v577 = vshrl.u32 %v530, 16
        %v579 = vrot.slane %v577, 3
        %v580 = vshll.u32 %v530, 16
        %v582 = vrot.slane %v580, 4
        %v583 = vor.u32 %v579, %v582
        %v584 = vsel %vm539, %v575, %v583
        %v586 = vshrl.u32 %v538, 16
        %v588 = vrot.slane %v586, 3
        %v589 = vshll.u32 %v538, 16
        %v591 = vrot.slane %v589, 4
        %v592 = vor.u32 %v588, %v591
        %v593 = vsel %vm539, %v592, %v592
        %v596 = vld [vmem:[#allocation3] sm:$0xf]
        %v597 = vld [vmem:[#allocation3 + $0x4] sm:$0xf]
        %v598 = vld [vmem:[#allocation3 + $0x8] sm:$0xf]
        %v599 = vld [vmem:[#allocation3 + $0xc] sm:$0xf]
        %v600 = vld [vmem:[#allocation3 + $0x10] sm:$0xf]
        %v601 = vld [vmem:[#allocation3 + $0x14] sm:$0xf]
        %v602 = vld [vmem:[#allocation3 + $0x18] sm:$0xf]
        %v603 = vld [vmem:[#allocation3 + $0x1c] sm:$0xf]
        %v604 = vld [vmem:[#allocation3 + $0x20] sm:$0xf]
        %v605 = vld [vmem:[#allocation3 + $0x24] sm:$0xf]
        %v606 = vld [vmem:[#allocation3 + $0x28] sm:$0xf]
        %v607 = vld [vmem:[#allocation3 + $0x2c] sm:$0xf]
        %v608 = vld [vmem:[#allocation3 + $0x30] sm:$0xf]
        %v609 = vld [vmem:[#allocation3 + $0x34] sm:$0xf]
        %v610 = vld [vmem:[#allocation3 + $0x38] sm:$0xf]
        %v611 = vld [vmem:[#allocation3 + $0x3c] sm:$0xf]
        %v612 = vld [vmem:[#allocation3 + $0x40] sm:$0xf]
        %v613 = vld [vmem:[#allocation3 + $0x44] sm:$0xf]
        %v614 = vld [vmem:[#allocation3 + $0x48] sm:$0xf]
        %v615 = vld [vmem:[#allocation3 + $0x4c] sm:$0xf]
        %v616 = vld [vmem:[#allocation3 + $0x50] sm:$0xf]
        %v617 = vld [vmem:[#allocation3 + $0x54] sm:$0xf]
        %v618 = vld [vmem:[#allocation3 + $0x58] sm:$0xf]
        %v619 = vld [vmem:[#allocation3 + $0x5c] sm:$0xf]
        %v620 = vld [vmem:[#allocation3 + $0x60] sm:$0xf]
        %v621 = vld [vmem:[#allocation3 + $0x64] sm:$0xf]
        %v622 = vld [vmem:[#allocation3 + $0x68] sm:$0xf]
        %v623 = vld [vmem:[#allocation3 + $0x6c] sm:$0xf]
        %v624 = vld [vmem:[#allocation3 + $0x70] sm:$0xf]
        %v625 = vld [vmem:[#allocation3 + $0x74] sm:$0xf]
        %v626 = vld [vmem:[#allocation3 + $0x78] sm:$0xf]
        %v627 = vld [vmem:[#allocation3 + $0x7c] sm:$0xf]
        %v628 = vld [vmem:[%s2] sm:$0x1]
        %v630 = vlaneseq
        %v631 = vshrl.u32 %v630, 7
        %v632 = vsub.s32 0, %v631
        %v633 = vrot.slane %v628, %v632
        %v667 = vunpack.c.l.b16 %v596
        %v668 = vunpack.c.l.b16 %v597
        %v669 = vunpack.c.l.b16 %v598
        %v670 = vunpack.c.l.b16 %v599
        %v671 = vunpack.c.l.b16 %v600
        %v672 = vunpack.c.l.b16 %v601
        %v673 = vunpack.c.l.b16 %v602
        %v674 = vunpack.c.l.b16 %v603
        %v675 = vunpack.c.l.b16 %v604
        %v676 = vunpack.c.l.b16 %v605
        %v677 = vunpack.c.l.b16 %v606
        %v678 = vunpack.c.l.b16 %v607
        %v679 = vunpack.c.l.b16 %v608
        %v680 = vunpack.c.l.b16 %v609
        %v681 = vunpack.c.l.b16 %v610
        %v682 = vunpack.c.l.b16 %v611
        %v683 = vunpack.c.l.b16 %v612
        %v684 = vunpack.c.l.b16 %v613
        %v685 = vunpack.c.l.b16 %v614
        %v686 = vunpack.c.l.b16 %v615
        %v687 = vunpack.c.l.b16 %v616
        %v688 = vunpack.c.l.b16 %v617
        %v689 = vunpack.c.l.b16 %v618
        %v690 = vunpack.c.l.b16 %v619
        %v691 = vunpack.c.l.b16 %v620
        %v692 = vunpack.c.l.b16 %v621
        %v693 = vunpack.c.l.b16 %v622
        %v694 = vunpack.c.l.b16 %v623
        %v695 = vunpack.c.l.b16 %v624
        %v696 = vunpack.c.l.b16 %v625
        %v697 = vunpack.c.l.b16 %v626
        %v698 = vunpack.c.l.b16 %v627
        %v699 = vpack.c.b16 %v668, %v667
        %v700 = vpack.c.b16 %v670, %v669
        %v701 = vpack.c.b16 %v672, %v671
        %v702 = vpack.c.b16 %v674, %v673
        %v703 = vpack.c.b16 %v676, %v675
        %v704 = vpack.c.b16 %v678, %v677
        %v705 = vpack.c.b16 %v680, %v679
        %v706 = vpack.c.b16 %v682, %v681
        %v707 = vpack.c.b16 %v684, %v683
        %v708 = vpack.c.b16 %v686, %v685
        %v709 = vpack.c.b16 %v688, %v687
        %v710 = vpack.c.b16 %v690, %v689
        %v711 = vpack.c.b16 %v692, %v691
        %v712 = vpack.c.b16 %v694, %v693
        %v713 = vpack.c.b16 %v696, %v695
        %v714 = vpack.c.b16 %v698, %v697
        %731 = vmatprep.subr.bf16.mxu0 0
        %732 = vmatpush1.bf16.msra.mxu0 %v706
        %733 = vmatprep.subr.bf16.mxu0 0
        %734 = vmatpush1.bf16.msra.mxu0 %v705
        %735 = vmatprep.subr.bf16.mxu0 0
        %736 = vmatpush1.bf16.msra.mxu0 %v704
        %737 = vmatprep.subr.bf16.mxu0 0
        %738 = vmatpush1.bf16.msra.mxu0 %v703
        %739 = vmatprep.subr.bf16.mxu0 0
        %740 = vmatpush1.bf16.msra.mxu0 %v702
        %741 = vmatprep.subr.bf16.mxu0 0
        %742 = vmatpush1.bf16.msra.mxu0 %v701
        %743 = vmatprep.subr.bf16.mxu0 0
        %744 = vmatpush1.bf16.msra.mxu0 %v700
        %745 = vmatprep.subr.bf16.mxu0 0
        %746 = vmatpush1.bf16.msra.mxu0 %v699
        %747 = vmatprep.subr.bf16.mxu0 0
        %748 = vmatpush2.bf16.msra.mxu0 %v714
        %749 = vmatprep.subr.bf16.mxu0 0
        %750 = vmatpush2.bf16.msra.mxu0 %v713
        %751 = vmatprep.subr.bf16.mxu0 0
        %752 = vmatpush2.bf16.msra.mxu0 %v712
        %753 = vmatprep.subr.bf16.mxu0 0
        %754 = vmatpush2.bf16.msra.mxu0 %v711
        %755 = vmatprep.subr.bf16.mxu0 0
        %756 = vmatpush2.bf16.msra.mxu0 %v710
        %757 = vmatprep.subr.bf16.mxu0 0
        %758 = vmatpush2.bf16.msra.mxu0 %v709
        %759 = vmatprep.subr.bf16.mxu0 0
        %760 = vmatpush2.bf16.msra.mxu0 %v708
        %761 = vmatprep.subr.bf16.mxu0 0
        %762 = vmatpush2.bf16.msra.mxu0 %v707
        %763 = vmatprep.mubr.bf16.mxu0 %v565
        %764 = vmatmul.mubr.bf16.gmra.mxu0 %v556
        %v765 = vpop.f32.mrf.mxu0
        %v766 = vadd.f32 %v633, %v765
        %v767 = vpop.f32.mrf.mxu0
        %v768 = vpop.f32.mrf.mxu0
        %v769 = vadd.f32 %v633, %v768
        %v770 = vpop.f32.mrf.mxu0
        %771 = vmatprep.mubr.bf16.mxu0 %v593
        %772 = vmatmul.mubr.bf16.gmra.mxu0 %v584
        %v773 = vpop.f32.mrf.mxu0
        %v774 = vadd.f32 %v633, %v773
        %v775 = vpop.f32.mrf.mxu0
        %v776 = vpop.f32.mrf.mxu0
        %v777 = vadd.f32 %v633, %v776
        %v778 = vpop.f32.mrf.mxu0
        %779 = vdwg.mxu0
        %v780 = vmax.f32 %v766, 0.0
        %v781 = vmax.f32 %v769, 0.0
        %v782 = vmax.f32 %v774, 0.0
        %v783 = vmax.f32 %v777, 0.0
        %v784 = vpack.c.bf16 %v781, %v780
        %v785 = vpack.c.bf16 %v783, %v782
        %v787 = vunpack.c.l.b16 %v784
        %v788 = vunpack.c.h.b16 %v784
        %v789 = vpack.c.b16 %v787, %v787
        %v790 = vpack.c.b16 %v788, %v788
        %793 = vst [vmem:[#allocation2 + $0x4] sm:$0xf] %v789
        %794 = vst [vmem:[#allocation2 + $0x8] sm:$0xf] %v790
        %v796 = vunpack.c.l.b16 %v785
        %v797 = vunpack.c.h.b16 %v785
        %v798 = vpack.c.b16 %v796, %v796
        %v799 = vpack.c.b16 %v797, %v797
        %802 = vst [vmem:[#allocation2 + $0x10] sm:$0xf] %v798
        %803 = vst [vmem:[#allocation2 + $0x14] sm:$0xf] %v799
        %v804 = vld [vmem:[#allocation2] sm:$0x8]
        %v805 = vld [vmem:[#allocation2 + $0x4] sm:$0xf]
        %v806 = vld [vmem:[#allocation2 + $0x8] sm:$0xf]
        %v810 = vunpack.c.l.b16 %v804
        %v811 = vunpack.c.l.b16 %v805
        %v812 = vunpack.c.l.b16 %v806
        %v813 = vpack.c.b16 %v811, %v810
        %v814 = vpack.c.b16 %v812, %v812
        %v815 = vpack.c.b16 %v812, %v811
        %v817 = vshrl.u32 %v815, 16
        %v819 = vrot.slane %v817, 4
        %v820 = vshll.u32 %v815, 16
        %v822 = vrot.slane %v820, 5
        %v823 = vor.u32 %v819, %v822
        %v824 = vld [vmem:[#allocation2 + $0xc] sm:$0x8]
        %v825 = vld [vmem:[#allocation2 + $0x10] sm:$0xf]
        %v826 = vld [vmem:[#allocation2 + $0x14] sm:$0xf]
        %v830 = vunpack.c.l.b16 %v824
        %v831 = vunpack.c.l.b16 %v825
        %v832 = vunpack.c.l.b16 %v826
        %v833 = vpack.c.b16 %v831, %v830
        %v834 = vpack.c.b16 %v832, %v832
        %v835 = vpack.c.b16 %v832, %v831
        %v837 = vshrl.u32 %v835, 16
        %v839 = vrot.slane %v837, 4
        %v840 = vshll.u32 %v835, 16
        %v842 = vrot.slane %v840, 5
        %v843 = vor.u32 %v839, %v842
        %v845 = vshrl.u32 %v813, 16
        %v847 = vrot.slane %v845, 3
        %v848 = vshll.u32 %v813, 16
        %v850 = vrot.slane %v848, 4
        %v851 = vor.u32 %v847, %v850
        %v853 = vshrl.u32 %v814, 16
        %v855 = vrot.slane %v853, 3
        %v856 = vshll.u32 %v814, 16
        %v858 = vrot.slane %v856, 4
        %v859 = vor.u32 %v855, %v858
        %v860 = vsel %vm539, %v851, %v859
        %v862 = vshrl.u32 %v823, 16
        %v864 = vrot.slane %v862, 3
        %v865 = vshll.u32 %v823, 16
        %v867 = vrot.slane %v865, 4
        %v868 = vor.u32 %v864, %v867
        %v869 = vsel %vm539, %v868, %v868
        %v873 = vshrl.u32 %v833, 16
        %v875 = vrot.slane %v873, 3
        %v876 = vshll.u32 %v833, 16
        %v878 = vrot.slane %v876, 4
        %v879 = vor.u32 %v875, %v878
        %v881 = vshrl.u32 %v834, 16
        %v883 = vrot.slane %v881, 3
        %v884 = vshll.u32 %v834, 16
        %v886 = vrot.slane %v884, 4
        %v887 = vor.u32 %v883, %v886
        %v888 = vsel %vm539, %v879, %v887
        %v890 = vshrl.u32 %v843, 16
        %v892 = vrot.slane %v890, 3
        %v893 = vshll.u32 %v843, 16
        %v895 = vrot.slane %v893, 4
        %v896 = vor.u32 %v892, %v895
        %v897 = vsel %vm539, %v896, %v896
        %v900 = vld [vmem:[#allocation5] sm:$0xf]
        %v901 = vld [vmem:[#allocation5 + $0x4] sm:$0xf]
        %v902 = vld [vmem:[#allocation5 + $0x8] sm:$0xf]
        %v903 = vld [vmem:[#allocation5 + $0xc] sm:$0xf]
        %v904 = vld [vmem:[#allocation5 + $0x10] sm:$0xf]
        %v905 = vld [vmem:[#allocation5 + $0x14] sm:$0xf]
        %v906 = vld [vmem:[#allocation5 + $0x18] sm:$0xf]
        %v907 = vld [vmem:[#allocation5 + $0x1c] sm:$0xf]
        %v908 = vld [vmem:[#allocation5 + $0x20] sm:$0xf]
        %v909 = vld [vmem:[#allocation5 + $0x24] sm:$0xf]
        %v910 = vld [vmem:[#allocation5 + $0x28] sm:$0xf]
        %v911 = vld [vmem:[#allocation5 + $0x2c] sm:$0xf]
        %v912 = vld [vmem:[#allocation5 + $0x30] sm:$0xf]
        %v913 = vld [vmem:[#allocation5 + $0x34] sm:$0xf]
        %v914 = vld [vmem:[#allocation5 + $0x38] sm:$0xf]
        %v915 = vld [vmem:[#allocation5 + $0x3c] sm:$0xf]
        %v916 = vld [vmem:[#allocation5 + $0x40] sm:$0xf]
        %v917 = vld [vmem:[#allocation5 + $0x44] sm:$0xf]
        %v918 = vld [vmem:[#allocation5 + $0x48] sm:$0xf]
        %v919 = vld [vmem:[#allocation5 + $0x4c] sm:$0xf]
        %v920 = vld [vmem:[#allocation5 + $0x50] sm:$0xf]
        %v921 = vld [vmem:[#allocation5 + $0x54] sm:$0xf]
        %v922 = vld [vmem:[#allocation5 + $0x58] sm:$0xf]
        %v923 = vld [vmem:[#allocation5 + $0x5c] sm:$0xf]
        %v924 = vld [vmem:[#allocation5 + $0x60] sm:$0xf]
        %v925 = vld [vmem:[#allocation5 + $0x64] sm:$0xf]
        %v926 = vld [vmem:[#allocation5 + $0x68] sm:$0xf]
        %v927 = vld [vmem:[#allocation5 + $0x6c] sm:$0xf]
        %v928 = vld [vmem:[#allocation5 + $0x70] sm:$0xf]
        %v929 = vld [vmem:[#allocation5 + $0x74] sm:$0xf]
        %v930 = vld [vmem:[#allocation5 + $0x78] sm:$0xf]
        %v931 = vld [vmem:[#allocation5 + $0x7c] sm:$0xf]
        %v932 = vld [vmem:[%s4] sm:$0x1]
        %v934 = vlaneseq
        %v935 = vshrl.u32 %v934, 7
        %v936 = vsub.s32 0, %v935
        %v937 = vrot.slane %v932, %v936
        %v971 = vunpack.c.l.b16 %v900
        %v972 = vunpack.c.l.b16 %v901
        %v973 = vunpack.c.l.b16 %v902
        %v974 = vunpack.c.l.b16 %v903
        %v975 = vunpack.c.l.b16 %v904
        %v976 = vunpack.c.l.b16 %v905
        %v977 = vunpack.c.l.b16 %v906
        %v978 = vunpack.c.l.b16 %v907
        %v979 = vunpack.c.l.b16 %v908
        %v980 = vunpack.c.l.b16 %v909
        %v981 = vunpack.c.l.b16 %v910
        %v982 = vunpack.c.l.b16 %v911
        %v983 = vunpack.c.l.b16 %v912
        %v984 = vunpack.c.l.b16 %v913
        %v985 = vunpack.c.l.b16 %v914
        %v986 = vunpack.c.l.b16 %v915
        %v987 = vunpack.c.l.b16 %v916
        %v988 = vunpack.c.l.b16 %v917
        %v989 = vunpack.c.l.b16 %v918
        %v990 = vunpack.c.l.b16 %v919
        %v991 = vunpack.c.l.b16 %v920
        %v992 = vunpack.c.l.b16 %v921
        %v993 = vunpack.c.l.b16 %v922
        %v994 = vunpack.c.l.b16 %v923
        %v995 = vunpack.c.l.b16 %v924
        %v996 = vunpack.c.l.b16 %v925
        %v997 = vunpack.c.l.b16 %v926
        %v998 = vunpack.c.l.b16 %v927
        %v999 = vunpack.c.l.b16 %v928
        %v1000 = vunpack.c.l.b16 %v929
        %v1001 = vunpack.c.l.b16 %v930
        %v1002 = vunpack.c.l.b16 %v931
        %v1003 = vpack.c.b16 %v972, %v971
        %v1004 = vpack.c.b16 %v974, %v973
        %v1005 = vpack.c.b16 %v976, %v975
        %v1006 = vpack.c.b16 %v978, %v977
        %v1007 = vpack.c.b16 %v980, %v979
        %v1008 = vpack.c.b16 %v982, %v981
        %v1009 = vpack.c.b16 %v984, %v983
        %v1010 = vpack.c.b16 %v986, %v985
        %v1011 = vpack.c.b16 %v988, %v987
        %v1012 = vpack.c.b16 %v990, %v989
        %v1013 = vpack.c.b16 %v992, %v991
        %v1014 = vpack.c.b16 %v994, %v993
        %v1015 = vpack.c.b16 %v996, %v995
        %v1016 = vpack.c.b16 %v998, %v997
        %v1017 = vpack.c.b16 %v1000, %v999
        %v1018 = vpack.c.b16 %v1002, %v1001
        %1035 = vmatprep.subr.bf16.mxu0 0
        %1036 = vmatpush1.bf16.msra.mxu0 %v1010
        %1037 = vmatprep.subr.bf16.mxu0 0
        %1038 = vmatpush1.bf16.msra.mxu0 %v1009
        %1039 = vmatprep.subr.bf16.mxu0 0
        %1040 = vmatpush1.bf16.msra.mxu0 %v1008
        %1041 = vmatprep.subr.bf16.mxu0 0
        %1042 = vmatpush1.bf16.msra.mxu0 %v1007
        %1043 = vmatprep.subr.bf16.mxu0 0
        %1044 = vmatpush1.bf16.msra.mxu0 %v1006
        %1045 = vmatprep.subr.bf16.mxu0 0
        %1046 = vmatpush1.bf16.msra.mxu0 %v1005
        %1047 = vmatprep.subr.bf16.mxu0 0
        %1048 = vmatpush1.bf16.msra.mxu0 %v1004
        %1049 = vmatprep.subr.bf16.mxu0 0
        %1050 = vmatpush1.bf16.msra.mxu0 %v1003
        %1051 = vmatprep.subr.bf16.mxu0 0
        %1052 = vmatpush2.bf16.msra.mxu0 %v1018
        %1053 = vmatprep.subr.bf16.mxu0 0
        %1054 = vmatpush2.bf16.msra.mxu0 %v1017
        %1055 = vmatprep.subr.bf16.mxu0 0
        %1056 = vmatpush2.bf16.msra.mxu0 %v1016
        %1057 = vmatprep.subr.bf16.mxu0 0
        %1058 = vmatpush2.bf16.msra.mxu0 %v1015
        %1059 = vmatprep.subr.bf16.mxu0 0
        %1060 = vmatpush2.bf16.msra.mxu0 %v1014
        %1061 = vmatprep.subr.bf16.mxu0 0
        %1062 = vmatpush2.bf16.msra.mxu0 %v1013
        %1063 = vmatprep.subr.bf16.mxu0 0
        %1064 = vmatpush2.bf16.msra.mxu0 %v1012
        %1065 = vmatprep.subr.bf16.mxu0 0
        %1066 = vmatpush2.bf16.msra.mxu0 %v1011
        %1067 = vmatprep.mubr.bf16.mxu0 %v869
        %1068 = vmatmul.mubr.bf16.gmra.mxu0 %v860
        %v1069 = vpop.f32.mrf.mxu0
        %v1070 = vadd.f32 %v937, %v1069
        %v1071 = vpop.f32.mrf.mxu0
        %v1072 = vpop.f32.mrf.mxu0
        %v1073 = vadd.f32 %v937, %v1072
        %v1074 = vpop.f32.mrf.mxu0
        %1075 = vmatprep.mubr.bf16.mxu0 %v897
        %1076 = vmatmul.mubr.bf16.gmra.mxu0 %v888
        %v1077 = vpop.f32.mrf.mxu0
        %v1078 = vadd.f32 %v937, %v1077
        %v1079 = vpop.f32.mrf.mxu0
        %v1080 = vpop.f32.mrf.mxu0
        %v1081 = vadd.f32 %v937, %v1080
        %v1082 = vpop.f32.mrf.mxu0
        %1083 = vdwg.mxu0
        %v1084 = vmax.f32 %v1070, 0.0
        %v1085 = vmax.f32 %v1073, 0.0
        %v1086 = vmax.f32 %v1078, 0.0
        %v1087 = vmax.f32 %v1081, 0.0
        %v1088 = vld [vmem:[%s5] sm:$0xf]
        %v1089 = vld [vmem:[%s5 + $0x4] sm:$0xf]
        %v1090 = vld [vmem:[%s5 + $0x8] sm:$0xf]
        %v1091 = vld [vmem:[%s5 + $0xc] sm:$0xf]
        %v1092 = vld [vmem:[%s5 + $0x10] sm:$0xf]
        %v1093 = vld [vmem:[%s5 + $0x14] sm:$0xf]
        %v1094 = vld [vmem:[%s5 + $0x18] sm:$0xf]
        %v1095 = vld [vmem:[%s5 + $0x1c] sm:$0xf]
        %v1096 = vld [vmem:[%s5 + $0x20] sm:$0xf]
        %v1097 = vld [vmem:[%s5 + $0x24] sm:$0xf]
        %v1098 = vld [vmem:[%s5 + $0x28] sm:$0xf]
        %v1099 = vld [vmem:[%s5 + $0x2c] sm:$0xf]
        %v1100 = vld [vmem:[%s5 + $0x30] sm:$0xf]
        %v1101 = vld [vmem:[%s5 + $0x34] sm:$0xf]
        %v1102 = vld [vmem:[%s5 + $0x38] sm:$0xf]
        %v1103 = vld [vmem:[%s5 + $0x3c] sm:$0xf]
        %v1104 = vld [vmem:[%s6] sm:$0x1]
        %v1106 = vlaneseq
        %v1107 = vshrl.u32 %v1106, 7
        %v1108 = vsub.s32 0, %v1107
        %v1109 = vrot.slane %v1104, %v1108
        %v1127 = vunpack.c.l.b16 %v1088
        %v1128 = vunpack.c.l.b16 %v1089
        %v1129 = vunpack.c.l.b16 %v1090
        %v1130 = vunpack.c.l.b16 %v1091
        %v1131 = vunpack.c.l.b16 %v1092
        %v1132 = vunpack.c.l.b16 %v1093
        %v1133 = vunpack.c.l.b16 %v1094
        %v1134 = vunpack.c.l.b16 %v1095
        %v1135 = vunpack.c.l.b16 %v1096
        %v1136 = vunpack.c.l.b16 %v1097
        %v1137 = vunpack.c.l.b16 %v1098
        %v1138 = vunpack.c.l.b16 %v1099
        %v1139 = vunpack.c.l.b16 %v1100
        %v1140 = vunpack.c.l.b16 %v1101
        %v1141 = vunpack.c.l.b16 %v1102
        %v1142 = vunpack.c.l.b16 %v1103
        %v1143 = vpack.c.b16 %v1128, %v1127
        %v1144 = vpack.c.b16 %v1130, %v1129
        %v1145 = vpack.c.b16 %v1132, %v1131
        %v1146 = vpack.c.b16 %v1134, %v1133
        %v1147 = vpack.c.b16 %v1136, %v1135
        %v1148 = vpack.c.b16 %v1138, %v1137
        %v1149 = vpack.c.b16 %v1140, %v1139
        %v1150 = vpack.c.b16 %v1142, %v1141
        %1159 = vmatprep.subr.bf16.mxu0 0
        %1160 = vmatpush1.bf16.msra.mxu0 %v1150
        %1161 = vmatprep.subr.bf16.mxu0 0
        %1162 = vmatpush1.bf16.msra.mxu0 %v1149
        %1163 = vmatprep.subr.bf16.mxu0 0
        %1164 = vmatpush1.bf16.msra.mxu0 %v1148
        %1165 = vmatprep.subr.bf16.mxu0 0
        %1166 = vmatpush1.bf16.msra.mxu0 %v1147
        %1167 = vmatprep.subr.bf16.mxu0 0
        %1168 = vmatpush1.bf16.msra.mxu0 %v1146
        %1169 = vmatprep.subr.bf16.mxu0 0
        %1170 = vmatpush1.bf16.msra.mxu0 %v1145
        %1171 = vmatprep.subr.bf16.mxu0 0
        %1172 = vmatpush1.bf16.msra.mxu0 %v1144
        %1173 = vmatprep.subr.bf16.mxu0 0
        %1174 = vmatpush1.bf16.msra.mxu0 %v1143
        %1175 = vmatprep.subr.bf16.mxu0 0
        %1176 = vmatpush2.bf16.msra.mxu0 0
        %1177 = vmatprep.subr.bf16.mxu0 0
        %1178 = vmatpush2.bf16.msra.mxu0 0
        %1179 = vmatprep.subr.bf16.mxu0 0
        %1180 = vmatpush2.bf16.msra.mxu0 0
        %1181 = vmatprep.subr.bf16.mxu0 0
        %1182 = vmatpush2.bf16.msra.mxu0 0
        %1183 = vmatprep.subr.bf16.mxu0 0
        %1184 = vmatpush2.bf16.msra.mxu0 0
        %1185 = vmatprep.subr.bf16.mxu0 0
        %1186 = vmatpush2.bf16.msra.mxu0 0
        %1187 = vmatprep.subr.bf16.mxu0 0
        %1188 = vmatpush2.bf16.msra.mxu0 0
        %1189 = vmatprep.subr.bf16.mxu0 0
        %1190 = vmatpush2.bf16.msra.mxu0 0
        %1191 = vmatprep.mubr.bf16.mxu0 0
        %1192 = vmatmul.mubr.bf16.gmra.mxu0 %v505
        %v1193 = vpop.f32.mrf.mxu0
        %v1194 = vadd.f32 %v1109, %v1193
        %v1195 = vpop.f32.mrf.mxu0
        %v1196 = vpop.f32.mrf.mxu0
        %v1197 = vadd.f32 %v1109, %v1196
        %v1198 = vpop.f32.mrf.mxu0
        %1199 = vmatprep.mubr.bf16.mxu0 0
        %1200 = vmatmul.mubr.bf16.gmra.mxu0 %v511
        %v1201 = vpop.f32.mrf.mxu0
        %v1202 = vadd.f32 %v1109, %v1201
        %v1203 = vpop.f32.mrf.mxu0
        %v1204 = vpop.f32.mrf.mxu0
        %v1205 = vadd.f32 %v1109, %v1204
        %v1206 = vpop.f32.mrf.mxu0
        %1207 = vdwg.mxu0
        %v1208 = vadd.f32 %v1084, %v1194
        %v1209 = vadd.f32 %v1085, %v1197
        %v1210 = vadd.f32 %v1086, %v1202
        %v1211 = vadd.f32 %v1087, %v1205
        %v1212 = vmax.f32 %v1208, 0.0
        %v1213 = vmax.f32 %v1209, 0.0
        %v1214 = vmax.f32 %v1210, 0.0
        %v1215 = vmax.f32 %v1211, 0.0
        %v1216 = vpack.c.bf16 %v1213, %v1212
        %v1217 = vpack.c.bf16 %v1215, %v1214
        %v1219 = vunpack.c.l.b16 %v1216
        %v1220 = vunpack.c.h.b16 %v1216
        %v1221 = vpack.c.b16 %v1219, %v1219
        %v1222 = vpack.c.b16 %v1220, %v1220
        %1225 = vst [vmem:[#allocation2 + $0x4] sm:$0xf] %v1221
        %1226 = vst [vmem:[#allocation2 + $0x8] sm:$0xf] %v1222
        %v1228 = vunpack.c.l.b16 %v1217
        %v1229 = vunpack.c.h.b16 %v1217
        %v1230 = vpack.c.b16 %v1228, %v1228
        %v1231 = vpack.c.b16 %v1229, %v1229
        %1234 = vst [vmem:[#allocation2 + $0x10] sm:$0xf] %v1230
        %1235 = vst [vmem:[#allocation2 + $0x14] sm:$0xf] %v1231
        %v1236 = vld [vmem:[#allocation2 + $0x4] sm:$0xf]
        %v1237 = vld [vmem:[#allocation2 + $0x8] sm:$0xf]
        %v1238 = vld [vmem:[#allocation2 + $0x10] sm:$0xf]
        %v1239 = vld [vmem:[#allocation2 + $0x14] sm:$0xf]
        %v1242 = vunpack.c.l.b16 %v1236
        %v1243 = vunpack.c.l.b16 %v1237
        %v1244 = vpack.c.b16 %v1243, %v1242
        %v1248 = vunpack.c.l.b16 %v1238
        %v1249 = vunpack.c.l.b16 %v1239
        %v1250 = vpack.c.b16 %v1249, %v1248
        %v1252 = vld [vmem:[#allocation2] sm:$0x8]
        %v1253 = vld [vmem:[#allocation2 + $0x8] sm:$0x7]
        %v1256 = vunpack.c.l.b16 %v1252
        %v1257 = vunpack.c.l.b16 %v1253
        %v1258 = vpack.c.b16 %v1242, %v1256
        %v1259 = vpack.c.b16 %v1257, %v1257
        %v1260 = vrot.slane %v1244, 5
        %v1261 = vld [vmem:[#allocation2 + $0xc] sm:$0x8]
        %v1262 = vld [vmem:[#allocation2 + $0x14] sm:$0x7]
        %v1265 = vunpack.c.l.b16 %v1261
        %v1266 = vunpack.c.l.b16 %v1262
        %v1267 = vpack.c.b16 %v1248, %v1265
        %v1268 = vpack.c.b16 %v1266, %v1266
        %v1269 = vrot.slane %v1250, 5
        %vm1270 = vcmask 1044480
        %v1271 = vrot.slane %v1258, 3
        %v1272 = vrot.slane %v1259, 3
        %v1273 = vsel %vm1270, %v1271, %v1272
        %v1274 = vrot.slane %v1260, 3
        %v1275 = vsel %vm1270, %v1274, %v1274
        %v1278 = vrot.slane %v1267, 3
        %v1279 = vrot.slane %v1268, 3
        %v1280 = vsel %vm1270, %v1278, %v1279
        %v1281 = vrot.slane %v1269, 3
        %v1282 = vsel %vm1270, %v1281, %v1281
        %v1285 = vld [vmem:[#allocation7] sm:$0xf]
        %v1286 = vld [vmem:[#allocation7 + $0x4] sm:$0xf]
        %v1287 = vld [vmem:[#allocation7 + $0x8] sm:$0xf]
        %v1288 = vld [vmem:[#allocation7 + $0xc] sm:$0xf]
        %v1289 = vld [vmem:[#allocation7 + $0x10] sm:$0xf]
        %v1290 = vld [vmem:[#allocation7 + $0x14] sm:$0xf]
        %v1291 = vld [vmem:[#allocation7 + $0x18] sm:$0xf]
        %v1292 = vld [vmem:[#allocation7 + $0x1c] sm:$0xf]
        %v1293 = vld [vmem:[#allocation7 + $0x20] sm:$0xf]
        %v1294 = vld [vmem:[#allocation7 + $0x24] sm:$0xf]
        %v1295 = vld [vmem:[#allocation7 + $0x28] sm:$0xf]
        %v1296 = vld [vmem:[#allocation7 + $0x2c] sm:$0xf]
        %v1297 = vld [vmem:[#allocation7 + $0x30] sm:$0xf]
        %v1298 = vld [vmem:[#allocation7 + $0x34] sm:$0xf]
        %v1299 = vld [vmem:[#allocation7 + $0x38] sm:$0xf]
        %v1300 = vld [vmem:[#allocation7 + $0x3c] sm:$0xf]
        %v1301 = vld [vmem:[#allocation7 + $0x40] sm:$0xf]
        %v1302 = vld [vmem:[#allocation7 + $0x44] sm:$0xf]
        %v1303 = vld [vmem:[#allocation7 + $0x48] sm:$0xf]
        %v1304 = vld [vmem:[#allocation7 + $0x4c] sm:$0xf]
        %v1305 = vld [vmem:[#allocation7 + $0x50] sm:$0xf]
        %v1306 = vld [vmem:[#allocation7 + $0x54] sm:$0xf]
        %v1307 = vld [vmem:[#allocation7 + $0x58] sm:$0xf]
        %v1308 = vld [vmem:[#allocation7 + $0x5c] sm:$0xf]
        %v1309 = vld [vmem:[#allocation7 + $0x60] sm:$0xf]
        %v1310 = vld [vmem:[#allocation7 + $0x64] sm:$0xf]
        %v1311 = vld [vmem:[#allocation7 + $0x68] sm:$0xf]
        %v1312 = vld [vmem:[#allocation7 + $0x6c] sm:$0xf]
        %v1313 = vld [vmem:[#allocation7 + $0x70] sm:$0xf]
        %v1314 = vld [vmem:[#allocation7 + $0x74] sm:$0xf]
        %v1315 = vld [vmem:[#allocation7 + $0x78] sm:$0xf]
        %v1316 = vld [vmem:[#allocation7 + $0x7c] sm:$0xf]
        %v1317 = vld [vmem:[%s8] sm:$0x1]
        %v1319 = vlaneseq
        %v1320 = vshrl.u32 %v1319, 7
        %v1321 = vsub.s32 0, %v1320
        %v1322 = vrot.slane %v1317, %v1321
        %v1356 = vunpack.c.l.b16 %v1285
        %v1357 = vunpack.c.l.b16 %v1286
        %v1358 = vunpack.c.l.b16 %v1287
        %v1359 = vunpack.c.l.b16 %v1288
        %v1360 = vunpack.c.l.b16 %v1289
        %v1361 = vunpack.c.l.b16 %v1290
        %v1362 = vunpack.c.l.b16 %v1291
        %v1363 = vunpack.c.l.b16 %v1292
        %v1364 = vunpack.c.l.b16 %v1293
        %v1365 = vunpack.c.l.b16 %v1294
        %v1366 = vunpack.c.l.b16 %v1295
        %v1367 = vunpack.c.l.b16 %v1296
        %v1368 = vunpack.c.l.b16 %v1297
        %v1369 = vunpack.c.l.b16 %v1298
        %v1370 = vunpack.c.l.b16 %v1299
        %v1371 = vunpack.c.l.b16 %v1300
        %v1372 = vunpack.c.l.b16 %v1301
        %v1373 = vunpack.c.l.b16 %v1302
        %v1374 = vunpack.c.l.b16 %v1303
        %v1375 = vunpack.c.l.b16 %v1304
        %v1376 = vunpack.c.l.b16 %v1305
        %v1377 = vunpack.c.l.b16 %v1306
        %v1378 = vunpack.c.l.b16 %v1307
        %v1379 = vunpack.c.l.b16 %v1308
        %v1380 = vunpack.c.l.b16 %v1309
        %v1381 = vunpack.c.l.b16 %v1310
        %v1382 = vunpack.c.l.b16 %v1311
        %v1383 = vunpack.c.l.b16 %v1312
        %v1384 = vunpack.c.l.b16 %v1313
        %v1385 = vunpack.c.l.b16 %v1314
        %v1386 = vunpack.c.l.b16 %v1315
        %v1387 = vunpack.c.l.b16 %v1316
        %v1388 = vpack.c.b16 %v1357, %v1356
        %v1389 = vpack.c.b16 %v1359, %v1358
        %v1390 = vpack.c.b16 %v1361, %v1360
        %v1391 = vpack.c.b16 %v1363, %v1362
        %v1392 = vpack.c.b16 %v1365, %v1364
        %v1393 = vpack.c.b16 %v1367, %v1366
        %v1394 = vpack.c.b16 %v1369, %v1368
        %v1395 = vpack.c.b16 %v1371, %v1370
        %v1396 = vpack.c.b16 %v1373, %v1372
        %v1397 = vpack.c.b16 %v1375, %v1374
        %v1398 = vpack.c.b16 %v1377, %v1376
        %v1399 = vpack.c.b16 %v1379, %v1378
        %v1400 = vpack.c.b16 %v1381, %v1380
        %v1401 = vpack.c.b16 %v1383, %v1382
        %v1402 = vpack.c.b16 %v1385, %v1384
        %v1403 = vpack.c.b16 %v1387, %v1386
        %1420 = vmatprep.subr.bf16.mxu0 0
        %1421 = vmatpush1.bf16.msra.mxu0 %v1395
        %1422 = vmatprep.subr.bf16.mxu0 0
        %1423 = vmatpush1.bf16.msra.mxu0 %v1394
        %1424 = vmatprep.subr.bf16.mxu0 0
        %1425 = vmatpush1.bf16.msra.mxu0 %v1393
        %1426 = vmatprep.subr.bf16.mxu0 0
        %1427 = vmatpush1.bf16.msra.mxu0 %v1392
        %1428 = vmatprep.subr.bf16.mxu0 0
        %1429 = vmatpush1.bf16.msra.mxu0 %v1391
        %1430 = vmatprep.subr.bf16.mxu0 0
        %1431 = vmatpush1.bf16.msra.mxu0 %v1390
        %1432 = vmatprep.subr.bf16.mxu0 0
        %1433 = vmatpush1.bf16.msra.mxu0 %v1389
        %1434 = vmatprep.subr.bf16.mxu0 0
        %1435 = vmatpush1.bf16.msra.mxu0 %v1388
        %1436 = vmatprep.subr.bf16.mxu0 0
        %1437 = vmatpush2.bf16.msra.mxu0 %v1403
        %1438 = vmatprep.subr.bf16.mxu0 0
        %1439 = vmatpush2.bf16.msra.mxu0 %v1402
        %1440 = vmatprep.subr.bf16.mxu0 0
        %1441 = vmatpush2.bf16.msra.mxu0 %v1401
        %1442 = vmatprep.subr.bf16.mxu0 0
        %1443 = vmatpush2.bf16.msra.mxu0 %v1400
        %1444 = vmatprep.subr.bf16.mxu0 0
        %1445 = vmatpush2.bf16.msra.mxu0 %v1399
        %1446 = vmatprep.subr.bf16.mxu0 0
        %1447 = vmatpush2.bf16.msra.mxu0 %v1398
        %1448 = vmatprep.subr.bf16.mxu0 0
        %1449 = vmatpush2.bf16.msra.mxu0 %v1397
        %1450 = vmatprep.subr.bf16.mxu0 0
        %1451 = vmatpush2.bf16.msra.mxu0 %v1396
        %1452 = vmatprep.mubr.bf16.mxu0 %v1275
        %1453 = vmatmul.mubr.bf16.gmra.mxu0 %v1273
        %v1454 = vpop.f32.mrf.mxu0
        %v1455 = vadd.f32 %v1322, %v1454
        %v1456 = vpop.f32.mrf.mxu0
        %v1457 = vpop.f32.mrf.mxu0
        %v1458 = vadd.f32 %v1322, %v1457
        %v1459 = vpop.f32.mrf.mxu0
        %1460 = vmatprep.mubr.bf16.mxu0 %v1282
        %1461 = vmatmul.mubr.bf16.gmra.mxu0 %v1280
        %v1462 = vpop.f32.mrf.mxu0
        %v1463 = vadd.f32 %v1322, %v1462
        %v1464 = vpop.f32.mrf.mxu0
        %v1465 = vpop.f32.mrf.mxu0
        %v1466 = vadd.f32 %v1322, %v1465
        %v1467 = vpop.f32.mrf.mxu0
        %1468 = vdwg.mxu0
        %v1469 = vmax.f32 %v1455, 0.0
        %v1470 = vmax.f32 %v1458, 0.0
        %v1471 = vmax.f32 %v1463, 0.0
        %v1472 = vmax.f32 %v1466, 0.0
        %v1473 = vpack.c.bf16 %v1470, %v1469
        %v1474 = vpack.c.bf16 %v1472, %v1471
        %v1476 = vunpack.c.l.b16 %v1473
        %v1477 = vunpack.c.h.b16 %v1473
        %v1478 = vpack.c.b16 %v1476, %v1476
        %v1479 = vpack.c.b16 %v1477, %v1477
        %1482 = vst [vmem:[#allocation2 + $0x4] sm:$0xf] %v1478
        %1483 = vst [vmem:[#allocation2 + $0x8] sm:$0xf] %v1479
        %v1485 = vunpack.c.l.b16 %v1474
        %v1486 = vunpack.c.h.b16 %v1474
        %v1487 = vpack.c.b16 %v1485, %v1485
        %v1488 = vpack.c.b16 %v1486, %v1486
        %1491 = vst [vmem:[#allocation2 + $0x10] sm:$0xf] %v1487
        %1492 = vst [vmem:[#allocation2 + $0x14] sm:$0xf] %v1488
        %v1493 = vld [vmem:[#allocation2] sm:$0x8]
        %v1494 = vld [vmem:[#allocation2 + $0x4] sm:$0xf]
        %v1495 = vld [vmem:[#allocation2 + $0x8] sm:$0x7]
        %v1496 = vld [vmem:[#allocation2 + $0x8] sm:$0xf]
        %v1500 = vunpack.c.l.b16 %v1493
        %v1501 = vunpack.c.l.b16 %v1494
        %v1502 = vunpack.c.l.b16 %v1495
        %v1503 = vpack.c.b16 %v1501, %v1500
        %v1504 = vpack.c.b16 %v1502, %v1502
        %v1506 = vunpack.c.l.b16 %v1496
        %v1507 = vpack.c.b16 %v1506, %v1501
        %v1508 = vrot.slane %v1507, 5
        %v1509 = vld [vmem:[#allocation2 + $0xc] sm:$0x8]
        %v1510 = vld [vmem:[#allocation2 + $0x10] sm:$0xf]
        %v1511 = vld [vmem:[#allocation2 + $0x14] sm:$0x7]
        %v1512 = vld [vmem:[#allocation2 + $0x14] sm:$0xf]
        %v1516 = vunpack.c.l.b16 %v1509
        %v1517 = vunpack.c.l.b16 %v1510
        %v1518 = vunpack.c.l.b16 %v1511
        %v1519 = vpack.c.b16 %v1517, %v1516
        %v1520 = vpack.c.b16 %v1518, %v1518
        %v1522 = vunpack.c.l.b16 %v1512
        %v1523 = vpack.c.b16 %v1522, %v1517
        %v1524 = vrot.slane %v1523, 5
        %v1525 = vrot.slane %v1503, 3
        %v1526 = vrot.slane %v1504, 3
        %v1527 = vsel %vm1270, %v1525, %v1526
        %v1528 = vrot.slane %v1508, 3
        %v1529 = vsel %vm1270, %v1528, %v1528
        %v1532 = vrot.slane %v1519, 3
        %v1533 = vrot.slane %v1520, 3
        %v1534 = vsel %vm1270, %v1532, %v1533
        %v1535 = vrot.slane %v1524, 3
        %v1536 = vsel %vm1270, %v1535, %v1535
        %v1539 = vld [vmem:[#allocation8] sm:$0xf]
        %v1540 = vld [vmem:[#allocation8 + $0x4] sm:$0xf]
        %v1541 = vld [vmem:[#allocation8 + $0x8] sm:$0xf]
        %v1542 = vld [vmem:[#allocation8 + $0xc] sm:$0xf]
        %v1543 = vld [vmem:[#allocation8 + $0x10] sm:$0xf]
        %v1544 = vld [vmem:[#allocation8 + $0x14] sm:$0xf]
        %v1545 = vld [vmem:[#allocation8 + $0x18] sm:$0xf]
        %v1546 = vld [vmem:[#allocation8 + $0x1c] sm:$0xf]
        %v1547 = vld [vmem:[#allocation8 + $0x20] sm:$0xf]
        %v1548 = vld [vmem:[#allocation8 + $0x24] sm:$0xf]
        %v1549 = vld [vmem:[#allocation8 + $0x28] sm:$0xf]
        %v1550 = vld [vmem:[#allocation8 + $0x2c] sm:$0xf]
        %v1551 = vld [vmem:[#allocation8 + $0x30] sm:$0xf]
        %v1552 = vld [vmem:[#allocation8 + $0x34] sm:$0xf]
        %v1553 = vld [vmem:[#allocation8 + $0x38] sm:$0xf]
        %v1554 = vld [vmem:[#allocation8 + $0x3c] sm:$0xf]
        %v1555 = vld [vmem:[#allocation8 + $0x40] sm:$0xf]
        %v1556 = vld [vmem:[#allocation8 + $0x44] sm:$0xf]
        %v1557 = vld [vmem:[#allocation8 + $0x48] sm:$0xf]
        %v1558 = vld [vmem:[#allocation8 + $0x4c] sm:$0xf]
        %v1559 = vld [vmem:[#allocation8 + $0x50] sm:$0xf]
        %v1560 = vld [vmem:[#allocation8 + $0x54] sm:$0xf]
        %v1561 = vld [vmem:[#allocation8 + $0x58] sm:$0xf]
        %v1562 = vld [vmem:[#allocation8 + $0x5c] sm:$0xf]
        %v1563 = vld [vmem:[#allocation8 + $0x60] sm:$0xf]
        %v1564 = vld [vmem:[#allocation8 + $0x64] sm:$0xf]
        %v1565 = vld [vmem:[#allocation8 + $0x68] sm:$0xf]
        %v1566 = vld [vmem:[#allocation8 + $0x6c] sm:$0xf]
        %v1567 = vld [vmem:[#allocation8 + $0x70] sm:$0xf]
        %v1568 = vld [vmem:[#allocation8 + $0x74] sm:$0xf]
        %v1569 = vld [vmem:[#allocation8 + $0x78] sm:$0xf]
        %v1570 = vld [vmem:[#allocation8 + $0x7c] sm:$0xf]
        %v1571 = vld [vmem:[%s10] sm:$0x1]
        %v1573 = vlaneseq
        %v1574 = vshrl.u32 %v1573, 7
        %v1575 = vsub.s32 0, %v1574
        %v1576 = vrot.slane %v1571, %v1575
        %v1610 = vunpack.c.l.b16 %v1539
        %v1611 = vunpack.c.l.b16 %v1540
        %v1612 = vunpack.c.l.b16 %v1541
        %v1613 = vunpack.c.l.b16 %v1542
        %v1614 = vunpack.c.l.b16 %v1543
        %v1615 = vunpack.c.l.b16 %v1544
        %v1616 = vunpack.c.l.b16 %v1545
        %v1617 = vunpack.c.l.b16 %v1546
        %v1618 = vunpack.c.l.b16 %v1547
        %v1619 = vunpack.c.l.b16 %v1548
        %v1620 = vunpack.c.l.b16 %v1549
        %v1621 = vunpack.c.l.b16 %v1550
        %v1622 = vunpack.c.l.b16 %v1551
        %v1623 = vunpack.c.l.b16 %v1552
        %v1624 = vunpack.c.l.b16 %v1553
        %v1625 = vunpack.c.l.b16 %v1554
        %v1626 = vunpack.c.l.b16 %v1555
        %v1627 = vunpack.c.l.b16 %v1556
        %v1628 = vunpack.c.l.b16 %v1557
        %v1629 = vunpack.c.l.b16 %v1558
        %v1630 = vunpack.c.l.b16 %v1559
        %v1631 = vunpack.c.l.b16 %v1560
        %v1632 = vunpack.c.l.b16 %v1561
        %v1633 = vunpack.c.l.b16 %v1562
        %v1634 = vunpack.c.l.b16 %v1563
        %v1635 = vunpack.c.l.b16 %v1564
        %v1636 = vunpack.c.l.b16 %v1565
        %v1637 = vunpack.c.l.b16 %v1566
        %v1638 = vunpack.c.l.b16 %v1567
        %v1639 = vunpack.c.l.b16 %v1568
        %v1640 = vunpack.c.l.b16 %v1569
        %v1641 = vunpack.c.l.b16 %v1570
        %v1642 = vpack.c.b16 %v1611, %v1610
        %v1643 = vpack.c.b16 %v1613, %v1612
        %v1644 = vpack.c.b16 %v1615, %v1614
        %v1645 = vpack.c.b16 %v1617, %v1616
        %v1646 = vpack.c.b16 %v1619, %v1618
        %v1647 = vpack.c.b16 %v1621, %v1620
        %v1648 = vpack.c.b16 %v1623, %v1622
        %v1649 = vpack.c.b16 %v1625, %v1624
        %v1650 = vpack.c.b16 %v1627, %v1626
        %v1651 = vpack.c.b16 %v1629, %v1628
        %v1652 = vpack.c.b16 %v1631, %v1630
        %v1653 = vpack.c.b16 %v1633, %v1632
        %v1654 = vpack.c.b16 %v1635, %v1634
        %v1655 = vpack.c.b16 %v1637, %v1636
        %v1656 = vpack.c.b16 %v1639, %v1638
        %v1657 = vpack.c.b16 %v1641, %v1640
        %1674 = vmatprep.subr.bf16.mxu0 0
        %1675 = vmatpush1.bf16.msra.mxu0 %v1649
        %1676 = vmatprep.subr.bf16.mxu0 0
        %1677 = vmatpush1.bf16.msra.mxu0 %v1648
        %1678 = vmatprep.subr.bf16.mxu0 0
        %1679 = vmatpush1.bf16.msra.mxu0 %v1647
        %1680 = vmatprep.subr.bf16.mxu0 0
        %1681 = vmatpush1.bf16.msra.mxu0 %v1646
        %1682 = vmatprep.subr.bf16.mxu0 0
        %1683 = vmatpush1.bf16.msra.mxu0 %v1645
        %1684 = vmatprep.subr.bf16.mxu0 0
        %1685 = vmatpush1.bf16.msra.mxu0 %v1644
        %1686 = vmatprep.subr.bf16.mxu0 0
        %1687 = vmatpush1.bf16.msra.mxu0 %v1643
        %1688 = vmatprep.subr.bf16.mxu0 0
        %1689 = vmatpush1.bf16.msra.mxu0 %v1642
        %1690 = vmatprep.subr.bf16.mxu0 0
        %1691 = vmatpush2.bf16.msra.mxu0 %v1657
        %1692 = vmatprep.subr.bf16.mxu0 0
        %1693 = vmatpush2.bf16.msra.mxu0 %v1656
        %1694 = vmatprep.subr.bf16.mxu0 0
        %1695 = vmatpush2.bf16.msra.mxu0 %v1655
        %1696 = vmatprep.subr.bf16.mxu0 0
        %1697 = vmatpush2.bf16.msra.mxu0 %v1654
        %1698 = vmatprep.subr.bf16.mxu0 0
        %1699 = vmatpush2.bf16.msra.mxu0 %v1653
        %1700 = vmatprep.subr.bf16.mxu0 0
        %1701 = vmatpush2.bf16.msra.mxu0 %v1652
        %1702 = vmatprep.subr.bf16.mxu0 0
        %1703 = vmatpush2.bf16.msra.mxu0 %v1651
        %1704 = vmatprep.subr.bf16.mxu0 0
        %1705 = vmatpush2.bf16.msra.mxu0 %v1650
        %1706 = vmatprep.mubr.bf16.mxu0 %v1529
        %1707 = vmatmul.mubr.bf16.gmra.mxu0 %v1527
        %v1708 = vpop.f32.mrf.mxu0
        %v1709 = vadd.f32 %v1576, %v1708
        %v1710 = vpop.f32.mrf.mxu0
        %v1711 = vpop.f32.mrf.mxu0
        %v1712 = vadd.f32 %v1576, %v1711
        %v1713 = vpop.f32.mrf.mxu0
        %1714 = vmatprep.mubr.bf16.mxu0 %v1536
        %1715 = vmatmul.mubr.bf16.gmra.mxu0 %v1534
        %v1716 = vpop.f32.mrf.mxu0
        %v1717 = vadd.f32 %v1576, %v1716
        %v1718 = vpop.f32.mrf.mxu0
        %v1719 = vpop.f32.mrf.mxu0
        %v1720 = vadd.f32 %v1576, %v1719
        %v1721 = vpop.f32.mrf.mxu0
        %1722 = vdwg.mxu0
        %v1723 = vmax.f32 %v1709, 0.0
        %v1724 = vmax.f32 %v1712, 0.0
        %v1725 = vmax.f32 %v1717, 0.0
        %v1726 = vmax.f32 %v1720, 0.0
        %v1727 = vunpack.c.l.bf16 %v1244
        %v1728 = vunpack.c.h.bf16 %v1244
        %v1729 = vunpack.c.l.bf16 %v1250
        %v1730 = vunpack.c.h.bf16 %v1250
        %v1731 = vadd.f32 %v1723, %v1727
        %v1732 = vadd.f32 %v1724, %v1728
        %v1733 = vadd.f32 %v1725, %v1729
        %v1734 = vadd.f32 %v1726, %v1730
        %v1735 = vmax.f32 %v1731, 0.0
        %v1736 = vmax.f32 %v1732, 0.0
        %v1737 = vmax.f32 %v1733, 0.0
        %v1738 = vmax.f32 %v1734, 0.0
        %1739 = vst [vmem:[%s452] sm:$0xff] %v1735
        %1740 = vst [vmem:[%s452 + $0x8] sm:$0xff] %v1736
        %s1741 = scalar_lea.vmem %s452, 16
        %1742 = vst [vmem:[%s1741] sm:$0xff] %v1737
        %1743 = vst [vmem:[%s1741 + $0x8] sm:$0xff] %v1738
        %s1744 = smul.u32 2, %s25
        %p1745 = scmp.lt.s32.totalorder %s1744, 3
        %s1746 = scalar_select %p1745, %s1744, 3
        %s1747 = smul.addr %s1746, 2
        %s1748 = smul.addr %s1747, 8
        %s1749 = scalar_lea.vmem %s11, %s1748
        // Predicated region
        $region81: #{taconvnet_forward.1} parent=63 // pred_check
          %p1750 = pneg %p279
        $region82: #{taconvnet_forward.1} parent=63 // pred_check_branch
          %1752 = sbr.rel (%p1750) target = $region84
        $region83: #{taconvnet_forward.1} parent=63 // pred_region
          %s1753 = smul.u32 2, %s25
        $region84: #{taconvnet_forward.1} parent=63 // pred_fallthru
          _
      $region64: #{taconvnet_forward.1} parent=5 // pred_fallthru
        _
      %p1754 = scmp.le.s32.totalorder 2, %s20
      // Predicated region
      $region85: #{taconvnet_forward.1} parent=5 // pred_check
        %p1755 = pneg %p1754
      $region86: #{taconvnet_forward.1} parent=5 // pred_check_branch
        %1757 = sbr.rel (%p1755) target = $region88
      $region87: #{taconvnet_forward.1} parent=5 // pred_region
        %s1758 = ssub.s32 %s20, 2
        // Predicated region
        $region89: #{taconvnet_forward.1} parent=87 // pred_check
          %p1759 = pneg %p285
        $region90: #{taconvnet_forward.1} parent=87 // pred_check_branch
          %1761 = sbr.rel (%p1759) target = $region92
        $region91: #{taconvnet_forward.1} parent=87 // pred_region
          %s1762 = smul.u32 2, %s26
          %p1763 = scmp.lt.s32.totalorder %s1762, 3
          %s1764 = scalar_select %p1763, %s1762, 3
          %s1765 = smul.addr %s1764, 2
          %s1766 = smul.addr %s1765, 8
          %s1767 = scalar_lea.vmem %s11, %s1766
        $region92: #{taconvnet_forward.1} parent=87 // pred_fallthru
          _
      $region88: #{taconvnet_forward.1} parent=5 // pred_fallthru
        _
    $region6: #{taconvnet_forward.1} parent=1 // loop_footer
      %s24 = sadd.s32 1, %s20
    $region7: #{taconvnet_forward.1} parent=1 // loop_footer_branch
      %19 = sbr.rel target = $region3
    $region8: #{taconvnet_forward.1} parent=1 // loop_exit
      _
    %1768 = vsyncpa [#allocation4], 1
    %s1769 = scalar_lea.sflag [#allocation4], 1
    %1770 = vsyncpa %s1769, 1
    %1771 = vsyncpa [#allocation6], 1
    %1772 = vsyncpa [#allocation9], 1

</llo_original>
